<compile_context>
chip_gen: v7x
topology: tpu7x:2x2x1
jax: 0.10.0
libtpu: 0.0.40
codegen_flags: <defaults>
</compile_context>

<pallas_src>
import math
import jax
import jax.numpy as jnp
from jax.experimental import pallas as pl
from jax.experimental.pallas import tpu as pltpu

# ---- scaled-down ATPConfig hyperparameters ---------------------------------
D_MODEL = 32      # config.d_model
N_HEADS = 4       # config.n_heads
D_FF = 32         # config.d_model_ff
N_LAYERS = 2      # config.n_layers (kept small for the demo)
EPS = 1e-5        # nn.LayerNorm default eps
ID_TEXT_QUESTION = 0     # ModalityEmbeddingsID.TEXT_QUESTION
ID_VISUAL_EMBEDDING = 3  # ModalityEmbeddingsID.VISUAL_EMBEDDING

# MXU operand dtype. At production widths (d_model=256) set to jnp.bfloat16 on v6e/v7x
# (bf16-native MXU, halves weight DMA bytes); LayerNorm/softmax math stays f32 either way
# (required on v5e: no bf16 VPU/EUP). Kept f32 here so the small-shape validation is exact.
MXU_DTYPE = jnp.float32

VEC_ROWS = 8      # packed small-vector slab rows per layer
VEC_LANES = 128   # lane-padded slab width (exact, unmasked DMA)


# ---------------------------------------------------------------------------
# Fused kernel: grid axis = batch ("parallel"); all layers unrolled in-kernel.
# ---------------------------------------------------------------------------
def _encoder_kernel(x_ref, mod_ref, wqkv_ref, wo_ref, w1_ref, w2_ref, vec_ref, o_ref):
    L, D = x_ref.shape[1], x_ref.shape[2]
    H = N_HEADS
    hd = D // H
    F = w1_ref.shape[2]

    def mm(a, b):
        return jnp.dot(a.astype(MXU_DTYPE), b.astype(MXU_DTYPE),
                       preferred_element_type=jnp.float32)

    def layernorm(z, gamma, beta):
        mu = jnp.mean(z, axis=-1, keepdims=True)
        var = jnp.mean((z - mu) ** 2, axis=-1, keepdims=True)
        return (z - mu) * jax.lax.rsqrt(var + EPS) * gamma + beta

    # ---- embed: x * sqrt(d_model) + modality embedding (broadcast of (L, D) table) ----
    x = x_ref[0] * jnp.float32(math.sqrt(D_MODEL)) + mod_ref[...]        # (L, D)
    # TODO(synk): enc_dropout treated as identity (eval / inference mode).

    # ---- all encoder layers, statically unrolled (weights VMEM-resident) ----
    for layer in range(N_LAYERS):
        wqkv = wqkv_ref[layer]                      # (D, 3D); Q cols pre-scaled by 1/sqrt(hd)
        wo = wo_ref[layer]                          # (D, D)
        w1 = w1_ref[layer]                          # (D, F)
        w2 = w2_ref[layer]                          # (F, D)
        vec = vec_ref[layer]                        # (8, 128) lane-padded small-vector slab
        bqkv = vec[0:1, :3 * D]
        bo, g1, bn1 = vec[1:2, :D], vec[2:3, :D], vec[3:4, :D]
        bf1 = vec[4:5, :F]
        bf2, g2, bn2 = vec[5:6, :D], vec[6:7, :D], vec[7:8, :D]

        # ---- multi-head self-attention: one fused lane-dense QKV GEMM ----
        qkv = mm(x, wqkv) + bqkv                    # (L, 3D)
        # head-batched score/context contractions (leading batch dim = heads)
        q = jnp.stack([qkv[:, h * hd:(h + 1) * hd] for h in range(H)], axis=0)           # (H,L,hd)
        k = jnp.stack([qkv[:, D + h * hd:D + (h + 1) * hd] for h in range(H)], axis=0)
        v = jnp.stack([qkv[:, 2 * D + h * hd:2 * D + (h + 1) * hd] for h in range(H)], axis=0)

        s = jnp.einsum('hie,hje->hij', q, k, preferred_element_type=jnp.float32)          # (H,L,L)
        s = s - jnp.max(s, axis=-1, keepdims=True)
        p = jnp.exp(s)
        p = p / jnp.sum(p, axis=-1, keepdims=True)  # exact softmax (validated at 1e-4)

        ctx = jnp.einsum('hij,hje->hie', p.astype(MXU_DTYPE), v.astype(MXU_DTYPE),
                         preferred_element_type=jnp.float32)                              # (H,L,hd)
        ctx = jnp.concatenate([ctx[h] for h in range(H)], axis=-1)                        # (L, D)
        attn = mm(ctx, wo) + bo                     # fused output projection GEMM

        # ---- residual + LayerNorm 1 (post-norm) ----
        y = layernorm(x + attn, g1, bn1)

        # ---- feed-forward ----
        ff = mm(jnp.maximum(mm(y, w1) + bf1, 0.0), w2) + bf2

        # ---- residual + LayerNorm 2 ----
        x = layernorm(y + ff, g2, bn2)

    o_ref[0] = x


# ---------------------------------------------------------------------------
# pallas_call wrapper
# ---------------------------------------------------------------------------
def _fused_encoder(x_nld, mod, packed):
    wqkv_a, wo_a, w1_a, w2_a, vec_a = packed
    N, L, D = x_nld.shape
    n_layers = wqkv_a.shape[0]
    F = w1_a.shape[-1]

    batch_block = pl.BlockSpec((1, L, D), lambda b: (b, 0, 0))

    def resident(shape):
        # constant block index -> DMA'd once, stays VMEM-resident across the batch grid
        return pl.BlockSpec(shape, lambda b, _n=len(shape): (0,) * _n)

    return pl.pallas_call(
        _encoder_kernel,
        out_shape=jax.ShapeDtypeStruct((N, L, D), jnp.float32),
        grid=(N,),
        in_specs=[
            batch_block,                               # x (one batch per block)
            resident((L, D)),                          # modality embedding table
            resident((n_layers, D, 3 * D)),            # fused QKV weights
            resident((n_layers, D, D)),                # out-proj weights
            resident((n_layers, D, F)),                # FFN w1
            resident((n_layers, F, D)),                # FFN w2
            resident((n_layers, VEC_ROWS, VEC_LANES)), # packed small vectors
        ],
        out_specs=pl.BlockSpec((1, L, D), lambda b: (b, 0, 0)),
        compiler_params=pltpu.CompilerParams(dimension_semantics=("parallel",)),
    )(x_nld, mod, wqkv_a, wo_a, w1_a, w2_a, vec_a)


# ---------------------------------------------------------------------------
# Parameter init (PyTorch-layout) and packing into kernel layout
# ---------------------------------------------------------------------------
def init_params(key):
    keys = jax.random.split(key, 1 + N_LAYERS)
    # ModalityEmbeddings: nn.Embedding(len(ModalityEmbeddingsID)=5, d_model)
    emb_table = jax.random.normal(keys[0], (5, D_MODEL), jnp.float32) * 0.02
    layers = []
    for l in range(N_LAYERS):
        ks = jax.random.split(keys[1 + l], 6)
        wqkv = jax.random.normal(ks[0], (D_MODEL, 3 * D_MODEL), jnp.float32) * 0.05  # in_proj_weight.T
        bqkv = jax.random.normal(ks[1], (3 * D_MODEL,), jnp.float32) * 0.02
        wo = jax.random.normal(ks[2], (D_MODEL, D_MODEL), jnp.float32) * 0.05        # out_proj.weight.T
        bo = jax.random.normal(ks[3], (D_MODEL,), jnp.float32) * 0.02
        g1 = jnp.ones((D_MODEL,), jnp.float32)
        bn1 = jnp.zeros((D_MODEL,), jnp.float32)
        w1 = jax.random.normal(ks[4], (D_MODEL, D_FF), jnp.float32) * 0.05
        bf1 = jnp.zeros((D_FF,), jnp.float32)
        w2 = jax.random.normal(ks[5], (D_FF, D_MODEL), jnp.float32) * 0.05
        bf2 = jnp.zeros((D_MODEL,), jnp.float32)
        g2 = jnp.ones((D_MODEL,), jnp.float32)
        bn2 = jnp.zeros((D_MODEL,), jnp.float32)
        layers.append((wqkv, bqkv, wo, bo, g1, bn1, w1, bf1, w2, bf2, g2, bn2))
    return emb_table, layers


def pack_params(layers):
    """Fold 1/sqrt(hd) into Q, stack weights across layers, pack small vectors into
    one lane-padded (n_layers, 8, 128) slab."""
    hd = D_MODEL // N_HEADS
    scale = 1.0 / math.sqrt(hd)
    wqkv_l, wo_l, w1_l, w2_l, vec_l = [], [], [], [], []
    for (wqkv, bqkv, wo, bo, g1, bn1, w1, bf1, w2, bf2, g2, bn2) in layers:
        wqkv_scaled = wqkv.at[:, :D_MODEL].multiply(scale)   # fold attention scale into Q proj
        bqkv_scaled = bqkv.at[:D_MODEL].multiply(scale)

        def row(v):
            return jnp.pad(v, (0, VEC_LANES - v.shape[0]))

        vec = jnp.stack([row(bqkv_scaled), row(bo), row(g1), row(bn1),
                         row(bf1), row(bf2), row(g2), row(bn2)], axis=0)  # (8, 128)
        wqkv_l.append(wqkv_scaled.astype(MXU_DTYPE))
        wo_l.append(wo.astype(MXU_DTYPE))
        w1_l.append(w1.astype(MXU_DTYPE))
        w2_l.append(w2.astype(MXU_DTYPE))
        vec_l.append(vec.astype(jnp.float32))
    stk = lambda xs: jnp.stack(xs, axis=0)
    return (stk(wqkv_l), stk(wo_l), stk(w1_l), stk(w2_l), stk(vec_l))


# ---------------------------------------------------------------------------
# ATPEncoder.forward
# ---------------------------------------------------------------------------
def atp_encoder_forward(x_lnd, vis_L, emb_table, packed_layers):
    """x_lnd: (L, N, D) as in the PyTorch module. Returns (L, N, D)."""
    L, N, D = x_lnd.shape
    assert D == D_MODEL, "inputs dimension mismatch"
    num_txt = L - vis_L
    class_ids = jnp.where(jnp.arange(L) < num_txt, ID_TEXT_QUESTION, ID_VISUAL_EMBEDDING)
    mod = emb_table[class_ids]                          # (L, D) — broadcast across batch in-kernel

    x_nld = jnp.transpose(x_lnd, (1, 0, 2))             # (N, L, D) batch-major
    out = _fused_encoder(x_nld, mod, packed_layers)      # (N, L, D)
    return jnp.transpose(out, (1, 0, 2))                 # -> (L, N, D)


# ---------------------------------------------------------------------------
# Pure-JAX reference (mirrors PyTorch TransformerEncoder, eval mode)
# ---------------------------------------------------------------------------
def _reference_forward(x_lnd, vis_L, emb_table, layers):
    L, N, D = x_lnd.shape
    H = N_HEADS
    hd = D // H
    num_txt = L - vis_L
    class_ids = jnp.where(jnp.arange(L) < num_txt, ID_TEXT_QUESTION, ID_VISUAL_EMBEDDING)
    mod = emb_table[class_ids]
    x = x_lnd * math.sqrt(D) + mod[:, None, :]
    x = jnp.transpose(x, (1, 0, 2))                            # (N, L, D)
    for (wqkv, bqkv, wo, bo, g1, bn1, w1, bf1, w2, bf2, g2, bn2) in layers:
        qkv = x @ wqkv + bqkv
        q, k, v = qkv[..., :D], qkv[..., D:2 * D], qkv[..., 2 * D:]
        q = q.reshape(N, L, H, hd).transpose(0, 2, 1, 3)
        k = k.reshape(N, L, H, hd).transpose(0, 2, 1, 3)
        v = v.reshape(N, L, H, hd).transpose(0, 2, 1, 3)
        s = (q @ jnp.swapaxes(k, -1, -2)) / math.sqrt(hd)
        p = jax.nn.softmax(s, axis=-1)
        ctx = (p @ v).transpose(0, 2, 1, 3).reshape(N, L, D)
        attn = ctx @ wo + bo
        y = x + attn
        y = (y - y.mean(-1, keepdims=True)) / jnp.sqrt(y.var(-1, keepdims=True) + EPS) * g1 + bn1
        ff = jnp.maximum(y @ w1 + bf1, 0.0) @ w2 + bf2
        z = y + ff
        x = (z - z.mean(-1, keepdims=True)) / jnp.sqrt(z.var(-1, keepdims=True) + EPS) * g2 + bn2
    return jnp.transpose(x, (1, 0, 2))


# ---------------------------------------------------------------------------
if __name__ == "__main__":
    L, N = 8, 2            # seq length, batch
    vis_L = 6              # number of visual frames (rest are text query tokens)

    key = jax.random.PRNGKey(0)
    k_x, k_p = jax.random.split(key)
    x = jax.random.normal(k_x, (L, N, D_MODEL), jnp.float32)

    emb_table, layers = init_params(k_p)
    packed = pack_params(layers)

    out = atp_encoder_forward(x, vis_L, emb_table, packed)
    out = jax.block_until_ready(out)
    assert out.shape == (L, N, D_MODEL)
    assert bool(jnp.all(jnp.isfinite(out)))

    ref = _reference_forward(x, vis_L, emb_table, layers)
    err = float(jnp.max(jnp.abs(out - ref)))
    assert err < 1e-4, f"mismatch vs reference: {err}"
    print("KERNEL_OK")
</pallas_src>

<mosaic_0001>
module attributes {stable_mosaic.version = 11 : i64} {
  func.func @_encoder_kernel(%arg0: i32, %arg1: memref<1x8x32xf32, #tpu.memory_space<vmem>>, %arg2: memref<8x32xf32, #tpu.memory_space<vmem>>, %arg3: memref<2x32x96xf32, #tpu.memory_space<vmem>>, %arg4: memref<2x32x32xf32, #tpu.memory_space<vmem>>, %arg5: memref<2x32x32xf32, #tpu.memory_space<vmem>>, %arg6: memref<2x32x32xf32, #tpu.memory_space<vmem>>, %arg7: memref<2x8x128xf32, #tpu.memory_space<vmem>>, %arg8: memref<1x8x32xf32, #tpu.memory_space<vmem>>) attributes {dimension_semantics = [#tpu.dimension_semantics<parallel>], iteration_bounds = array<i64: 2>, scalar_prefetch = 0 : i64, scratch_operands = 0 : i64, tpu.core_type = #tpu.core_type<tc>, window_params = [{transform_indices = @transform_0, window_bounds = array<i64: 1, 8, 32>}, {pipeline_mode = #tpu.pipeline_mode<synchronous>, transform_indices = @transform_1, window_bounds = array<i64: 8, 32>}, {pipeline_mode = #tpu.pipeline_mode<synchronous>, transform_indices = @transform_2, window_bounds = array<i64: 2, 32, 96>}, {pipeline_mode = #tpu.pipeline_mode<synchronous>, transform_indices = @transform_3, window_bounds = array<i64: 2, 32, 32>}, {pipeline_mode = #tpu.pipeline_mode<synchronous>, transform_indices = @transform_4, window_bounds = array<i64: 2, 32, 32>}, {pipeline_mode = #tpu.pipeline_mode<synchronous>, transform_indices = @transform_5, window_bounds = array<i64: 2, 32, 32>}, {pipeline_mode = #tpu.pipeline_mode<synchronous>, transform_indices = @transform_6, window_bounds = array<i64: 2, 8, 128>}, {transform_indices = @transform_7, window_bounds = array<i64: 1, 8, 32>}]} {
    %c0 = arith.constant 0 : index
    %c0_0 = arith.constant 0 : index
    %c0_1 = arith.constant 0 : index
    %0 = vector.load %arg1[%c0, %c0_0, %c0_1] : memref<1x8x32xf32, #tpu.memory_space<vmem>>, vector<1x8x32xf32>
    %1 = vector.shape_cast %0 : vector<1x8x32xf32> to vector<8x32xf32>
    %cst = arith.constant 5.65685415 : f32
    %2 = vector.broadcast %cst : f32 to vector<8x32xf32>
    %3 = arith.mulf %1, %2 : vector<8x32xf32>
    %c0_2 = arith.constant 0 : index
    %c0_3 = arith.constant 0 : index
    %4 = vector.load %arg2[%c0_2, %c0_3] : memref<8x32xf32, #tpu.memory_space<vmem>>, vector<8x32xf32>
    %5 = arith.addf %3, %4 : vector<8x32xf32>
    %c0_4 = arith.constant 0 : index
    %c0_5 = arith.constant 0 : index
    %c0_6 = arith.constant 0 : index
    %6 = vector.load %arg3[%c0_4, %c0_5, %c0_6] : memref<2x32x96xf32, #tpu.memory_space<vmem>>, vector<1x32x96xf32>
    %7 = vector.shape_cast %6 : vector<1x32x96xf32> to vector<32x96xf32>
    %c0_7 = arith.constant 0 : index
    %c0_8 = arith.constant 0 : index
    %c0_9 = arith.constant 0 : index
    %8 = vector.load %arg4[%c0_7, %c0_8, %c0_9] : memref<2x32x32xf32, #tpu.memory_space<vmem>>, vector<1x32x32xf32>
    %9 = vector.shape_cast %8 : vector<1x32x32xf32> to vector<32x32xf32>
    %c0_10 = arith.constant 0 : index
    %c0_11 = arith.constant 0 : index
    %c0_12 = arith.constant 0 : index
    %10 = vector.load %arg5[%c0_10, %c0_11, %c0_12] : memref<2x32x32xf32, #tpu.memory_space<vmem>>, vector<1x32x32xf32>
    %11 = vector.shape_cast %10 : vector<1x32x32xf32> to vector<32x32xf32>
    %c0_13 = arith.constant 0 : index
    %c0_14 = arith.constant 0 : index
    %c0_15 = arith.constant 0 : index
    %12 = vector.load %arg6[%c0_13, %c0_14, %c0_15] : memref<2x32x32xf32, #tpu.memory_space<vmem>>, vector<1x32x32xf32>
    %13 = vector.shape_cast %12 : vector<1x32x32xf32> to vector<32x32xf32>
    %c0_16 = arith.constant 0 : index
    %c0_17 = arith.constant 0 : index
    %c0_18 = arith.constant 0 : index
    %14 = vector.load %arg7[%c0_16, %c0_17, %c0_18] : memref<2x8x128xf32, #tpu.memory_space<vmem>>, vector<1x8x128xf32>
    %15 = vector.shape_cast %14 : vector<1x8x128xf32> to vector<8x128xf32>
    %16 = vector.extract_strided_slice %15 {offsets = [0, 0], sizes = [1, 96], strides = [1, 1]} : vector<8x128xf32> to vector<1x96xf32>
    %17 = vector.extract_strided_slice %15 {offsets = [1, 0], sizes = [1, 32], strides = [1, 1]} : vector<8x128xf32> to vector<1x32xf32>
    %18 = vector.extract_strided_slice %15 {offsets = [2, 0], sizes = [1, 32], strides = [1, 1]} : vector<8x128xf32> to vector<1x32xf32>
    %19 = vector.extract_strided_slice %15 {offsets = [3, 0], sizes = [1, 32], strides = [1, 1]} : vector<8x128xf32> to vector<1x32xf32>
    %20 = vector.extract_strided_slice %15 {offsets = [4, 0], sizes = [1, 32], strides = [1, 1]} : vector<8x128xf32> to vector<1x32xf32>
    %21 = vector.extract_strided_slice %15 {offsets = [5, 0], sizes = [1, 32], strides = [1, 1]} : vector<8x128xf32> to vector<1x32xf32>
    %22 = vector.extract_strided_slice %15 {offsets = [6, 0], sizes = [1, 32], strides = [1, 1]} : vector<8x128xf32> to vector<1x32xf32>
    %23 = vector.extract_strided_slice %15 {offsets = [7, 0], sizes = [1, 32], strides = [1, 1]} : vector<8x128xf32> to vector<1x32xf32>
    %cst_19 = arith.constant dense<0.000000e+00> : vector<8x96xf32>
    %24 = tpu.matmul %5, %7, %cst_19 {dimension_numbers = #tpu.dot_dimension_numbers<[1], [0], [0], [1], [0, 0, 1, 1], [], []>} : vector<8x32xf32>, vector<32x96xf32>, vector<8x96xf32> -> vector<8x96xf32>
    %25 = vector.broadcast %16 : vector<1x96xf32> to vector<8x96xf32>
    %26 = arith.addf %24, %25 : vector<8x96xf32>
    %27 = vector.extract_strided_slice %26 {offsets = [0, 0], sizes = [8, 8], strides = [1, 1]} : vector<8x96xf32> to vector<8x8xf32>
    %28 = vector.extract_strided_slice %26 {offsets = [0, 8], sizes = [8, 8], strides = [1, 1]} : vector<8x96xf32> to vector<8x8xf32>
    %29 = vector.extract_strided_slice %26 {offsets = [0, 16], sizes = [8, 8], strides = [1, 1]} : vector<8x96xf32> to vector<8x8xf32>
    %30 = vector.extract_strided_slice %26 {offsets = [0, 24], sizes = [8, 8], strides = [1, 1]} : vector<8x96xf32> to vector<8x8xf32>
    %31 = vector.shape_cast %27 : vector<8x8xf32> to vector<1x8x8xf32>
    %32 = vector.shape_cast %28 : vector<8x8xf32> to vector<1x8x8xf32>
    %33 = vector.shape_cast %29 : vector<8x8xf32> to vector<1x8x8xf32>
    %34 = vector.shape_cast %30 : vector<8x8xf32> to vector<1x8x8xf32>
    %35 = tpu.concatenate %31, %32, %33, %34 in 0 : vector<1x8x8xf32>, vector<1x8x8xf32>, vector<1x8x8xf32>, vector<1x8x8xf32> -> vector<4x8x8xf32>
    %36 = vector.extract_strided_slice %26 {offsets = [0, 32], sizes = [8, 8], strides = [1, 1]} : vector<8x96xf32> to vector<8x8xf32>
    %37 = vector.extract_strided_slice %26 {offsets = [0, 40], sizes = [8, 8], strides = [1, 1]} : vector<8x96xf32> to vector<8x8xf32>
    %38 = vector.extract_strided_slice %26 {offsets = [0, 48], sizes = [8, 8], strides = [1, 1]} : vector<8x96xf32> to vector<8x8xf32>
    %39 = vector.extract_strided_slice %26 {offsets = [0, 56], sizes = [8, 8], strides = [1, 1]} : vector<8x96xf32> to vector<8x8xf32>
    %40 = vector.shape_cast %36 : vector<8x8xf32> to vector<1x8x8xf32>
    %41 = vector.shape_cast %37 : vector<8x8xf32> to vector<1x8x8xf32>
    %42 = vector.shape_cast %38 : vector<8x8xf32> to vector<1x8x8xf32>
    %43 = vector.shape_cast %39 : vector<8x8xf32> to vector<1x8x8xf32>
    %44 = tpu.concatenate %40, %41, %42, %43 in 0 : vector<1x8x8xf32>, vector<1x8x8xf32>, vector<1x8x8xf32>, vector<1x8x8xf32> -> vector<4x8x8xf32>
    %45 = vector.extract_strided_slice %26 {offsets = [0, 64], sizes = [8, 8], strides = [1, 1]} : vector<8x96xf32> to vector<8x8xf32>
    %46 = vector.extract_strided_slice %26 {offsets = [0, 72], sizes = [8, 8], strides = [1, 1]} : vector<8x96xf32> to vector<8x8xf32>
    %47 = vector.extract_strided_slice %26 {offsets = [0, 80], sizes = [8, 8], strides = [1, 1]} : vector<8x96xf32> to vector<8x8xf32>
    %48 = vector.extract_strided_slice %26 {offsets = [0, 88], sizes = [8, 8], strides = [1, 1]} : vector<8x96xf32> to vector<8x8xf32>
    %49 = vector.shape_cast %45 : vector<8x8xf32> to vector<1x8x8xf32>
    %50 = vector.shape_cast %46 : vector<8x8xf32> to vector<1x8x8xf32>
    %51 = vector.shape_cast %47 : vector<8x8xf32> to vector<1x8x8xf32>
    %52 = vector.shape_cast %48 : vector<8x8xf32> to vector<1x8x8xf32>
    %53 = tpu.concatenate %49, %50, %51, %52 in 0 : vector<1x8x8xf32>, vector<1x8x8xf32>, vector<1x8x8xf32>, vector<1x8x8xf32> -> vector<4x8x8xf32>
    "tpu.trace_start"() <{level = 10 : i32, message = "hie,hje->hij"}> : () -> ()
    %cst_20 = arith.constant dense<0.000000e+00> : vector<4x8x8xf32>
    %54 = tpu.matmul %35, %44, %cst_20 {dimension_numbers = #tpu.dot_dimension_numbers<[2], [2], [1], [1], [0, 0, 0, 1, 1, 1], [0], [0]>} : vector<4x8x8xf32>, vector<4x8x8xf32>, vector<4x8x8xf32> -> vector<4x8x8xf32>
    "tpu.trace_stop"() : () -> ()
    %cst_21 = arith.constant dense<0xFF800000> : vector<4x8xf32>
    %55 = vector.multi_reduction <maximumf>, %54, %cst_21 [2] : vector<4x8x8xf32> to vector<4x8xf32>
    %56 = vector.shape_cast %55 : vector<4x8xf32> to vector<4x8x1xf32>
    %57 = vector.broadcast %56 : vector<4x8x1xf32> to vector<4x8x8xf32>
    %58 = arith.subf %54, %57 : vector<4x8x8xf32>
    %59 = math.exp %58 : vector<4x8x8xf32>
    %cst_22 = arith.constant dense<0.000000e+00> : vector<4x8xf32>
    %60 = vector.multi_reduction <add>, %59, %cst_22 [2] : vector<4x8x8xf32> to vector<4x8xf32>
    %61 = vector.shape_cast %60 : vector<4x8xf32> to vector<4x8x1xf32>
    %62 = vector.broadcast %61 : vector<4x8x1xf32> to vector<4x8x8xf32>
    %63 = arith.divf %59, %62 : vector<4x8x8xf32>
    "tpu.trace_start"() <{level = 10 : i32, message = "hij,hje->hie"}> : () -> ()
    %cst_23 = arith.constant dense<0.000000e+00> : vector<4x8x8xf32>
    %64 = tpu.matmul %63, %53, %cst_23 {dimension_numbers = #tpu.dot_dimension_numbers<[2], [1], [1], [2], [0, 0, 0, 1, 1, 2], [0], [0]>} : vector<4x8x8xf32>, vector<4x8x8xf32>, vector<4x8x8xf32> -> vector<4x8x8xf32>
    "tpu.trace_stop"() : () -> ()
    %65 = vector.extract_strided_slice %64 {offsets = [0, 0, 0], sizes = [1, 8, 8], strides = [1, 1, 1]} : vector<4x8x8xf32> to vector<1x8x8xf32>
    %66 = vector.shape_cast %65 : vector<1x8x8xf32> to vector<8x8xf32>
    %67 = vector.extract_strided_slice %64 {offsets = [1, 0, 0], sizes = [1, 8, 8], strides = [1, 1, 1]} : vector<4x8x8xf32> to vector<1x8x8xf32>
    %68 = vector.shape_cast %67 : vector<1x8x8xf32> to vector<8x8xf32>
    %69 = vector.extract_strided_slice %64 {offsets = [2, 0, 0], sizes = [1, 8, 8], strides = [1, 1, 1]} : vector<4x8x8xf32> to vector<1x8x8xf32>
    %70 = vector.shape_cast %69 : vector<1x8x8xf32> to vector<8x8xf32>
    %71 = vector.extract_strided_slice %64 {offsets = [3, 0, 0], sizes = [1, 8, 8], strides = [1, 1, 1]} : vector<4x8x8xf32> to vector<1x8x8xf32>
    %72 = vector.shape_cast %71 : vector<1x8x8xf32> to vector<8x8xf32>
    %73 = tpu.concatenate %66, %68, %70, %72 in 1 : vector<8x8xf32>, vector<8x8xf32>, vector<8x8xf32>, vector<8x8xf32> -> vector<8x32xf32>
    %cst_24 = arith.constant dense<0.000000e+00> : vector<8x32xf32>
    %74 = tpu.matmul %73, %9, %cst_24 {dimension_numbers = #tpu.dot_dimension_numbers<[1], [0], [0], [1], [0, 0, 1, 1], [], []>} : vector<8x32xf32>, vector<32x32xf32>, vector<8x32xf32> -> vector<8x32xf32>
    %75 = vector.broadcast %17 : vector<1x32xf32> to vector<8x32xf32>
    %76 = arith.addf %74, %75 : vector<8x32xf32>
    %77 = arith.addf %5, %76 : vector<8x32xf32>
    %cst_25 = arith.constant dense<0.000000e+00> : vector<8xf32>
    %78 = vector.multi_reduction <add>, %77, %cst_25 [1] : vector<8x32xf32> to vector<8xf32>
    %79 = vector.shape_cast %78 : vector<8xf32> to vector<8x1xf32>
    %cst_26 = arith.constant 3.200000e+01 : f32
    %80 = vector.broadcast %cst_26 : f32 to vector<8x1xf32>
    %81 = arith.divf %79, %80 : vector<8x1xf32>
    %82 = vector.broadcast %81 : vector<8x1xf32> to vector<8x32xf32>
    %83 = arith.subf %77, %82 : vector<8x32xf32>
    %84 = arith.mulf %83, %83 : vector<8x32xf32>
    %cst_27 = arith.constant dense<0.000000e+00> : vector<8xf32>
    %85 = vector.multi_reduction <add>, %84, %cst_27 [1] : vector<8x32xf32> to vector<8xf32>
    %86 = vector.shape_cast %85 : vector<8xf32> to vector<8x1xf32>
    %cst_28 = arith.constant 3.200000e+01 : f32
    %87 = vector.broadcast %cst_28 : f32 to vector<8x1xf32>
    %88 = arith.divf %86, %87 : vector<8x1xf32>
    %89 = vector.broadcast %81 : vector<8x1xf32> to vector<8x32xf32>
    %90 = arith.subf %77, %89 : vector<8x32xf32>
    %cst_29 = arith.constant 9.99999974E-6 : f32
    %91 = vector.broadcast %cst_29 : f32 to vector<8x1xf32>
    %92 = arith.addf %88, %91 : vector<8x1xf32>
    %93 = math.rsqrt %92 : vector<8x1xf32>
    %94 = vector.broadcast %93 : vector<8x1xf32> to vector<8x32xf32>
    %95 = arith.mulf %90, %94 : vector<8x32xf32>
    %96 = vector.broadcast %18 : vector<1x32xf32> to vector<8x32xf32>
    %97 = arith.mulf %95, %96 : vector<8x32xf32>
    %98 = vector.broadcast %19 : vector<1x32xf32> to vector<8x32xf32>
    %99 = arith.addf %97, %98 : vector<8x32xf32>
    %cst_30 = arith.constant dense<0.000000e+00> : vector<8x32xf32>
    %100 = tpu.matmul %99, %11, %cst_30 {dimension_numbers = #tpu.dot_dimension_numbers<[1], [0], [0], [1], [0, 0, 1, 1], [], []>} : vector<8x32xf32>, vector<32x32xf32>, vector<8x32xf32> -> vector<8x32xf32>
    %101 = vector.broadcast %20 : vector<1x32xf32> to vector<8x32xf32>
    %102 = arith.addf %100, %101 : vector<8x32xf32>
    %cst_31 = arith.constant 0.000000e+00 : f32
    %103 = vector.broadcast %cst_31 : f32 to vector<8x32xf32>
    %104 = arith.maximumf %102, %103 : vector<8x32xf32>
    %cst_32 = arith.constant dense<0.000000e+00> : vector<8x32xf32>
    %105 = tpu.matmul %104, %13, %cst_32 {dimension_numbers = #tpu.dot_dimension_numbers<[1], [0], [0], [1], [0, 0, 1, 1], [], []>} : vector<8x32xf32>, vector<32x32xf32>, vector<8x32xf32> -> vector<8x32xf32>
    %106 = vector.broadcast %21 : vector<1x32xf32> to vector<8x32xf32>
    %107 = arith.addf %105, %106 : vector<8x32xf32>
    %108 = arith.addf %99, %107 : vector<8x32xf32>
    %cst_33 = arith.constant dense<0.000000e+00> : vector<8xf32>
    %109 = vector.multi_reduction <add>, %108, %cst_33 [1] : vector<8x32xf32> to vector<8xf32>
    %110 = vector.shape_cast %109 : vector<8xf32> to vector<8x1xf32>
    %cst_34 = arith.constant 3.200000e+01 : f32
    %111 = vector.broadcast %cst_34 : f32 to vector<8x1xf32>
    %112 = arith.divf %110, %111 : vector<8x1xf32>
    %113 = vector.broadcast %112 : vector<8x1xf32> to vector<8x32xf32>
    %114 = arith.subf %108, %113 : vector<8x32xf32>
    %115 = arith.mulf %114, %114 : vector<8x32xf32>
    %cst_35 = arith.constant dense<0.000000e+00> : vector<8xf32>
    %116 = vector.multi_reduction <add>, %115, %cst_35 [1] : vector<8x32xf32> to vector<8xf32>
    %117 = vector.shape_cast %116 : vector<8xf32> to vector<8x1xf32>
    %cst_36 = arith.constant 3.200000e+01 : f32
    %118 = vector.broadcast %cst_36 : f32 to vector<8x1xf32>
    %119 = arith.divf %117, %118 : vector<8x1xf32>
    %120 = vector.broadcast %112 : vector<8x1xf32> to vector<8x32xf32>
    %121 = arith.subf %108, %120 : vector<8x32xf32>
    %cst_37 = arith.constant 9.99999974E-6 : f32
    %122 = vector.broadcast %cst_37 : f32 to vector<8x1xf32>
    %123 = arith.addf %119, %122 : vector<8x1xf32>
    %124 = math.rsqrt %123 : vector<8x1xf32>
    %125 = vector.broadcast %124 : vector<8x1xf32> to vector<8x32xf32>
    %126 = arith.mulf %121, %125 : vector<8x32xf32>
    %127 = vector.broadcast %22 : vector<1x32xf32> to vector<8x32xf32>
    %128 = arith.mulf %126, %127 : vector<8x32xf32>
    %129 = vector.broadcast %23 : vector<1x32xf32> to vector<8x32xf32>
    %130 = arith.addf %128, %129 : vector<8x32xf32>
    %c1 = arith.constant 1 : index
    %c0_38 = arith.constant 0 : index
    %c0_39 = arith.constant 0 : index
    %131 = vector.load %arg3[%c1, %c0_38, %c0_39] : memref<2x32x96xf32, #tpu.memory_space<vmem>>, vector<1x32x96xf32>
    %132 = vector.shape_cast %131 : vector<1x32x96xf32> to vector<32x96xf32>
    %c1_40 = arith.constant 1 : index
    %c0_41 = arith.constant 0 : index
    %c0_42 = arith.constant 0 : index
    %133 = vector.load %arg4[%c1_40, %c0_41, %c0_42] : memref<2x32x32xf32, #tpu.memory_space<vmem>>, vector<1x32x32xf32>
    %134 = vector.shape_cast %133 : vector<1x32x32xf32> to vector<32x32xf32>
    %c1_43 = arith.constant 1 : index
    %c0_44 = arith.constant 0 : index
    %c0_45 = arith.constant 0 : index
    %135 = vector.load %arg5[%c1_43, %c0_44, %c0_45] : memref<2x32x32xf32, #tpu.memory_space<vmem>>, vector<1x32x32xf32>
    %136 = vector.shape_cast %135 : vector<1x32x32xf32> to vector<32x32xf32>
    %c1_46 = arith.constant 1 : index
    %c0_47 = arith.constant 0 : index
    %c0_48 = arith.constant 0 : index
    %137 = vector.load %arg6[%c1_46, %c0_47, %c0_48] : memref<2x32x32xf32, #tpu.memory_space<vmem>>, vector<1x32x32xf32>
    %138 = vector.shape_cast %137 : vector<1x32x32xf32> to vector<32x32xf32>
    %c1_49 = arith.constant 1 : index
    %c0_50 = arith.constant 0 : index
    %c0_51 = arith.constant 0 : index
    %139 = vector.load %arg7[%c1_49, %c0_50, %c0_51] : memref<2x8x128xf32, #tpu.memory_space<vmem>>, vector<1x8x128xf32>
    %140 = vector.shape_cast %139 : vector<1x8x128xf32> to vector<8x128xf32>
    %141 = vector.extract_strided_slice %140 {offsets = [0, 0], sizes = [1, 96], strides = [1, 1]} : vector<8x128xf32> to vector<1x96xf32>
    %142 = vector.extract_strided_slice %140 {offsets = [1, 0], sizes = [1, 32], strides = [1, 1]} : vector<8x128xf32> to vector<1x32xf32>
    %143 = vector.extract_strided_slice %140 {offsets = [2, 0], sizes = [1, 32], strides = [1, 1]} : vector<8x128xf32> to vector<1x32xf32>
    %144 = vector.extract_strided_slice %140 {offsets = [3, 0], sizes = [1, 32], strides = [1, 1]} : vector<8x128xf32> to vector<1x32xf32>
    %145 = vector.extract_strided_slice %140 {offsets = [4, 0], sizes = [1, 32], strides = [1, 1]} : vector<8x128xf32> to vector<1x32xf32>
    %146 = vector.extract_strided_slice %140 {offsets = [5, 0], sizes = [1, 32], strides = [1, 1]} : vector<8x128xf32> to vector<1x32xf32>
    %147 = vector.extract_strided_slice %140 {offsets = [6, 0], sizes = [1, 32], strides = [1, 1]} : vector<8x128xf32> to vector<1x32xf32>
    %148 = vector.extract_strided_slice %140 {offsets = [7, 0], sizes = [1, 32], strides = [1, 1]} : vector<8x128xf32> to vector<1x32xf32>
    %cst_52 = arith.constant dense<0.000000e+00> : vector<8x96xf32>
    %149 = tpu.matmul %130, %132, %cst_52 {dimension_numbers = #tpu.dot_dimension_numbers<[1], [0], [0], [1], [0, 0, 1, 1], [], []>} : vector<8x32xf32>, vector<32x96xf32>, vector<8x96xf32> -> vector<8x96xf32>
    %150 = vector.broadcast %141 : vector<1x96xf32> to vector<8x96xf32>
    %151 = arith.addf %149, %150 : vector<8x96xf32>
    %152 = vector.extract_strided_slice %151 {offsets = [0, 0], sizes = [8, 8], strides = [1, 1]} : vector<8x96xf32> to vector<8x8xf32>
    %153 = vector.extract_strided_slice %151 {offsets = [0, 8], sizes = [8, 8], strides = [1, 1]} : vector<8x96xf32> to vector<8x8xf32>
    %154 = vector.extract_strided_slice %151 {offsets = [0, 16], sizes = [8, 8], strides = [1, 1]} : vector<8x96xf32> to vector<8x8xf32>
    %155 = vector.extract_strided_slice %151 {offsets = [0, 24], sizes = [8, 8], strides = [1, 1]} : vector<8x96xf32> to vector<8x8xf32>
    %156 = vector.shape_cast %152 : vector<8x8xf32> to vector<1x8x8xf32>
    %157 = vector.shape_cast %153 : vector<8x8xf32> to vector<1x8x8xf32>
    %158 = vector.shape_cast %154 : vector<8x8xf32> to vector<1x8x8xf32>
    %159 = vector.shape_cast %155 : vector<8x8xf32> to vector<1x8x8xf32>
    %160 = tpu.concatenate %156, %157, %158, %159 in 0 : vector<1x8x8xf32>, vector<1x8x8xf32>, vector<1x8x8xf32>, vector<1x8x8xf32> -> vector<4x8x8xf32>
    %161 = vector.extract_strided_slice %151 {offsets = [0, 32], sizes = [8, 8], strides = [1, 1]} : vector<8x96xf32> to vector<8x8xf32>
    %162 = vector.extract_strided_slice %151 {offsets = [0, 40], sizes = [8, 8], strides = [1, 1]} : vector<8x96xf32> to vector<8x8xf32>
    %163 = vector.extract_strided_slice %151 {offsets = [0, 48], sizes = [8, 8], strides = [1, 1]} : vector<8x96xf32> to vector<8x8xf32>
    %164 = vector.extract_strided_slice %151 {offsets = [0, 56], sizes = [8, 8], strides = [1, 1]} : vector<8x96xf32> to vector<8x8xf32>
    %165 = vector.shape_cast %161 : vector<8x8xf32> to vector<1x8x8xf32>
    %166 = vector.shape_cast %162 : vector<8x8xf32> to vector<1x8x8xf32>
    %167 = vector.shape_cast %163 : vector<8x8xf32> to vector<1x8x8xf32>
    %168 = vector.shape_cast %164 : vector<8x8xf32> to vector<1x8x8xf32>
    %169 = tpu.concatenate %165, %166, %167, %168 in 0 : vector<1x8x8xf32>, vector<1x8x8xf32>, vector<1x8x8xf32>, vector<1x8x8xf32> -> vector<4x8x8xf32>
    %170 = vector.extract_strided_slice %151 {offsets = [0, 64], sizes = [8, 8], strides = [1, 1]} : vector<8x96xf32> to vector<8x8xf32>
    %171 = vector.extract_strided_slice %151 {offsets = [0, 72], sizes = [8, 8], strides = [1, 1]} : vector<8x96xf32> to vector<8x8xf32>
    %172 = vector.extract_strided_slice %151 {offsets = [0, 80], sizes = [8, 8], strides = [1, 1]} : vector<8x96xf32> to vector<8x8xf32>
    %173 = vector.extract_strided_slice %151 {offsets = [0, 88], sizes = [8, 8], strides = [1, 1]} : vector<8x96xf32> to vector<8x8xf32>
    %174 = vector.shape_cast %170 : vector<8x8xf32> to vector<1x8x8xf32>
    %175 = vector.shape_cast %171 : vector<8x8xf32> to vector<1x8x8xf32>
    %176 = vector.shape_cast %172 : vector<8x8xf32> to vector<1x8x8xf32>
    %177 = vector.shape_cast %173 : vector<8x8xf32> to vector<1x8x8xf32>
    %178 = tpu.concatenate %174, %175, %176, %177 in 0 : vector<1x8x8xf32>, vector<1x8x8xf32>, vector<1x8x8xf32>, vector<1x8x8xf32> -> vector<4x8x8xf32>
    "tpu.trace_start"() <{level = 10 : i32, message = "hie,hje->hij"}> : () -> ()
    %cst_53 = arith.constant dense<0.000000e+00> : vector<4x8x8xf32>
    %179 = tpu.matmul %160, %169, %cst_53 {dimension_numbers = #tpu.dot_dimension_numbers<[2], [2], [1], [1], [0, 0, 0, 1, 1, 1], [0], [0]>} : vector<4x8x8xf32>, vector<4x8x8xf32>, vector<4x8x8xf32> -> vector<4x8x8xf32>
    "tpu.trace_stop"() : () -> ()
    %cst_54 = arith.constant dense<0xFF800000> : vector<4x8xf32>
    %180 = vector.multi_reduction <maximumf>, %179, %cst_54 [2] : vector<4x8x8xf32> to vector<4x8xf32>
    %181 = vector.shape_cast %180 : vector<4x8xf32> to vector<4x8x1xf32>
    %182 = vector.broadcast %181 : vector<4x8x1xf32> to vector<4x8x8xf32>
    %183 = arith.subf %179, %182 : vector<4x8x8xf32>
    %184 = math.exp %183 : vector<4x8x8xf32>
    %cst_55 = arith.constant dense<0.000000e+00> : vector<4x8xf32>
    %185 = vector.multi_reduction <add>, %184, %cst_55 [2] : vector<4x8x8xf32> to vector<4x8xf32>
    %186 = vector.shape_cast %185 : vector<4x8xf32> to vector<4x8x1xf32>
    %187 = vector.broadcast %186 : vector<4x8x1xf32> to vector<4x8x8xf32>
    %188 = arith.divf %184, %187 : vector<4x8x8xf32>
    "tpu.trace_start"() <{level = 10 : i32, message = "hij,hje->hie"}> : () -> ()
    %cst_56 = arith.constant dense<0.000000e+00> : vector<4x8x8xf32>
    %189 = tpu.matmul %188, %178, %cst_56 {dimension_numbers = #tpu.dot_dimension_numbers<[2], [1], [1], [2], [0, 0, 0, 1, 1, 2], [0], [0]>} : vector<4x8x8xf32>, vector<4x8x8xf32>, vector<4x8x8xf32> -> vector<4x8x8xf32>
    "tpu.trace_stop"() : () -> ()
    %190 = vector.extract_strided_slice %189 {offsets = [0, 0, 0], sizes = [1, 8, 8], strides = [1, 1, 1]} : vector<4x8x8xf32> to vector<1x8x8xf32>
    %191 = vector.shape_cast %190 : vector<1x8x8xf32> to vector<8x8xf32>
    %192 = vector.extract_strided_slice %189 {offsets = [1, 0, 0], sizes = [1, 8, 8], strides = [1, 1, 1]} : vector<4x8x8xf32> to vector<1x8x8xf32>
    %193 = vector.shape_cast %192 : vector<1x8x8xf32> to vector<8x8xf32>
    %194 = vector.extract_strided_slice %189 {offsets = [2, 0, 0], sizes = [1, 8, 8], strides = [1, 1, 1]} : vector<4x8x8xf32> to vector<1x8x8xf32>
    %195 = vector.shape_cast %194 : vector<1x8x8xf32> to vector<8x8xf32>
    %196 = vector.extract_strided_slice %189 {offsets = [3, 0, 0], sizes = [1, 8, 8], strides = [1, 1, 1]} : vector<4x8x8xf32> to vector<1x8x8xf32>
    %197 = vector.shape_cast %196 : vector<1x8x8xf32> to vector<8x8xf32>
    %198 = tpu.concatenate %191, %193, %195, %197 in 1 : vector<8x8xf32>, vector<8x8xf32>, vector<8x8xf32>, vector<8x8xf32> -> vector<8x32xf32>
    %cst_57 = arith.constant dense<0.000000e+00> : vector<8x32xf32>
    %199 = tpu.matmul %198, %134, %cst_57 {dimension_numbers = #tpu.dot_dimension_numbers<[1], [0], [0], [1], [0, 0, 1, 1], [], []>} : vector<8x32xf32>, vector<32x32xf32>, vector<8x32xf32> -> vector<8x32xf32>
    %200 = vector.broadcast %142 : vector<1x32xf32> to vector<8x32xf32>
    %201 = arith.addf %199, %200 : vector<8x32xf32>
    %202 = arith.addf %130, %201 : vector<8x32xf32>
    %cst_58 = arith.constant dense<0.000000e+00> : vector<8xf32>
    %203 = vector.multi_reduction <add>, %202, %cst_58 [1] : vector<8x32xf32> to vector<8xf32>
    %204 = vector.shape_cast %203 : vector<8xf32> to vector<8x1xf32>
    %cst_59 = arith.constant 3.200000e+01 : f32
    %205 = vector.broadcast %cst_59 : f32 to vector<8x1xf32>
    %206 = arith.divf %204, %205 : vector<8x1xf32>
    %207 = vector.broadcast %206 : vector<8x1xf32> to vector<8x32xf32>
    %208 = arith.subf %202, %207 : vector<8x32xf32>
    %209 = arith.mulf %208, %208 : vector<8x32xf32>
    %cst_60 = arith.constant dense<0.000000e+00> : vector<8xf32>
    %210 = vector.multi_reduction <add>, %209, %cst_60 [1] : vector<8x32xf32> to vector<8xf32>
    %211 = vector.shape_cast %210 : vector<8xf32> to vector<8x1xf32>
    %cst_61 = arith.constant 3.200000e+01 : f32
    %212 = vector.broadcast %cst_61 : f32 to vector<8x1xf32>
    %213 = arith.divf %211, %212 : vector<8x1xf32>
    %214 = vector.broadcast %206 : vector<8x1xf32> to vector<8x32xf32>
    %215 = arith.subf %202, %214 : vector<8x32xf32>
    %cst_62 = arith.constant 9.99999974E-6 : f32
    %216 = vector.broadcast %cst_62 : f32 to vector<8x1xf32>
    %217 = arith.addf %213, %216 : vector<8x1xf32>
    %218 = math.rsqrt %217 : vector<8x1xf32>
    %219 = vector.broadcast %218 : vector<8x1xf32> to vector<8x32xf32>
    %220 = arith.mulf %215, %219 : vector<8x32xf32>
    %221 = vector.broadcast %143 : vector<1x32xf32> to vector<8x32xf32>
    %222 = arith.mulf %220, %221 : vector<8x32xf32>
    %223 = vector.broadcast %144 : vector<1x32xf32> to vector<8x32xf32>
    %224 = arith.addf %222, %223 : vector<8x32xf32>
    %cst_63 = arith.constant dense<0.000000e+00> : vector<8x32xf32>
    %225 = tpu.matmul %224, %136, %cst_63 {dimension_numbers = #tpu.dot_dimension_numbers<[1], [0], [0], [1], [0, 0, 1, 1], [], []>} : vector<8x32xf32>, vector<32x32xf32>, vector<8x32xf32> -> vector<8x32xf32>
    %226 = vector.broadcast %145 : vector<1x32xf32> to vector<8x32xf32>
    %227 = arith.addf %225, %226 : vector<8x32xf32>
    %cst_64 = arith.constant 0.000000e+00 : f32
    %228 = vector.broadcast %cst_64 : f32 to vector<8x32xf32>
    %229 = arith.maximumf %227, %228 : vector<8x32xf32>
    %cst_65 = arith.constant dense<0.000000e+00> : vector<8x32xf32>
    %230 = tpu.matmul %229, %138, %cst_65 {dimension_numbers = #tpu.dot_dimension_numbers<[1], [0], [0], [1], [0, 0, 1, 1], [], []>} : vector<8x32xf32>, vector<32x32xf32>, vector<8x32xf32> -> vector<8x32xf32>
    %231 = vector.broadcast %146 : vector<1x32xf32> to vector<8x32xf32>
    %232 = arith.addf %230, %231 : vector<8x32xf32>
    %233 = arith.addf %224, %232 : vector<8x32xf32>
    %cst_66 = arith.constant dense<0.000000e+00> : vector<8xf32>
    %234 = vector.multi_reduction <add>, %233, %cst_66 [1] : vector<8x32xf32> to vector<8xf32>
    %235 = vector.shape_cast %234 : vector<8xf32> to vector<8x1xf32>
    %cst_67 = arith.constant 3.200000e+01 : f32
    %236 = vector.broadcast %cst_67 : f32 to vector<8x1xf32>
    %237 = arith.divf %235, %236 : vector<8x1xf32>
    %238 = vector.broadcast %237 : vector<8x1xf32> to vector<8x32xf32>
    %239 = arith.subf %233, %238 : vector<8x32xf32>
    %240 = arith.mulf %239, %239 : vector<8x32xf32>
    %cst_68 = arith.constant dense<0.000000e+00> : vector<8xf32>
    %241 = vector.multi_reduction <add>, %240, %cst_68 [1] : vector<8x32xf32> to vector<8xf32>
    %242 = vector.shape_cast %241 : vector<8xf32> to vector<8x1xf32>
    %cst_69 = arith.constant 3.200000e+01 : f32
    %243 = vector.broadcast %cst_69 : f32 to vector<8x1xf32>
    %244 = arith.divf %242, %243 : vector<8x1xf32>
    %245 = vector.broadcast %237 : vector<8x1xf32> to vector<8x32xf32>
    %246 = arith.subf %233, %245 : vector<8x32xf32>
    %cst_70 = arith.constant 9.99999974E-6 : f32
    %247 = vector.broadcast %cst_70 : f32 to vector<8x1xf32>
    %248 = arith.addf %244, %247 : vector<8x1xf32>
    %249 = math.rsqrt %248 : vector<8x1xf32>
    %250 = vector.broadcast %249 : vector<8x1xf32> to vector<8x32xf32>
    %251 = arith.mulf %246, %250 : vector<8x32xf32>
    %252 = vector.broadcast %147 : vector<1x32xf32> to vector<8x32xf32>
    %253 = arith.mulf %251, %252 : vector<8x32xf32>
    %254 = vector.broadcast %148 : vector<1x32xf32> to vector<8x32xf32>
    %255 = arith.addf %253, %254 : vector<8x32xf32>
    %c0_71 = arith.constant 0 : index
    %c0_72 = arith.constant 0 : index
    %c0_73 = arith.constant 0 : index
    %256 = vector.load %arg8[%c0_71, %c0_72, %c0_73] : memref<1x8x32xf32, #tpu.memory_space<vmem>>, vector<1x8x32xf32>
    %257 = vector.shape_cast %256 : vector<1x8x32xf32> to vector<8x32xf32>
    %258 = vector.shape_cast %255 : vector<8x32xf32> to vector<1x8x32xf32>
    tpu.vector_store %arg8[%c0_71, %c0_72, %c0_73], %258 {strides = array<i32>} : memref<1x8x32xf32, #tpu.memory_space<vmem>>, vector<1x8x32xf32>,
    return
  }
  func.func @transform_0(%arg0: i32) -> (i32, i32, i32) {
    %c0_i32 = arith.constant 0 : i32
    %c0_i32_0 = arith.constant 0 : i32
    %c0_i32_1 = arith.constant 0 : i32
    return %arg0, %c0_i32, %c0_i32_0 : i32, i32, i32
  }
  func.func @transform_1(%arg0: i32) -> (i32, i32) {
    %c0_i32 = arith.constant 0 : i32
    %c0_i32_0 = arith.constant 0 : i32
    %c0_i32_1 = arith.constant 0 : i32
    return %c0_i32, %c0_i32_0 : i32, i32
  }
  func.func @transform_2(%arg0: i32) -> (i32, i32, i32) {
    %c0_i32 = arith.constant 0 : i32
    %c0_i32_0 = arith.constant 0 : i32
    %c0_i32_1 = arith.constant 0 : i32
    %c0_i32_2 = arith.constant 0 : i32
    return %c0_i32, %c0_i32_0, %c0_i32_1 : i32, i32, i32
  }
  func.func @transform_3(%arg0: i32) -> (i32, i32, i32) {
    %c0_i32 = arith.constant 0 : i32
    %c0_i32_0 = arith.constant 0 : i32
    %c0_i32_1 = arith.constant 0 : i32
    %c0_i32_2 = arith.constant 0 : i32
    return %c0_i32, %c0_i32_0, %c0_i32_1 : i32, i32, i32
  }
  func.func @transform_4(%arg0: i32) -> (i32, i32, i32) {
    %c0_i32 = arith.constant 0 : i32
    %c0_i32_0 = arith.constant 0 : i32
    %c0_i32_1 = arith.constant 0 : i32
    %c0_i32_2 = arith.constant 0 : i32
    return %c0_i32, %c0_i32_0, %c0_i32_1 : i32, i32, i32
  }
  func.func @transform_5(%arg0: i32) -> (i32, i32, i32) {
    %c0_i32 = arith.constant 0 : i32
    %c0_i32_0 = arith.constant 0 : i32
    %c0_i32_1 = arith.constant 0 : i32
    %c0_i32_2 = arith.constant 0 : i32
    return %c0_i32, %c0_i32_0, %c0_i32_1 : i32, i32, i32
  }
  func.func @transform_6(%arg0: i32) -> (i32, i32, i32) {
    %c0_i32 = arith.constant 0 : i32
    %c0_i32_0 = arith.constant 0 : i32
    %c0_i32_1 = arith.constant 0 : i32
    %c0_i32_2 = arith.constant 0 : i32
    return %c0_i32, %c0_i32_0, %c0_i32_1 : i32, i32, i32
  }
  func.func @transform_7(%arg0: i32) -> (i32, i32, i32) {
    %c0_i32 = arith.constant 0 : i32
    %c0_i32_0 = arith.constant 0 : i32
    %c0_i32_1 = arith.constant 0 : i32
    return %arg0, %c0_i32, %c0_i32_0 : i32, i32, i32
  }
}

</mosaic_0001>

<llo_original>
// kernel: tpu_custom_call.1
$region0: #{tpu_custom_call.1}
  #allocation0 [shape = 'u32[]', space=smem, size = 0x4, offset = 0x4, fixed_abs, tag = 'smem constant byte address 0x4 - core index']
  #allocation1 [shape = 'u32[144,128]{1,0:T(1,128)}', space=vmem, size = 0x12000, scoped, tag = 'internal scratch']
  %s0 = inlined_call_operand.hbm [shape: f32[2,8,32], index: 0, kind: input, shape index: {}]
  %s1 = inlined_call_operand.hbm [shape: f32[8,32], index: 1, kind: input, shape index: {}]
  %s2 = inlined_call_operand.hbm [shape: f32[2,32,96], index: 2, kind: input, shape index: {}]
  %s3 = inlined_call_operand.hbm [shape: f32[2,32,32], index: 3, kind: input, shape index: {}]
  %s4 = inlined_call_operand.hbm [shape: f32[2,32,32], index: 4, kind: input, shape index: {}]
  %s5 = inlined_call_operand.hbm [shape: f32[2,32,32], index: 5, kind: input, shape index: {}]
  %s6 = inlined_call_operand.vmem [shape: f32[2,8,128], index: 6, kind: input, shape index: {}]
  %s7 = inlined_call_operand.hbm [shape: f32[2,8,32], index: 7, kind: output, shape index: {}]
  %s8 = sld [smem:[#allocation0]]
  $region85: #{tpu_custom_call.1} parent=0
    _
  %s10 = ssub.s32 1, %s8
  %s11 = scalar_select 0, %s10, %s8
  $region1: #{tpu_custom_call.1} parent=0
    #allocation2 [shape = 'u8[8192]{0}', space=vmem, size = 0x2000, scoped, tag = 'input window, operand 0']
    #allocation3 [shape = 's32[2]{0}', space=sflag, size = 0x8, scoped, tag = 'scoped memory for tpu_custom_call.1']
    #allocation4 [shape = 's32[2]{0}', space=sflag, size = 0x8, scoped, tag = 'scoped memory for tpu_custom_call.1']
    #allocation5 [shape = 'u8[4096]{0}', space=vmem, size = 0x1000, scoped, tag = 'input window, operand 1, single buffered']
    #allocation6 [shape = 's32[1]{0}', space=sflag, size = 0x4, scoped, tag = 'scoped memory for tpu_custom_call.1']
    #allocation7 [shape = 'u8[32768]{0}', space=vmem, size = 0x8000, scoped, tag = 'input window, operand 2, single buffered']
    #allocation8 [shape = 'u8[32768]{0}', space=vmem, size = 0x8000, scoped, tag = 'input window, operand 3, single buffered']
    #allocation9 [shape = 's32[1]{0}', space=sflag, size = 0x4, scoped, tag = 'scoped memory for tpu_custom_call.1']
    #allocation10 [shape = 'u8[32768]{0}', space=vmem, size = 0x8000, scoped, tag = 'input window, operand 4, single buffered']
    #allocation11 [shape = 'u8[32768]{0}', space=vmem, size = 0x8000, scoped, tag = 'input window, operand 5, single buffered']
    #allocation12 [shape = 's32[1]{0}', space=sflag, size = 0x4, scoped, tag = 'scoped memory for tpu_custom_call.1']
    #allocation13 [shape = 'u8[8192]{0}', space=vmem, size = 0x2000, scoped, tag = 'output window, operand 0']
    %12 = vsyncpa [#allocation3], 0
    %s13 = scalar_lea.sflag [#allocation3], 1
    %14 = vsyncpa %s13, 0
    %15 = vsyncpa [#allocation6], 0
    %16 = vsyncpa [#allocation9], 0
    %17 = vsyncpa [#allocation12], 0
    %18 = vsyncpa [#allocation4], 0
    %s19 = scalar_lea.sflag [#allocation4], 1
    %20 = vsyncpa %s19, 0
    loop: start=0, step=1, limit=4
    $region2: #{tpu_custom_call.1} parent=1 // loop_pre_header
      _
    $region3: #{tpu_custom_call.1} parent=1 // loop_header
      %s22 = sphi 0, %s26
      %p23 = scmp.ge.s32.totalorder %s22, 4
      %s32 = sphi 0, %s34
      %s35 = sphi 0, %s32
      %s36 = sphi 0, %s35
      %s52 = sphi 0, %s36
      %s56 = sphi 0, %s56
      %s58 = sphi 0, %s56
      %s59 = sphi 0, %s58
      %s73 = sphi 0, %s59
      %s77 = sphi 0, %s77
      %s79 = sphi 0, %s77
      %s80 = sphi 0, %s79
      %s94 = sphi 0, %s80
      %s98 = sphi 0, %s98
      %s100 = sphi 0, %s98
      %s101 = sphi 0, %s100
      %s115 = sphi 0, %s101
      %s119 = sphi 0, %s119
      %s121 = sphi 0, %s119
      %s122 = sphi 0, %s121
      %s136 = sphi 0, %s122
      %s140 = sphi 0, %s140
      %s142 = sphi 0, %s140
      %s143 = sphi 0, %s142
      %s157 = sphi 0, %s143
      %s161 = sphi 0, %s161
      %s163 = sphi 0, %s161
      %s164 = sphi 0, %s163
      %s178 = sphi 0, %s164
      %s184 = sphi 0, %s186
      %s187 = sphi 0, %s184
      %s188 = sphi 0, %s187
      %s204 = sphi 0, %s188
    $region4: #{tpu_custom_call.1} parent=1 // loop_header_branch
      %25 = sbr.rel (%p23) target = $region8
    $region5: #{tpu_custom_call.1} parent=1 // loop_body
      %s27 = ssub.s32 %s22, 1
      %s28 = ssub.s32 %s22, 2
      %s29 = sadd.s32 %s22, 1
      %s30 = ssub.s32 %s22, %s29
      %p31 = scmp.eq.s32.totalorder %s30, 0
      %s33 = sadd.s32 %s32, 1
      %s34 = scalar_select %p31, %s32, %s33
      %p37 = pneg %p31
      %p38 = scmp.eq.s32.totalorder %s22, 1
      %p39 = por %p37, %p38
      %p40 = scmp.ne.s32.totalorder %s32, %s35
      %p41 = scmp.eq.s32.totalorder %s22, 0
      %p42 = por %p40, %p41
      %p43 = scmp.ne.s32.totalorder %s32, %s35
      %p44 = scmp.eq.s32.totalorder %s27, 1
      %p45 = por %p43, %p44
      %p46 = scmp.ne.s32.totalorder %s35, %s36
      %p47 = scmp.eq.s32.totalorder %s27, 0
      %p48 = por %p46, %p47
      %p49 = scmp.ne.s32.totalorder %s35, %s36
      %p50 = scmp.eq.s32.totalorder %s28, 1
      %p51 = por %p49, %p50
      %p53 = scmp.ne.s32.totalorder %s36, %s52
      %p54 = scmp.eq.s32.totalorder %s28, 0
      %p55 = por %p53, %p54
      %s57 = sadd.s32 %s56, 1
      %p60 = scmp.eq.s32.totalorder %s22, 1
      %p61 = scmp.ne.s32.totalorder %s56, %s58
      %p62 = scmp.eq.s32.totalorder %s22, 0
      %p63 = por %p61, %p62
      %p64 = scmp.ne.s32.totalorder %s56, %s58
      %p65 = scmp.eq.s32.totalorder %s27, 1
      %p66 = por %p64, %p65
      %p67 = scmp.ne.s32.totalorder %s58, %s59
      %p68 = scmp.eq.s32.totalorder %s27, 0
      %p69 = por %p67, %p68
      %p70 = scmp.ne.s32.totalorder %s58, %s59
      %p71 = scmp.eq.s32.totalorder %s28, 1
      %p72 = por %p70, %p71
      %p74 = scmp.ne.s32.totalorder %s59, %s73
      %p75 = scmp.eq.s32.totalorder %s28, 0
      %p76 = por %p74, %p75
      %s78 = sadd.s32 %s77, 1
      %p81 = scmp.eq.s32.totalorder %s22, 1
      %p82 = scmp.ne.s32.totalorder %s77, %s79
      %p83 = scmp.eq.s32.totalorder %s22, 0
      %p84 = por %p82, %p83
      %p85 = scmp.ne.s32.totalorder %s77, %s79
      %p86 = scmp.eq.s32.totalorder %s27, 1
      %p87 = por %p85, %p86
      %p88 = scmp.ne.s32.totalorder %s79, %s80
      %p89 = scmp.eq.s32.totalorder %s27, 0
      %p90 = por %p88, %p89
      %p91 = scmp.ne.s32.totalorder %s79, %s80
      %p92 = scmp.eq.s32.totalorder %s28, 1
      %p93 = por %p91, %p92
      %p95 = scmp.ne.s32.totalorder %s80, %s94
      %p96 = scmp.eq.s32.totalorder %s28, 0
      %p97 = por %p95, %p96
      %s99 = sadd.s32 %s98, 1
      %p102 = scmp.eq.s32.totalorder %s22, 1
      %p103 = scmp.ne.s32.totalorder %s98, %s100
      %p104 = scmp.eq.s32.totalorder %s22, 0
      %p105 = por %p103, %p104
      %p106 = scmp.ne.s32.totalorder %s98, %s100
      %p107 = scmp.eq.s32.totalorder %s27, 1
      %p108 = por %p106, %p107
      %p109 = scmp.ne.s32.totalorder %s100, %s101
      %p110 = scmp.eq.s32.totalorder %s27, 0
      %p111 = por %p109, %p110
      %p112 = scmp.ne.s32.totalorder %s100, %s101
      %p113 = scmp.eq.s32.totalorder %s28, 1
      %p114 = por %p112, %p113
      %p116 = scmp.ne.s32.totalorder %s101, %s115
      %p117 = scmp.eq.s32.totalorder %s28, 0
      %p118 = por %p116, %p117
      %s120 = sadd.s32 %s119, 1
      %p123 = scmp.eq.s32.totalorder %s22, 1
      %p124 = scmp.ne.s32.totalorder %s119, %s121
      %p125 = scmp.eq.s32.totalorder %s22, 0
      %p126 = por %p124, %p125
      %p127 = scmp.ne.s32.totalorder %s119, %s121
      %p128 = scmp.eq.s32.totalorder %s27, 1
      %p129 = por %p127, %p128
      %p130 = scmp.ne.s32.totalorder %s121, %s122
      %p131 = scmp.eq.s32.totalorder %s27, 0
      %p132 = por %p130, %p131
      %p133 = scmp.ne.s32.totalorder %s121, %s122
      %p134 = scmp.eq.s32.totalorder %s28, 1
      %p135 = por %p133, %p134
      %p137 = scmp.ne.s32.totalorder %s122, %s136
      %p138 = scmp.eq.s32.totalorder %s28, 0
      %p139 = por %p137, %p138
      %s141 = sadd.s32 %s140, 1
      %p144 = scmp.eq.s32.totalorder %s22, 1
      %p145 = scmp.ne.s32.totalorder %s140, %s142
      %p146 = scmp.eq.s32.totalorder %s22, 0
      %p147 = por %p145, %p146
      %p148 = scmp.ne.s32.totalorder %s140, %s142
      %p149 = scmp.eq.s32.totalorder %s27, 1
      %p150 = por %p148, %p149
      %p151 = scmp.ne.s32.totalorder %s142, %s143
      %p152 = scmp.eq.s32.totalorder %s27, 0
      %p153 = por %p151, %p152
      %p154 = scmp.ne.s32.totalorder %s142, %s143
      %p155 = scmp.eq.s32.totalorder %s28, 1
      %p156 = por %p154, %p155
      %p158 = scmp.ne.s32.totalorder %s143, %s157
      %p159 = scmp.eq.s32.totalorder %s28, 0
      %p160 = por %p158, %p159
      %s162 = sadd.s32 %s161, 1
      %p165 = scmp.eq.s32.totalorder %s22, 1
      %p166 = scmp.ne.s32.totalorder %s161, %s163
      %p167 = scmp.eq.s32.totalorder %s22, 0
      %p168 = por %p166, %p167
      %p169 = scmp.ne.s32.totalorder %s161, %s163
      %p170 = scmp.eq.s32.totalorder %s27, 1
      %p171 = por %p169, %p170
      %p172 = scmp.ne.s32.totalorder %s163, %s164
      %p173 = scmp.eq.s32.totalorder %s27, 0
      %p174 = por %p172, %p173
      %p175 = scmp.ne.s32.totalorder %s163, %s164
      %p176 = scmp.eq.s32.totalorder %s28, 1
      %p177 = por %p175, %p176
      %p179 = scmp.ne.s32.totalorder %s164, %s178
      %p180 = scmp.eq.s32.totalorder %s28, 0
      %p181 = por %p179, %p180
      %s182 = ssub.s32 %s22, %s29
      %p183 = scmp.eq.s32.totalorder %s182, 0
      %s185 = sadd.s32 %s184, 1
      %s186 = scalar_select %p183, %s184, %s185
      %p189 = pneg %p183
      %p190 = scmp.eq.s32.totalorder %s22, 1
      %p191 = por %p189, %p190
      %p192 = scmp.ne.s32.totalorder %s184, %s187
      %p193 = scmp.eq.s32.totalorder %s22, 0
      %p194 = por %p192, %p193
      %p195 = scmp.ne.s32.totalorder %s184, %s187
      %p196 = scmp.eq.s32.totalorder %s27, 1
      %p197 = por %p195, %p196
      %p198 = scmp.ne.s32.totalorder %s187, %s188
      %p199 = scmp.eq.s32.totalorder %s27, 0
      %p200 = por %p198, %p199
      %p201 = scmp.ne.s32.totalorder %s187, %s188
      %p202 = scmp.eq.s32.totalorder %s28, 1
      %p203 = por %p201, %p202
      %p205 = scmp.ne.s32.totalorder %s188, %s204
      %p206 = scmp.eq.s32.totalorder %s28, 0
      %p207 = por %p205, %p206
      %p208 = scmp.le.s32.totalorder 1, %s22
      %p209 = scmp.lt.s32.totalorder %s22, 3
      %p210 = pnand %p208, %p209
      %p211 = pneg %p210
      // Predicated region
      $region9: #{tpu_custom_call.1} parent=5 // pred_check
        _
      $region10: #{tpu_custom_call.1} parent=5 // pred_check_branch
        %213 = sbr.rel (%p210) target = $region12
      $region11: #{tpu_custom_call.1} parent=5 // pred_region
        %s214 = ssub.s32 %s22, 1
        // Predicated region
        $region13: #{tpu_custom_call.1} parent=11 // pred_check
          %p215 = pneg %p69
        $region14: #{tpu_custom_call.1} parent=11 // pred_check_branch
          %217 = sbr.rel (%p215) target = $region16
        $region15: #{tpu_custom_call.1} parent=11 // pred_region
          %s219 = ssub.s32 128, 128
          %220 = vsyncadd [#allocation6], %s219
          %s222 = sshll.u32 [#allocation5], 4
          %s223 = int_to_ptr.vmem [resolvable:$true] %s222
          %225 = dma.hbm_to_vmem [thread:$0]  %s1, 128, %s223, [#allocation6]
        $region16: #{tpu_custom_call.1} parent=11 // pred_fallthru
          _
        // Predicated region
        $region17: #{tpu_custom_call.1} parent=11 // pred_check
          %p226 = pneg %p90
        $region18: #{tpu_custom_call.1} parent=11 // pred_check_branch
          %228 = sbr.rel (%p226) target = $region20
        $region19: #{tpu_custom_call.1} parent=11 // pred_region
          %s230 = ssub.s32 1024, 1024
          %231 = vsyncadd [#allocation6], %s230
          %s232 = sshll.u32 [#allocation7], 4
          %s233 = int_to_ptr.vmem [resolvable:$true] %s232
          %238 = dma.hbm_to_vmem [thread:$0]  %s2, 1024, %s233, [#allocation6], 128, 128, 8
        $region20: #{tpu_custom_call.1} parent=11 // pred_fallthru
          _
        // Predicated region
        $region21: #{tpu_custom_call.1} parent=11 // pred_check
          %p239 = pneg %p111
        $region22: #{tpu_custom_call.1} parent=11 // pred_check_branch
          %241 = sbr.rel (%p239) target = $region24
        $region23: #{tpu_custom_call.1} parent=11 // pred_region
          %s243 = ssub.s32 1024, 1024
          %244 = vsyncadd [#allocation9], %s243
          %s245 = sshll.u32 [#allocation8], 4
          %s246 = int_to_ptr.vmem [resolvable:$true] %s245
          %251 = dma.hbm_to_vmem [thread:$0]  %s3, 1024, %s246, [#allocation9], 128, 128, 8
        $region24: #{tpu_custom_call.1} parent=11 // pred_fallthru
          _
        // Predicated region
        $region25: #{tpu_custom_call.1} parent=11 // pred_check
          %p252 = pneg %p132
        $region26: #{tpu_custom_call.1} parent=11 // pred_check_branch
          %254 = sbr.rel (%p252) target = $region28
        $region27: #{tpu_custom_call.1} parent=11 // pred_region
          %s256 = ssub.s32 1024, 1024
          %257 = vsyncadd [#allocation9], %s256
          %s258 = sshll.u32 [#allocation10], 4
          %s259 = int_to_ptr.vmem [resolvable:$true] %s258
          %264 = dma.hbm_to_vmem [thread:$0]  %s4, 1024, %s259, [#allocation9], 128, 128, 8
        $region28: #{tpu_custom_call.1} parent=11 // pred_fallthru
          _
        // Predicated region
        $region29: #{tpu_custom_call.1} parent=11 // pred_check
          %p265 = pneg %p153
        $region30: #{tpu_custom_call.1} parent=11 // pred_check_branch
          %267 = sbr.rel (%p265) target = $region32
        $region31: #{tpu_custom_call.1} parent=11 // pred_region
          %s269 = ssub.s32 1024, 1024
          %270 = vsyncadd [#allocation12], %s269
          %s271 = sshll.u32 [#allocation11], 4
          %s272 = int_to_ptr.vmem [resolvable:$true] %s271
          %277 = dma.hbm_to_vmem [thread:$0]  %s5, 1024, %s272, [#allocation12], 128, 128, 8
        $region32: #{tpu_custom_call.1} parent=11 // pred_fallthru
          _
        // Predicated region
        $region33: #{tpu_custom_call.1} parent=11 // pred_check
          %p278 = pneg %p174
        $region34: #{tpu_custom_call.1} parent=11 // pred_check_branch
          %280 = sbr.rel (%p278) target = $region36
        $region35: #{tpu_custom_call.1} parent=11 // pred_region
          _
        $region36: #{tpu_custom_call.1} parent=11 // pred_fallthru
          _
      $region12: #{tpu_custom_call.1} parent=5 // pred_fallthru
        _
      %p281 = scmp.lt.s32.totalorder %s22, 2
      // Predicated region
      $region37: #{tpu_custom_call.1} parent=5 // pred_check
        %p282 = pneg %p281
      $region38: #{tpu_custom_call.1} parent=5 // pred_check_branch
        %284 = sbr.rel (%p282) target = $region40
      $region39: #{tpu_custom_call.1} parent=5 // pred_region
        // Predicated region
        $region41: #{tpu_custom_call.1} parent=39 // pred_check
          %p285 = pneg %p42
        $region42: #{tpu_custom_call.1} parent=39 // pred_check_branch
          %287 = sbr.rel (%p285) target = $region44
        $region43: #{tpu_custom_call.1} parent=39 // pred_region
          %s288 = sand.u32 %s32, 1
          %s289 = scalar_lea.sflag [#allocation3], %s288
          %s290 = sand.u32 %s32, 1
          %s291 = smul.addr %s290, 8
          %s292 = scalar_lea.vmem [#allocation2], %s291
          %s294 = ssub.s32 128, 128
          %295 = vsyncadd %s289, %s294
          %s296 = smul.addr %s22, 128
          %s297 = scalar_lea.hbm %s0, %s296
          %s299 = sshll.u32 %s292, 4
          %s300 = int_to_ptr.vmem [resolvable:$true] %s299
          %302 = dma.hbm_to_vmem [thread:$0]  %s297, 128, %s300, %s289
        $region44: #{tpu_custom_call.1} parent=39 // pred_fallthru
          _
      $region40: #{tpu_custom_call.1} parent=5 // pred_fallthru
        _
      %p303 = scmp.le.s32.totalorder 1, %s22
      %p304 = scmp.lt.s32.totalorder %s22, 3
      %p305 = pnand %p303, %p304
      %p306 = pneg %p305
      // Predicated region
      $region45: #{tpu_custom_call.1} parent=5 // pred_check
        _
      $region46: #{tpu_custom_call.1} parent=5 // pred_check_branch
        %308 = sbr.rel (%p305) target = $region48
      $region47: #{tpu_custom_call.1} parent=5 // pred_region
        %s309 = ssub.s32 %s22, 1
        %s310 = sand.u32 %s35, 1
        %s311 = scalar_lea.sflag [#allocation3], %s310
        %s312 = sand.u32 %s35, 1
        %s313 = smul.addr %s312, 8
        %s314 = scalar_lea.vmem [#allocation2], %s313
        // Predicated region
        $region49: #{tpu_custom_call.1} parent=47 // pred_check
          %p315 = pneg %p48
        $region50: #{tpu_custom_call.1} parent=47 // pred_check_branch
          %317 = sbr.rel (%p315) target = $region52
        $region51: #{tpu_custom_call.1} parent=47 // pred_region
          %318 = dma.done %s311, 128
        $region52: #{tpu_custom_call.1} parent=47 // pred_fallthru
          _
        // Predicated region
        $region53: #{tpu_custom_call.1} parent=47 // pred_check
          %p319 = pneg %p69
        $region54: #{tpu_custom_call.1} parent=47 // pred_check_branch
          %321 = sbr.rel (%p319) target = $region56
        $region55: #{tpu_custom_call.1} parent=47 // pred_region
          %322 = dma.done [#allocation6], 128
        $region56: #{tpu_custom_call.1} parent=47 // pred_fallthru
          _
        // Predicated region
        $region57: #{tpu_custom_call.1} parent=47 // pred_check
          %p323 = pneg %p90
        $region58: #{tpu_custom_call.1} parent=47 // pred_check_branch
          %325 = sbr.rel (%p323) target = $region60
        $region59: #{tpu_custom_call.1} parent=47 // pred_region
          %326 = dma.done [#allocation6], 1024
        $region60: #{tpu_custom_call.1} parent=47 // pred_fallthru
          _
        // Predicated region
        $region61: #{tpu_custom_call.1} parent=47 // pred_check
          %p327 = pneg %p111
        $region62: #{tpu_custom_call.1} parent=47 // pred_check_branch
          %329 = sbr.rel (%p327) target = $region64
        $region63: #{tpu_custom_call.1} parent=47 // pred_region
          %330 = dma.done [#allocation9], 1024
        $region64: #{tpu_custom_call.1} parent=47 // pred_fallthru
          _
        // Predicated region
        $region65: #{tpu_custom_call.1} parent=47 // pred_check
          %p331 = pneg %p132
        $region66: #{tpu_custom_call.1} parent=47 // pred_check_branch
          %333 = sbr.rel (%p331) target = $region68
        $region67: #{tpu_custom_call.1} parent=47 // pred_region
          %334 = dma.done [#allocation9], 1024
        $region68: #{tpu_custom_call.1} parent=47 // pred_fallthru
          _
        // Predicated region
        $region69: #{tpu_custom_call.1} parent=47 // pred_check
          %p335 = pneg %p153
        $region70: #{tpu_custom_call.1} parent=47 // pred_check_branch
          %337 = sbr.rel (%p335) target = $region72
        $region71: #{tpu_custom_call.1} parent=47 // pred_region
          %338 = dma.done [#allocation12], 1024
        $region72: #{tpu_custom_call.1} parent=47 // pred_fallthru
          _
        %s339 = sand.u32 %s35, 1
        %s340 = scalar_lea.sflag [#allocation3], %s339
        %s341 = sand.u32 %s35, 1
        %s342 = smul.addr %s341, 8
        %s343 = scalar_lea.vmem [#allocation2], %s342
        %p344 = pneg %p48
        %p345 = pneg %p45
        %p346 = pneg %p69
        %p347 = pneg %p66
        %p348 = pneg %p90
        %p349 = pneg %p87
        %p350 = pneg %p111
        %p351 = pneg %p108
        %p352 = pneg %p132
        %p353 = pneg %p129
        %p354 = pneg %p153
        %p355 = pneg %p150
        %p356 = pneg %p174
        %p357 = pneg %p171
        %p358 = pneg %p200
        %p359 = pneg %p197
        %s360 = sand.u32 %s187, 1
        %s361 = scalar_lea.sflag [#allocation4], %s360
        %s362 = sand.u32 %s187, 1
        %s363 = smul.addr %s362, 8
        %s364 = scalar_lea.vmem [#allocation13], %s363
        %v365 = vld [vmem:[%s314] sm:$0xff]
        %v366 = vmul.f32 %v365, 5.656854
        %v367 = vld [vmem:[#allocation5] sm:$0xff]
        %v368 = vadd.f32 %v366, %v367
        %v369 = vld [vmem:[#allocation7] sm:$0xff]
        %v370 = vld [vmem:[#allocation7 + $0x8] sm:$0xff]
        %v371 = vld [vmem:[#allocation7 + $0x10] sm:$0xff]
        %v372 = vld [vmem:[#allocation7 + $0x18] sm:$0xff]
        %v373 = vld [vmem:[#allocation8] sm:$0xff]
        %v374 = vld [vmem:[#allocation8 + $0x8] sm:$0xff]
        %v375 = vld [vmem:[#allocation8 + $0x10] sm:$0xff]
        %v376 = vld [vmem:[#allocation8 + $0x18] sm:$0xff]
        %v377 = vld [vmem:[#allocation10] sm:$0xff]
        %v378 = vld [vmem:[#allocation10 + $0x8] sm:$0xff]
        %v379 = vld [vmem:[#allocation10 + $0x10] sm:$0xff]
        %v380 = vld [vmem:[#allocation10 + $0x18] sm:$0xff]
        %v381 = vld [vmem:[#allocation11] sm:$0xff]
        %v382 = vld [vmem:[#allocation11 + $0x8] sm:$0xff]
        %v383 = vld [vmem:[#allocation11 + $0x10] sm:$0xff]
        %v384 = vld [vmem:[#allocation11 + $0x18] sm:$0xff]
        %v385 = vld [vmem:[%s6] sm:$0xff]
        %v386 = vlaneseq
        %v387 = vshrl.u32 %v386, 7
        %v388 = vsub.s32 0, %v387
        %v389 = vrot.slane %v385, %v388
        %vm390 = vcmask 261120
        %v392 = vsel %vm390, %v368, 0
        %394 = vmatprep.subr.mxu0 0.0
        %395 = vmatpush1.msra.mxu0 %v369
        %396 = vmatprep.subr.mxu0 0.0
        %397 = vmatpush1.msra.mxu0 %v370
        %398 = vmatprep.subr.mxu0 0.0
        %399 = vmatpush1.msra.mxu0 %v371
        %400 = vmatprep.subr.mxu0 0.0
        %401 = vmatpush1.msra.mxu0 %v372
        %402 = vmatprep.subr.mxu0 0.0
        %403 = vmatpush1.msra.mxu0 0.0
        %404 = vmatprep.subr.mxu0 0.0
        %405 = vmatpush1.msra.mxu0 0.0
        %406 = vmatprep.subr.mxu0 0.0
        %407 = vmatpush1.msra.mxu0 0.0
        %408 = vmatprep.subr.mxu0 0.0
        %409 = vmatpush1.msra.mxu0 0.0
        %410 = vmatprep.subr.mxu0 0.0
        %411 = vmatpush1.msra.mxu0 0.0
        %412 = vmatprep.subr.mxu0 0.0
        %413 = vmatpush1.msra.mxu0 0.0
        %414 = vmatprep.subr.mxu0 0.0
        %415 = vmatpush1.msra.mxu0 0.0
        %416 = vmatprep.subr.mxu0 0.0
        %417 = vmatpush1.msra.mxu0 0.0
        %418 = vmatprep.subr.mxu0 0.0
        %419 = vmatpush1.msra.mxu0 0.0
        %420 = vmatprep.subr.mxu0 0.0
        %421 = vmatpush1.msra.mxu0 0.0
        %422 = vmatprep.subr.mxu0 0.0
        %423 = vmatpush1.msra.mxu0 0.0
        %424 = vmatprep.subr.mxu0 0.0
        %425 = vmatpush1.msra.mxu0 0.0
        %426 = vmatprep.subr.mxu0 0.0
        %427 = vmatpush1.msra.mxu0 0.0
        %428 = vmatprep.subr.mxu0 0.0
        %429 = vmatpush1.msra.mxu0 0.0
        %430 = vmatprep.subr.mxu0 0.0
        %431 = vmatpush1.msra.mxu0 0.0
        %432 = vmatprep.subr.mxu0 0.0
        %433 = vmatpush1.msra.mxu0 0.0
        %434 = vmatprep.subr.mxu0 0.0
        %435 = vmatpush1.msra.mxu0 0.0
        %436 = vmatprep.subr.mxu0 0.0
        %437 = vmatpush1.msra.mxu0 0.0
        %438 = vmatprep.subr.mxu0 0.0
        %439 = vmatpush1.msra.mxu0 0.0
        %440 = vmatprep.subr.mxu0 0.0
        %441 = vmatpush1.msra.mxu0 0.0
        %442 = vmatprep.subr.mxu0 0.0
        %443 = vmatpush1.msra.mxu0 0.0
        %444 = vmatprep.subr.mxu0 0.0
        %445 = vmatpush1.msra.mxu0 0.0
        %446 = vmatprep.subr.mxu0 0.0
        %447 = vmatpush1.msra.mxu0 0.0
        %448 = vmatprep.subr.mxu0 0.0
        %449 = vmatpush1.msra.mxu0 0.0
        %450 = vmatprep.subr.mxu0 0.0
        %451 = vmatpush1.msra.mxu0 0.0
        %452 = vmatprep.subr.mxu0 0.0
        %453 = vmatpush1.msra.mxu0 0.0
        %454 = vmatprep.subr.mxu0 0.0
        %455 = vmatpush1.msra.mxu0 0.0
        %456 = vmatprep.subr.mxu0 0.0
        %457 = vmatpush1.msra.mxu0 0.0
        %458 = vmatprep.mubr.f32.mxu0 0.0
        %459 = vmatmul.mubr.f32.gmra.mrb[0].mxu0 %v392
        %v460 = vpop.f32.mrb[0].mxu0
        %v461 = vadd.f32 %v389, %v460
        %v462 = vpop.f32.mrb[0].mxu0
        %463 = vdwg.mxu0
        %465 = vrot.lane.b32.xlu0 %v461, 120
        %v466 = vpop.permute.xlu0 %465
        %467 = vrot.lane.b32.xlu0 %v461, 112
        %v468 = vpop.permute.xlu0 %467
        %469 = vrot.lane.b32.xlu0 %v461, 104
        %v470 = vpop.permute.xlu0 %469
        %471 = vrot.lane.b32.xlu0 %v461, 96
        %v472 = vpop.permute.xlu0 %471
        %vm473 = vcmask 64512
        %v474 = vsel %vm473, %v461, 0
        %v476 = vsel %vm473, %v472, 0
        %478 = vmatprep.subr.mxu0 0.0
        %479 = vmatpush1.xpose.msra.mxu0 %v476
        %480 = vmatprep.subr.mxu0 0.0
        %481 = vmatpush1.xpose.msra.mxu0 0.0
        %482 = vmatprep.subr.mxu0 0.0
        %483 = vmatpush1.xpose.msra.mxu0 0.0
        %484 = vmatprep.subr.mxu0 0.0
        %485 = vmatpush1.xpose.msra.mxu0 0.0
        %486 = vmatprep.subr.mxu0 0.0
        %487 = vmatpush1.xpose.msra.mxu0 0.0
        %488 = vmatprep.subr.mxu0 0.0
        %489 = vmatpush1.xpose.msra.mxu0 0.0
        %490 = vmatprep.subr.mxu0 0.0
        %491 = vmatpush1.xpose.msra.mxu0 0.0
        %492 = vmatprep.subr.mxu0 0.0
        %493 = vmatpush1.xpose.msra.mxu0 0.0
        %494 = vmatprep.subr.mxu0 0.0
        %495 = vmatpush1.xpose.msra.mxu0 0.0
        %496 = vmatprep.subr.mxu0 0.0
        %497 = vmatpush1.xpose.msra.mxu0 0.0
        %498 = vmatprep.subr.mxu0 0.0
        %499 = vmatpush1.xpose.msra.mxu0 0.0
        %500 = vmatprep.subr.mxu0 0.0
        %501 = vmatpush1.xpose.msra.mxu0 0.0
        %502 = vmatprep.subr.mxu0 0.0
        %503 = vmatpush1.xpose.msra.mxu0 0.0
        %504 = vmatprep.subr.mxu0 0.0
        %505 = vmatpush1.xpose.msra.mxu0 0.0
        %506 = vmatprep.subr.mxu0 0.0
        %507 = vmatpush1.xpose.msra.mxu0 0.0
        %508 = vmatprep.subr.mxu0 0.0
        %509 = vmatpush1.xpose.msra.mxu0 0.0
        %510 = vmatprep.subr.mxu0 0.0
        %511 = vmatpush1.xpose.msra.mxu0 0.0
        %512 = vmatprep.subr.mxu0 0.0
        %513 = vmatpush1.xpose.msra.mxu0 0.0
        %514 = vmatprep.subr.mxu0 0.0
        %515 = vmatpush1.xpose.msra.mxu0 0.0
        %516 = vmatprep.subr.mxu0 0.0
        %517 = vmatpush1.xpose.msra.mxu0 0.0
        %518 = vmatprep.subr.mxu0 0.0
        %519 = vmatpush1.xpose.msra.mxu0 0.0
        %520 = vmatprep.subr.mxu0 0.0
        %521 = vmatpush1.xpose.msra.mxu0 0.0
        %522 = vmatprep.subr.mxu0 0.0
        %523 = vmatpush1.xpose.msra.mxu0 0.0
        %524 = vmatprep.subr.mxu0 0.0
        %525 = vmatpush1.xpose.msra.mxu0 0.0
        %526 = vmatprep.subr.mxu0 0.0
        %527 = vmatpush1.xpose.msra.mxu0 0.0
        %528 = vmatprep.subr.mxu0 0.0
        %529 = vmatpush1.xpose.msra.mxu0 0.0
        %530 = vmatprep.subr.mxu0 0.0
        %531 = vmatpush1.xpose.msra.mxu0 0.0
        %532 = vmatprep.subr.mxu0 0.0
        %533 = vmatpush1.xpose.msra.mxu0 0.0
        %534 = vmatprep.subr.mxu0 0.0
        %535 = vmatpush1.xpose.msra.mxu0 0.0
        %536 = vmatprep.subr.mxu0 0.0
        %537 = vmatpush1.xpose.msra.mxu0 0.0
        %538 = vmatprep.subr.mxu0 0.0
        %539 = vmatpush1.xpose.msra.mxu0 0.0
        %540 = vmatprep.subr.mxu0 0.0
        %541 = vmatpush1.xpose.msra.mxu0 0.0
        %542 = vmatprep.mubr.f32.mxu0 0.0
        %543 = vmatmul.mubr.f32.gmra.mrb[0].mxu0 %v474
        %v544 = vpop.f32.mrb[0].mxu0
        %v545 = vadd.f32 0.0, %v544
        %v546 = vpop.f32.mrb[0].mxu0
        %547 = vdwg.mxu0
        %548 = vrot.lane.b32.xlu0 %v466, 96
        %v549 = vpop.permute.xlu0 %548
        %v550 = vsel %vm473, %v466, 0
        %v552 = vsel %vm473, %v549, 0
        %554 = vmatprep.subr.mxu0 0.0
        %555 = vmatpush1.xpose.msra.mxu0 %v552
        %556 = vmatprep.subr.mxu0 0.0
        %557 = vmatpush1.xpose.msra.mxu0 0.0
        %558 = vmatprep.subr.mxu0 0.0
        %559 = vmatpush1.xpose.msra.mxu0 0.0
        %560 = vmatprep.subr.mxu0 0.0
        %561 = vmatpush1.xpose.msra.mxu0 0.0
        %562 = vmatprep.subr.mxu0 0.0
        %563 = vmatpush1.xpose.msra.mxu0 0.0
        %564 = vmatprep.subr.mxu0 0.0
        %565 = vmatpush1.xpose.msra.mxu0 0.0
        %566 = vmatprep.subr.mxu0 0.0
        %567 = vmatpush1.xpose.msra.mxu0 0.0
        %568 = vmatprep.subr.mxu0 0.0
        %569 = vmatpush1.xpose.msra.mxu0 0.0
        %570 = vmatprep.subr.mxu0 0.0
        %571 = vmatpush1.xpose.msra.mxu0 0.0
        %572 = vmatprep.subr.mxu0 0.0
        %573 = vmatpush1.xpose.msra.mxu0 0.0
        %574 = vmatprep.subr.mxu0 0.0
        %575 = vmatpush1.xpose.msra.mxu0 0.0
        %576 = vmatprep.subr.mxu0 0.0
        %577 = vmatpush1.xpose.msra.mxu0 0.0
        %578 = vmatprep.subr.mxu0 0.0
        %579 = vmatpush1.xpose.msra.mxu0 0.0
        %580 = vmatprep.subr.mxu0 0.0
        %581 = vmatpush1.xpose.msra.mxu0 0.0
        %582 = vmatprep.subr.mxu0 0.0
        %583 = vmatpush1.xpose.msra.mxu0 0.0
        %584 = vmatprep.subr.mxu0 0.0
        %585 = vmatpush1.xpose.msra.mxu0 0.0
        %586 = vmatprep.subr.mxu0 0.0
        %587 = vmatpush1.xpose.msra.mxu0 0.0
        %588 = vmatprep.subr.mxu0 0.0
        %589 = vmatpush1.xpose.msra.mxu0 0.0
        %590 = vmatprep.subr.mxu0 0.0
        %591 = vmatpush1.xpose.msra.mxu0 0.0
        %592 = vmatprep.subr.mxu0 0.0
        %593 = vmatpush1.xpose.msra.mxu0 0.0
        %594 = vmatprep.subr.mxu0 0.0
        %595 = vmatpush1.xpose.msra.mxu0 0.0
        %596 = vmatprep.subr.mxu0 0.0
        %597 = vmatpush1.xpose.msra.mxu0 0.0
        %598 = vmatprep.subr.mxu0 0.0
        %599 = vmatpush1.xpose.msra.mxu0 0.0
        %600 = vmatprep.subr.mxu0 0.0
        %601 = vmatpush1.xpose.msra.mxu0 0.0
        %602 = vmatprep.subr.mxu0 0.0
        %603 = vmatpush1.xpose.msra.mxu0 0.0
        %604 = vmatprep.subr.mxu0 0.0
        %605 = vmatpush1.xpose.msra.mxu0 0.0
        %606 = vmatprep.subr.mxu0 0.0
        %607 = vmatpush1.xpose.msra.mxu0 0.0
        %608 = vmatprep.subr.mxu0 0.0
        %609 = vmatpush1.xpose.msra.mxu0 0.0
        %610 = vmatprep.subr.mxu0 0.0
        %611 = vmatpush1.xpose.msra.mxu0 0.0
        %612 = vmatprep.subr.mxu0 0.0
        %613 = vmatpush1.xpose.msra.mxu0 0.0
        %614 = vmatprep.subr.mxu0 0.0
        %615 = vmatpush1.xpose.msra.mxu0 0.0
        %616 = vmatprep.subr.mxu0 0.0
        %617 = vmatpush1.xpose.msra.mxu0 0.0
        %618 = vmatprep.mubr.f32.mxu0 0.0
        %619 = vmatmul.mubr.f32.gmra.mrb[0].mxu0 %v550
        %v620 = vpop.f32.mrb[0].mxu0
        %v621 = vadd.f32 0.0, %v620
        %v622 = vpop.f32.mrb[0].mxu0
        %623 = vdwg.mxu0
        %624 = vrot.lane.b32.xlu0 %v468, 96
        %v625 = vpop.permute.xlu0 %624
        %v626 = vsel %vm473, %v468, 0
        %v628 = vsel %vm473, %v625, 0
        %630 = vmatprep.subr.mxu0 0.0
        %631 = vmatpush1.xpose.msra.mxu0 %v628
        %632 = vmatprep.subr.mxu0 0.0
        %633 = vmatpush1.xpose.msra.mxu0 0.0
        %634 = vmatprep.subr.mxu0 0.0
        %635 = vmatpush1.xpose.msra.mxu0 0.0
        %636 = vmatprep.subr.mxu0 0.0
        %637 = vmatpush1.xpose.msra.mxu0 0.0
        %638 = vmatprep.subr.mxu0 0.0
        %639 = vmatpush1.xpose.msra.mxu0 0.0
        %640 = vmatprep.subr.mxu0 0.0
        %641 = vmatpush1.xpose.msra.mxu0 0.0
        %642 = vmatprep.subr.mxu0 0.0
        %643 = vmatpush1.xpose.msra.mxu0 0.0
        %644 = vmatprep.subr.mxu0 0.0
        %645 = vmatpush1.xpose.msra.mxu0 0.0
        %646 = vmatprep.subr.mxu0 0.0
        %647 = vmatpush1.xpose.msra.mxu0 0.0
        %648 = vmatprep.subr.mxu0 0.0
        %649 = vmatpush1.xpose.msra.mxu0 0.0
        %650 = vmatprep.subr.mxu0 0.0
        %651 = vmatpush1.xpose.msra.mxu0 0.0
        %652 = vmatprep.subr.mxu0 0.0
        %653 = vmatpush1.xpose.msra.mxu0 0.0
        %654 = vmatprep.subr.mxu0 0.0
        %655 = vmatpush1.xpose.msra.mxu0 0.0
        %656 = vmatprep.subr.mxu0 0.0
        %657 = vmatpush1.xpose.msra.mxu0 0.0
        %658 = vmatprep.subr.mxu0 0.0
        %659 = vmatpush1.xpose.msra.mxu0 0.0
        %660 = vmatprep.subr.mxu0 0.0
        %661 = vmatpush1.xpose.msra.mxu0 0.0
        %662 = vmatprep.subr.mxu0 0.0
        %663 = vmatpush1.xpose.msra.mxu0 0.0
        %664 = vmatprep.subr.mxu0 0.0
        %665 = vmatpush1.xpose.msra.mxu0 0.0
        %666 = vmatprep.subr.mxu0 0.0
        %667 = vmatpush1.xpose.msra.mxu0 0.0
        %668 = vmatprep.subr.mxu0 0.0
        %669 = vmatpush1.xpose.msra.mxu0 0.0
        %670 = vmatprep.subr.mxu0 0.0
        %671 = vmatpush1.xpose.msra.mxu0 0.0
        %672 = vmatprep.subr.mxu0 0.0
        %673 = vmatpush1.xpose.msra.mxu0 0.0
        %674 = vmatprep.subr.mxu0 0.0
        %675 = vmatpush1.xpose.msra.mxu0 0.0
        %676 = vmatprep.subr.mxu0 0.0
        %677 = vmatpush1.xpose.msra.mxu0 0.0
        %678 = vmatprep.subr.mxu0 0.0
        %679 = vmatpush1.xpose.msra.mxu0 0.0
        %680 = vmatprep.subr.mxu0 0.0
        %681 = vmatpush1.xpose.msra.mxu0 0.0
        %682 = vmatprep.subr.mxu0 0.0
        %683 = vmatpush1.xpose.msra.mxu0 0.0
        %684 = vmatprep.subr.mxu0 0.0
        %685 = vmatpush1.xpose.msra.mxu0 0.0
        %686 = vmatprep.subr.mxu0 0.0
        %687 = vmatpush1.xpose.msra.mxu0 0.0
        %688 = vmatprep.subr.mxu0 0.0
        %689 = vmatpush1.xpose.msra.mxu0 0.0
        %690 = vmatprep.subr.mxu0 0.0
        %691 = vmatpush1.xpose.msra.mxu0 0.0
        %692 = vmatprep.subr.mxu0 0.0
        %693 = vmatpush1.xpose.msra.mxu0 0.0
        %694 = vmatprep.mubr.f32.mxu0 0.0
        %695 = vmatmul.mubr.f32.gmra.mrb[0].mxu0 %v626
        %v696 = vpop.f32.mrb[0].mxu0
        %v697 = vadd.f32 0.0, %v696
        %v698 = vpop.f32.mrb[0].mxu0
        %699 = vdwg.mxu0
        %700 = vrot.lane.b32.xlu0 %v470, 96
        %v701 = vpop.permute.xlu0 %700
        %v702 = vsel %vm473, %v470, 0
        %v704 = vsel %vm473, %v701, 0
        %706 = vmatprep.subr.mxu0 0.0
        %707 = vmatpush1.xpose.msra.mxu0 %v704
        %708 = vmatprep.subr.mxu0 0.0
        %709 = vmatpush1.xpose.msra.mxu0 0.0
        %710 = vmatprep.subr.mxu0 0.0
        %711 = vmatpush1.xpose.msra.mxu0 0.0
        %712 = vmatprep.subr.mxu0 0.0
        %713 = vmatpush1.xpose.msra.mxu0 0.0
        %714 = vmatprep.subr.mxu0 0.0
        %715 = vmatpush1.xpose.msra.mxu0 0.0
        %716 = vmatprep.subr.mxu0 0.0
        %717 = vmatpush1.xpose.msra.mxu0 0.0
        %718 = vmatprep.subr.mxu0 0.0
        %719 = vmatpush1.xpose.msra.mxu0 0.0
        %720 = vmatprep.subr.mxu0 0.0
        %721 = vmatpush1.xpose.msra.mxu0 0.0
        %722 = vmatprep.subr.mxu0 0.0
        %723 = vmatpush1.xpose.msra.mxu0 0.0
        %724 = vmatprep.subr.mxu0 0.0
        %725 = vmatpush1.xpose.msra.mxu0 0.0
        %726 = vmatprep.subr.mxu0 0.0
        %727 = vmatpush1.xpose.msra.mxu0 0.0
        %728 = vmatprep.subr.mxu0 0.0
        %729 = vmatpush1.xpose.msra.mxu0 0.0
        %730 = vmatprep.subr.mxu0 0.0
        %731 = vmatpush1.xpose.msra.mxu0 0.0
        %732 = vmatprep.subr.mxu0 0.0
        %733 = vmatpush1.xpose.msra.mxu0 0.0
        %734 = vmatprep.subr.mxu0 0.0
        %735 = vmatpush1.xpose.msra.mxu0 0.0
        %736 = vmatprep.subr.mxu0 0.0
        %737 = vmatpush1.xpose.msra.mxu0 0.0
        %738 = vmatprep.subr.mxu0 0.0
        %739 = vmatpush1.xpose.msra.mxu0 0.0
        %740 = vmatprep.subr.mxu0 0.0
        %741 = vmatpush1.xpose.msra.mxu0 0.0
        %742 = vmatprep.subr.mxu0 0.0
        %743 = vmatpush1.xpose.msra.mxu0 0.0
        %744 = vmatprep.subr.mxu0 0.0
        %745 = vmatpush1.xpose.msra.mxu0 0.0
        %746 = vmatprep.subr.mxu0 0.0
        %747 = vmatpush1.xpose.msra.mxu0 0.0
        %748 = vmatprep.subr.mxu0 0.0
        %749 = vmatpush1.xpose.msra.mxu0 0.0
        %750 = vmatprep.subr.mxu0 0.0
        %751 = vmatpush1.xpose.msra.mxu0 0.0
        %752 = vmatprep.subr.mxu0 0.0
        %753 = vmatpush1.xpose.msra.mxu0 0.0
        %754 = vmatprep.subr.mxu0 0.0
        %755 = vmatpush1.xpose.msra.mxu0 0.0
        %756 = vmatprep.subr.mxu0 0.0
        %757 = vmatpush1.xpose.msra.mxu0 0.0
        %758 = vmatprep.subr.mxu0 0.0
        %759 = vmatpush1.xpose.msra.mxu0 0.0
        %760 = vmatprep.subr.mxu0 0.0
        %761 = vmatpush1.xpose.msra.mxu0 0.0
        %762 = vmatprep.subr.mxu0 0.0
        %763 = vmatpush1.xpose.msra.mxu0 0.0
        %764 = vmatprep.subr.mxu0 0.0
        %765 = vmatpush1.xpose.msra.mxu0 0.0
        %766 = vmatprep.subr.mxu0 0.0
        %767 = vmatpush1.xpose.msra.mxu0 0.0
        %768 = vmatprep.subr.mxu0 0.0
        %769 = vmatpush1.xpose.msra.mxu0 0.0
        %770 = vmatprep.mubr.f32.mxu0 0.0
        %771 = vmatmul.mubr.f32.gmra.mrb[0].mxu0 %v702
        %v772 = vpop.f32.mrb[0].mxu0
        %v773 = vadd.f32 0.0, %v772
        %v774 = vpop.f32.mrb[0].mxu0
        %775 = vdwg.mxu0
        %v776 = vsel %vm473, %v545, -inf
        %777 = vmax.xlane.f32.xlu0 %v776
        %v778 = vpop.xlane.xlu0 %777
        %v779 = vsel %vm473, %v621, -inf
        %780 = vmax.xlane.f32.xlu0 %v779
        %v781 = vpop.xlane.xlu0 %780
        %v782 = vsel %vm473, %v697, -inf
        %783 = vmax.xlane.f32.xlu0 %v782
        %v784 = vpop.xlane.xlu0 %783
        %v785 = vsel %vm473, %v773, -inf
        %786 = vmax.xlane.f32.xlu0 %v785
        %v787 = vpop.xlane.xlu0 %786
        %v788 = vsub.f32 %v545, %v778
        %v789 = vsub.f32 %v621, %v781
        %v790 = vsub.f32 %v697, %v784
        %v791 = vsub.f32 %v773, %v787
        %v792 = vmul.f32 %v788, 1.442695
        %v793 = vpow.pop %v792
        %v794 = vmul.f32 %v789, 1.442695
        %v795 = vpow.pop %v794
        %v796 = vmul.f32 %v790, 1.442695
        %v797 = vpow.pop %v796
        %v798 = vmul.f32 %v791, 1.442695
        %v799 = vpow.pop %v798
        %v800 = vsel %vm473, %v793, 0.0
        %801 = vadd.xlane.f32.xlu0 %v800
        %v802 = vpop.xlane.xlu0 %801
        %v803 = vsel %vm473, %v795, 0.0
        %804 = vadd.xlane.f32.xlu0 %v803
        %v805 = vpop.xlane.xlu0 %804
        %v806 = vsel %vm473, %v797, 0.0
        %807 = vadd.xlane.f32.xlu0 %v806
        %v808 = vpop.xlane.xlu0 %807
        %v809 = vsel %vm473, %v799, 0.0
        %810 = vadd.xlane.f32.xlu0 %v809
        %v811 = vpop.xlane.xlu0 %810
        %v812 = vrcp.pop %v802
        %v813 = vmul.f32 %v793, %v812
        %v814 = vrcp.pop %v805
        %v815 = vmul.f32 %v795, %v814
        %v816 = vrcp.pop %v808
        %v817 = vmul.f32 %v797, %v816
        %v818 = vrcp.pop %v811
        %v819 = vmul.f32 %v799, %v818
        %820 = vrot.lane.b32.xlu0 %v461, 64
        %v821 = vpop.permute.xlu0 %820
        %v824 = vsel %vm473, %v813, 0
        %826 = vmatprep.subr.mxu0 0.0
        %827 = vmatpush1.msra.mxu0 %v821
        %828 = vmatprep.subr.mxu0 0.0
        %829 = vmatpush1.msra.mxu0 0.0
        %830 = vmatprep.subr.mxu0 0.0
        %831 = vmatpush1.msra.mxu0 0.0
        %832 = vmatprep.subr.mxu0 0.0
        %833 = vmatpush1.msra.mxu0 0.0
        %834 = vmatprep.subr.mxu0 0.0
        %835 = vmatpush1.msra.mxu0 0.0
        %836 = vmatprep.subr.mxu0 0.0
        %837 = vmatpush1.msra.mxu0 0.0
        %838 = vmatprep.subr.mxu0 0.0
        %839 = vmatpush1.msra.mxu0 0.0
        %840 = vmatprep.subr.mxu0 0.0
        %841 = vmatpush1.msra.mxu0 0.0
        %842 = vmatprep.subr.mxu0 0.0
        %843 = vmatpush1.msra.mxu0 0.0
        %844 = vmatprep.subr.mxu0 0.0
        %845 = vmatpush1.msra.mxu0 0.0
        %846 = vmatprep.subr.mxu0 0.0
        %847 = vmatpush1.msra.mxu0 0.0
        %848 = vmatprep.subr.mxu0 0.0
        %849 = vmatpush1.msra.mxu0 0.0
        %850 = vmatprep.subr.mxu0 0.0
        %851 = vmatpush1.msra.mxu0 0.0
        %852 = vmatprep.subr.mxu0 0.0
        %853 = vmatpush1.msra.mxu0 0.0
        %854 = vmatprep.subr.mxu0 0.0
        %855 = vmatpush1.msra.mxu0 0.0
        %856 = vmatprep.subr.mxu0 0.0
        %857 = vmatpush1.msra.mxu0 0.0
        %858 = vmatprep.subr.mxu0 0.0
        %859 = vmatpush1.msra.mxu0 0.0
        %860 = vmatprep.subr.mxu0 0.0
        %861 = vmatpush1.msra.mxu0 0.0
        %862 = vmatprep.subr.mxu0 0.0
        %863 = vmatpush1.msra.mxu0 0.0
        %864 = vmatprep.subr.mxu0 0.0
        %865 = vmatpush1.msra.mxu0 0.0
        %866 = vmatprep.subr.mxu0 0.0
        %867 = vmatpush1.msra.mxu0 0.0
        %868 = vmatprep.subr.mxu0 0.0
        %869 = vmatpush1.msra.mxu0 0.0
        %870 = vmatprep.subr.mxu0 0.0
        %871 = vmatpush1.msra.mxu0 0.0
        %872 = vmatprep.subr.mxu0 0.0
        %873 = vmatpush1.msra.mxu0 0.0
        %874 = vmatprep.subr.mxu0 0.0
        %875 = vmatpush1.msra.mxu0 0.0
        %876 = vmatprep.subr.mxu0 0.0
        %877 = vmatpush1.msra.mxu0 0.0
        %878 = vmatprep.subr.mxu0 0.0
        %879 = vmatpush1.msra.mxu0 0.0
        %880 = vmatprep.subr.mxu0 0.0
        %881 = vmatpush1.msra.mxu0 0.0
        %882 = vmatprep.subr.mxu0 0.0
        %883 = vmatpush1.msra.mxu0 0.0
        %884 = vmatprep.subr.mxu0 0.0
        %885 = vmatpush1.msra.mxu0 0.0
        %886 = vmatprep.subr.mxu0 0.0
        %887 = vmatpush1.msra.mxu0 0.0
        %888 = vmatprep.subr.mxu0 0.0
        %889 = vmatpush1.msra.mxu0 0.0
        %890 = vmatprep.mubr.f32.mxu0 0.0
        %891 = vmatmul.mubr.f32.gmra.mrb[0].mxu0 %v824
        %v892 = vpop.f32.mrb[0].mxu0
        %v893 = vadd.f32 0.0, %v892
        %v894 = vpop.f32.mrb[0].mxu0
        %895 = vdwg.mxu0
        %896 = vrot.lane.b32.xlu0 %v466, 64
        %v897 = vpop.permute.xlu0 %896
        %v900 = vsel %vm473, %v815, 0
        %902 = vmatprep.subr.mxu0 0.0
        %903 = vmatpush1.msra.mxu0 %v897
        %904 = vmatprep.subr.mxu0 0.0
        %905 = vmatpush1.msra.mxu0 0.0
        %906 = vmatprep.subr.mxu0 0.0
        %907 = vmatpush1.msra.mxu0 0.0
        %908 = vmatprep.subr.mxu0 0.0
        %909 = vmatpush1.msra.mxu0 0.0
        %910 = vmatprep.subr.mxu0 0.0
        %911 = vmatpush1.msra.mxu0 0.0
        %912 = vmatprep.subr.mxu0 0.0
        %913 = vmatpush1.msra.mxu0 0.0
        %914 = vmatprep.subr.mxu0 0.0
        %915 = vmatpush1.msra.mxu0 0.0
        %916 = vmatprep.subr.mxu0 0.0
        %917 = vmatpush1.msra.mxu0 0.0
        %918 = vmatprep.subr.mxu0 0.0
        %919 = vmatpush1.msra.mxu0 0.0
        %920 = vmatprep.subr.mxu0 0.0
        %921 = vmatpush1.msra.mxu0 0.0
        %922 = vmatprep.subr.mxu0 0.0
        %923 = vmatpush1.msra.mxu0 0.0
        %924 = vmatprep.subr.mxu0 0.0
        %925 = vmatpush1.msra.mxu0 0.0
        %926 = vmatprep.subr.mxu0 0.0
        %927 = vmatpush1.msra.mxu0 0.0
        %928 = vmatprep.subr.mxu0 0.0
        %929 = vmatpush1.msra.mxu0 0.0
        %930 = vmatprep.subr.mxu0 0.0
        %931 = vmatpush1.msra.mxu0 0.0
        %932 = vmatprep.subr.mxu0 0.0
        %933 = vmatpush1.msra.mxu0 0.0
        %934 = vmatprep.subr.mxu0 0.0
        %935 = vmatpush1.msra.mxu0 0.0
        %936 = vmatprep.subr.mxu0 0.0
        %937 = vmatpush1.msra.mxu0 0.0
        %938 = vmatprep.subr.mxu0 0.0
        %939 = vmatpush1.msra.mxu0 0.0
        %940 = vmatprep.subr.mxu0 0.0
        %941 = vmatpush1.msra.mxu0 0.0
        %942 = vmatprep.subr.mxu0 0.0
        %943 = vmatpush1.msra.mxu0 0.0
        %944 = vmatprep.subr.mxu0 0.0
        %945 = vmatpush1.msra.mxu0 0.0
        %946 = vmatprep.subr.mxu0 0.0
        %947 = vmatpush1.msra.mxu0 0.0
        %948 = vmatprep.subr.mxu0 0.0
        %949 = vmatpush1.msra.mxu0 0.0
        %950 = vmatprep.subr.mxu0 0.0
        %951 = vmatpush1.msra.mxu0 0.0
        %952 = vmatprep.subr.mxu0 0.0
        %953 = vmatpush1.msra.mxu0 0.0
        %954 = vmatprep.subr.mxu0 0.0
        %955 = vmatpush1.msra.mxu0 0.0
        %956 = vmatprep.subr.mxu0 0.0
        %957 = vmatpush1.msra.mxu0 0.0
        %958 = vmatprep.subr.mxu0 0.0
        %959 = vmatpush1.msra.mxu0 0.0
        %960 = vmatprep.subr.mxu0 0.0
        %961 = vmatpush1.msra.mxu0 0.0
        %962 = vmatprep.subr.mxu0 0.0
        %963 = vmatpush1.msra.mxu0 0.0
        %964 = vmatprep.subr.mxu0 0.0
        %965 = vmatpush1.msra.mxu0 0.0
        %966 = vmatprep.mubr.f32.mxu0 0.0
        %967 = vmatmul.mubr.f32.gmra.mrb[0].mxu0 %v900
        %v968 = vpop.f32.mrb[0].mxu0
        %v969 = vadd.f32 0.0, %v968
        %v970 = vpop.f32.mrb[0].mxu0
        %971 = vdwg.mxu0
        %972 = vrot.lane.b32.xlu0 %v468, 64
        %v973 = vpop.permute.xlu0 %972
        %v976 = vsel %vm473, %v817, 0
        %978 = vmatprep.subr.mxu0 0.0
        %979 = vmatpush1.msra.mxu0 %v973
        %980 = vmatprep.subr.mxu0 0.0
        %981 = vmatpush1.msra.mxu0 0.0
        %982 = vmatprep.subr.mxu0 0.0
        %983 = vmatpush1.msra.mxu0 0.0
        %984 = vmatprep.subr.mxu0 0.0
        %985 = vmatpush1.msra.mxu0 0.0
        %986 = vmatprep.subr.mxu0 0.0
        %987 = vmatpush1.msra.mxu0 0.0
        %988 = vmatprep.subr.mxu0 0.0
        %989 = vmatpush1.msra.mxu0 0.0
        %990 = vmatprep.subr.mxu0 0.0
        %991 = vmatpush1.msra.mxu0 0.0
        %992 = vmatprep.subr.mxu0 0.0
        %993 = vmatpush1.msra.mxu0 0.0
        %994 = vmatprep.subr.mxu0 0.0
        %995 = vmatpush1.msra.mxu0 0.0
        %996 = vmatprep.subr.mxu0 0.0
        %997 = vmatpush1.msra.mxu0 0.0
        %998 = vmatprep.subr.mxu0 0.0
        %999 = vmatpush1.msra.mxu0 0.0
        %1000 = vmatprep.subr.mxu0 0.0
        %1001 = vmatpush1.msra.mxu0 0.0
        %1002 = vmatprep.subr.mxu0 0.0
        %1003 = vmatpush1.msra.mxu0 0.0
        %1004 = vmatprep.subr.mxu0 0.0
        %1005 = vmatpush1.msra.mxu0 0.0
        %1006 = vmatprep.subr.mxu0 0.0
        %1007 = vmatpush1.msra.mxu0 0.0
        %1008 = vmatprep.subr.mxu0 0.0
        %1009 = vmatpush1.msra.mxu0 0.0
        %1010 = vmatprep.subr.mxu0 0.0
        %1011 = vmatpush1.msra.mxu0 0.0
        %1012 = vmatprep.subr.mxu0 0.0
        %1013 = vmatpush1.msra.mxu0 0.0
        %1014 = vmatprep.subr.mxu0 0.0
        %1015 = vmatpush1.msra.mxu0 0.0
        %1016 = vmatprep.subr.mxu0 0.0
        %1017 = vmatpush1.msra.mxu0 0.0
        %1018 = vmatprep.subr.mxu0 0.0
        %1019 = vmatpush1.msra.mxu0 0.0
        %1020 = vmatprep.subr.mxu0 0.0
        %1021 = vmatpush1.msra.mxu0 0.0
        %1022 = vmatprep.subr.mxu0 0.0
        %1023 = vmatpush1.msra.mxu0 0.0
        %1024 = vmatprep.subr.mxu0 0.0
        %1025 = vmatpush1.msra.mxu0 0.0
        %1026 = vmatprep.subr.mxu0 0.0
        %1027 = vmatpush1.msra.mxu0 0.0
        %1028 = vmatprep.subr.mxu0 0.0
        %1029 = vmatpush1.msra.mxu0 0.0
        %1030 = vmatprep.subr.mxu0 0.0
        %1031 = vmatpush1.msra.mxu0 0.0
        %1032 = vmatprep.subr.mxu0 0.0
        %1033 = vmatpush1.msra.mxu0 0.0
        %1034 = vmatprep.subr.mxu0 0.0
        %1035 = vmatpush1.msra.mxu0 0.0
        %1036 = vmatprep.subr.mxu0 0.0
        %1037 = vmatpush1.msra.mxu0 0.0
        %1038 = vmatprep.subr.mxu0 0.0
        %1039 = vmatpush1.msra.mxu0 0.0
        %1040 = vmatprep.subr.mxu0 0.0
        %1041 = vmatpush1.msra.mxu0 0.0
        %1042 = vmatprep.mubr.f32.mxu0 0.0
        %1043 = vmatmul.mubr.f32.gmra.mrb[0].mxu0 %v976
        %v1044 = vpop.f32.mrb[0].mxu0
        %v1045 = vadd.f32 0.0, %v1044
        %v1046 = vpop.f32.mrb[0].mxu0
        %1047 = vdwg.mxu0
        %1048 = vrot.lane.b32.xlu0 %v470, 64
        %v1049 = vpop.permute.xlu0 %1048
        %v1052 = vsel %vm473, %v819, 0
        %1054 = vmatprep.subr.mxu0 0.0
        %1055 = vmatpush1.msra.mxu0 %v1049
        %1056 = vmatprep.subr.mxu0 0.0
        %1057 = vmatpush1.msra.mxu0 0.0
        %1058 = vmatprep.subr.mxu0 0.0
        %1059 = vmatpush1.msra.mxu0 0.0
        %1060 = vmatprep.subr.mxu0 0.0
        %1061 = vmatpush1.msra.mxu0 0.0
        %1062 = vmatprep.subr.mxu0 0.0
        %1063 = vmatpush1.msra.mxu0 0.0
        %1064 = vmatprep.subr.mxu0 0.0
        %1065 = vmatpush1.msra.mxu0 0.0
        %1066 = vmatprep.subr.mxu0 0.0
        %1067 = vmatpush1.msra.mxu0 0.0
        %1068 = vmatprep.subr.mxu0 0.0
        %1069 = vmatpush1.msra.mxu0 0.0
        %1070 = vmatprep.subr.mxu0 0.0
        %1071 = vmatpush1.msra.mxu0 0.0
        %1072 = vmatprep.subr.mxu0 0.0
        %1073 = vmatpush1.msra.mxu0 0.0
        %1074 = vmatprep.subr.mxu0 0.0
        %1075 = vmatpush1.msra.mxu0 0.0
        %1076 = vmatprep.subr.mxu0 0.0
        %1077 = vmatpush1.msra.mxu0 0.0
        %1078 = vmatprep.subr.mxu0 0.0
        %1079 = vmatpush1.msra.mxu0 0.0
        %1080 = vmatprep.subr.mxu0 0.0
        %1081 = vmatpush1.msra.mxu0 0.0
        %1082 = vmatprep.subr.mxu0 0.0
        %1083 = vmatpush1.msra.mxu0 0.0
        %1084 = vmatprep.subr.mxu0 0.0
        %1085 = vmatpush1.msra.mxu0 0.0
        %1086 = vmatprep.subr.mxu0 0.0
        %1087 = vmatpush1.msra.mxu0 0.0
        %1088 = vmatprep.subr.mxu0 0.0
        %1089 = vmatpush1.msra.mxu0 0.0
        %1090 = vmatprep.subr.mxu0 0.0
        %1091 = vmatpush1.msra.mxu0 0.0
        %1092 = vmatprep.subr.mxu0 0.0
        %1093 = vmatpush1.msra.mxu0 0.0
        %1094 = vmatprep.subr.mxu0 0.0
        %1095 = vmatpush1.msra.mxu0 0.0
        %1096 = vmatprep.subr.mxu0 0.0
        %1097 = vmatpush1.msra.mxu0 0.0
        %1098 = vmatprep.subr.mxu0 0.0
        %1099 = vmatpush1.msra.mxu0 0.0
        %1100 = vmatprep.subr.mxu0 0.0
        %1101 = vmatpush1.msra.mxu0 0.0
        %1102 = vmatprep.subr.mxu0 0.0
        %1103 = vmatpush1.msra.mxu0 0.0
        %1104 = vmatprep.subr.mxu0 0.0
        %1105 = vmatpush1.msra.mxu0 0.0
        %1106 = vmatprep.subr.mxu0 0.0
        %1107 = vmatpush1.msra.mxu0 0.0
        %1108 = vmatprep.subr.mxu0 0.0
        %1109 = vmatpush1.msra.mxu0 0.0
        %1110 = vmatprep.subr.mxu0 0.0
        %1111 = vmatpush1.msra.mxu0 0.0
        %1112 = vmatprep.subr.mxu0 0.0
        %1113 = vmatpush1.msra.mxu0 0.0
        %1114 = vmatprep.subr.mxu0 0.0
        %1115 = vmatpush1.msra.mxu0 0.0
        %1116 = vmatprep.subr.mxu0 0.0
        %1117 = vmatpush1.msra.mxu0 0.0
        %1118 = vmatprep.mubr.f32.mxu0 0.0
        %1119 = vmatmul.mubr.f32.gmra.mrb[0].mxu0 %v1052
        %v1120 = vpop.f32.mrb[0].mxu0
        %v1121 = vadd.f32 0.0, %v1120
        %v1122 = vpop.f32.mrb[0].mxu0
        %1123 = vdwg.mxu0
        %1125 = vrot.lane.b32.xlu0 %v969, 8
        %v1126 = vpop.permute.xlu0 %1125
        %1129 = vrot.lane.b32.xlu0 %v1045, 16
        %v1130 = vpop.permute.xlu0 %1129
        %1133 = vrot.lane.b32.xlu0 %v1121, 24
        %v1134 = vpop.permute.xlu0 %1133
        %v1136 = vsel %vm473, %v893, %v1126
        %vm1137 = vcmask 130048
        %v1138 = vsel %vm1137, %v1136, %v1130
        %vm1139 = vcmask 195584
        %v1140 = vsel %vm1139, %v1138, %v1134
        %v1141 = vlaneseq
        %v1142 = vshrl.u32 %v1141, 7
        %v1143 = vsub.s32 1, %v1142
        %v1144 = vrot.slane %v385, %v1143
        %v1146 = vsel %vm390, %v1140, 0
        %1148 = vmatprep.subr.mxu0 0.0
        %1149 = vmatpush1.msra.mxu0 %v373
        %1150 = vmatprep.subr.mxu0 0.0
        %1151 = vmatpush1.msra.mxu0 %v374
        %1152 = vmatprep.subr.mxu0 0.0
        %1153 = vmatpush1.msra.mxu0 %v375
        %1154 = vmatprep.subr.mxu0 0.0
        %1155 = vmatpush1.msra.mxu0 %v376
        %1156 = vmatprep.subr.mxu0 0.0
        %1157 = vmatpush1.msra.mxu0 0.0
        %1158 = vmatprep.subr.mxu0 0.0
        %1159 = vmatpush1.msra.mxu0 0.0
        %1160 = vmatprep.subr.mxu0 0.0
        %1161 = vmatpush1.msra.mxu0 0.0
        %1162 = vmatprep.subr.mxu0 0.0
        %1163 = vmatpush1.msra.mxu0 0.0
        %1164 = vmatprep.subr.mxu0 0.0
        %1165 = vmatpush1.msra.mxu0 0.0
        %1166 = vmatprep.subr.mxu0 0.0
        %1167 = vmatpush1.msra.mxu0 0.0
        %1168 = vmatprep.subr.mxu0 0.0
        %1169 = vmatpush1.msra.mxu0 0.0
        %1170 = vmatprep.subr.mxu0 0.0
        %1171 = vmatpush1.msra.mxu0 0.0
        %1172 = vmatprep.subr.mxu0 0.0
        %1173 = vmatpush1.msra.mxu0 0.0
        %1174 = vmatprep.subr.mxu0 0.0
        %1175 = vmatpush1.msra.mxu0 0.0
        %1176 = vmatprep.subr.mxu0 0.0
        %1177 = vmatpush1.msra.mxu0 0.0
        %1178 = vmatprep.subr.mxu0 0.0
        %1179 = vmatpush1.msra.mxu0 0.0
        %1180 = vmatprep.subr.mxu0 0.0
        %1181 = vmatpush1.msra.mxu0 0.0
        %1182 = vmatprep.subr.mxu0 0.0
        %1183 = vmatpush1.msra.mxu0 0.0
        %1184 = vmatprep.subr.mxu0 0.0
        %1185 = vmatpush1.msra.mxu0 0.0
        %1186 = vmatprep.subr.mxu0 0.0
        %1187 = vmatpush1.msra.mxu0 0.0
        %1188 = vmatprep.subr.mxu0 0.0
        %1189 = vmatpush1.msra.mxu0 0.0
        %1190 = vmatprep.subr.mxu0 0.0
        %1191 = vmatpush1.msra.mxu0 0.0
        %1192 = vmatprep.subr.mxu0 0.0
        %1193 = vmatpush1.msra.mxu0 0.0
        %1194 = vmatprep.subr.mxu0 0.0
        %1195 = vmatpush1.msra.mxu0 0.0
        %1196 = vmatprep.subr.mxu0 0.0
        %1197 = vmatpush1.msra.mxu0 0.0
        %1198 = vmatprep.subr.mxu0 0.0
        %1199 = vmatpush1.msra.mxu0 0.0
        %1200 = vmatprep.subr.mxu0 0.0
        %1201 = vmatpush1.msra.mxu0 0.0
        %1202 = vmatprep.subr.mxu0 0.0
        %1203 = vmatpush1.msra.mxu0 0.0
        %1204 = vmatprep.subr.mxu0 0.0
        %1205 = vmatpush1.msra.mxu0 0.0
        %1206 = vmatprep.subr.mxu0 0.0
        %1207 = vmatpush1.msra.mxu0 0.0
        %1208 = vmatprep.subr.mxu0 0.0
        %1209 = vmatpush1.msra.mxu0 0.0
        %1210 = vmatprep.subr.mxu0 0.0
        %1211 = vmatpush1.msra.mxu0 0.0
        %1212 = vmatprep.mubr.f32.mxu0 0.0
        %1213 = vmatmul.mubr.f32.gmra.mrb[0].mxu0 %v1146
        %v1214 = vpop.f32.mrb[0].mxu0
        %v1215 = vadd.f32 %v1144, %v1214
        %v1216 = vpop.f32.mrb[0].mxu0
        %1217 = vdwg.mxu0
        %v1218 = vadd.f32 %v368, %v1215
        %v1219 = vsel %vm390, %v1218, 0.0
        %1220 = vadd.xlane.f32.xlu0 %v1219
        %v1221 = vpop.xlane.xlu0 %1220
        %v1222 = vrcp.pop 32.0
        %v1223 = vmul.f32 %v1221, %v1222
        %v1224 = vsub.f32 %v1218, %v1223
        %v1225 = vmul.f32 %v1224, %v1224
        %v1226 = vsel %vm390, %v1225, 0.0
        %1227 = vadd.xlane.f32.xlu0 %v1226
        %v1228 = vpop.xlane.xlu0 %1227
        %v1229 = vmul.f32 %v1228, %v1222
        %v1230 = vadd.f32 %v1229, 1e-05
        %v1231 = vrsqrt.pop %v1230
        %v1232 = vmul.f32 %v1224, %v1231
        %v1233 = vlaneseq
        %v1234 = vshrl.u32 %v1233, 7
        %v1235 = vsub.s32 2, %v1234
        %v1236 = vrot.slane %v385, %v1235
        %v1237 = vmul.f32 %v1232, %v1236
        %v1238 = vlaneseq
        %v1239 = vshrl.u32 %v1238, 7
        %v1240 = vsub.s32 3, %v1239
        %v1241 = vrot.slane %v385, %v1240
        %v1242 = vadd.f32 %v1237, %v1241
        %v1243 = vlaneseq
        %v1244 = vshrl.u32 %v1243, 7
        %v1245 = vsub.s32 4, %v1244
        %v1246 = vrot.slane %v385, %v1245
        %v1248 = vsel %vm390, %v1242, 0
        %1250 = vmatprep.subr.mxu0 0.0
        %1251 = vmatpush1.msra.mxu0 %v377
        %1252 = vmatprep.subr.mxu0 0.0
        %1253 = vmatpush1.msra.mxu0 %v378
        %1254 = vmatprep.subr.mxu0 0.0
        %1255 = vmatpush1.msra.mxu0 %v379
        %1256 = vmatprep.subr.mxu0 0.0
        %1257 = vmatpush1.msra.mxu0 %v380
        %1258 = vmatprep.subr.mxu0 0.0
        %1259 = vmatpush1.msra.mxu0 0.0
        %1260 = vmatprep.subr.mxu0 0.0
        %1261 = vmatpush1.msra.mxu0 0.0
        %1262 = vmatprep.subr.mxu0 0.0
        %1263 = vmatpush1.msra.mxu0 0.0
        %1264 = vmatprep.subr.mxu0 0.0
        %1265 = vmatpush1.msra.mxu0 0.0
        %1266 = vmatprep.subr.mxu0 0.0
        %1267 = vmatpush1.msra.mxu0 0.0
        %1268 = vmatprep.subr.mxu0 0.0
        %1269 = vmatpush1.msra.mxu0 0.0
        %1270 = vmatprep.subr.mxu0 0.0
        %1271 = vmatpush1.msra.mxu0 0.0
        %1272 = vmatprep.subr.mxu0 0.0
        %1273 = vmatpush1.msra.mxu0 0.0
        %1274 = vmatprep.subr.mxu0 0.0
        %1275 = vmatpush1.msra.mxu0 0.0
        %1276 = vmatprep.subr.mxu0 0.0
        %1277 = vmatpush1.msra.mxu0 0.0
        %1278 = vmatprep.subr.mxu0 0.0
        %1279 = vmatpush1.msra.mxu0 0.0
        %1280 = vmatprep.subr.mxu0 0.0
        %1281 = vmatpush1.msra.mxu0 0.0
        %1282 = vmatprep.subr.mxu0 0.0
        %1283 = vmatpush1.msra.mxu0 0.0
        %1284 = vmatprep.subr.mxu0 0.0
        %1285 = vmatpush1.msra.mxu0 0.0
        %1286 = vmatprep.subr.mxu0 0.0
        %1287 = vmatpush1.msra.mxu0 0.0
        %1288 = vmatprep.subr.mxu0 0.0
        %1289 = vmatpush1.msra.mxu0 0.0
        %1290 = vmatprep.subr.mxu0 0.0
        %1291 = vmatpush1.msra.mxu0 0.0
        %1292 = vmatprep.subr.mxu0 0.0
        %1293 = vmatpush1.msra.mxu0 0.0
        %1294 = vmatprep.subr.mxu0 0.0
        %1295 = vmatpush1.msra.mxu0 0.0
        %1296 = vmatprep.subr.mxu0 0.0
        %1297 = vmatpush1.msra.mxu0 0.0
        %1298 = vmatprep.subr.mxu0 0.0
        %1299 = vmatpush1.msra.mxu0 0.0
        %1300 = vmatprep.subr.mxu0 0.0
        %1301 = vmatpush1.msra.mxu0 0.0
        %1302 = vmatprep.subr.mxu0 0.0
        %1303 = vmatpush1.msra.mxu0 0.0
        %1304 = vmatprep.subr.mxu0 0.0
        %1305 = vmatpush1.msra.mxu0 0.0
        %1306 = vmatprep.subr.mxu0 0.0
        %1307 = vmatpush1.msra.mxu0 0.0
        %1308 = vmatprep.subr.mxu0 0.0
        %1309 = vmatpush1.msra.mxu0 0.0
        %1310 = vmatprep.subr.mxu0 0.0
        %1311 = vmatpush1.msra.mxu0 0.0
        %1312 = vmatprep.subr.mxu0 0.0
        %1313 = vmatpush1.msra.mxu0 0.0
        %1314 = vmatprep.mubr.f32.mxu0 0.0
        %1315 = vmatmul.mubr.f32.gmra.mrb[0].mxu0 %v1248
        %v1316 = vpop.f32.mrb[0].mxu0
        %v1317 = vadd.f32 %v1246, %v1316
        %v1318 = vpop.f32.mrb[0].mxu0
        %1319 = vdwg.mxu0
        %v1320 = vmax.f32 %v1317, 0.0
        %v1321 = vlaneseq
        %v1322 = vshrl.u32 %v1321, 7
        %v1323 = vsub.s32 5, %v1322
        %v1324 = vrot.slane %v385, %v1323
        %v1326 = vsel %vm390, %v1320, 0
        %1328 = vmatprep.subr.mxu0 0.0
        %1329 = vmatpush1.msra.mxu0 %v381
        %1330 = vmatprep.subr.mxu0 0.0
        %1331 = vmatpush1.msra.mxu0 %v382
        %1332 = vmatprep.subr.mxu0 0.0
        %1333 = vmatpush1.msra.mxu0 %v383
        %1334 = vmatprep.subr.mxu0 0.0
        %1335 = vmatpush1.msra.mxu0 %v384
        %1336 = vmatprep.subr.mxu0 0.0
        %1337 = vmatpush1.msra.mxu0 0.0
        %1338 = vmatprep.subr.mxu0 0.0
        %1339 = vmatpush1.msra.mxu0 0.0
        %1340 = vmatprep.subr.mxu0 0.0
        %1341 = vmatpush1.msra.mxu0 0.0
        %1342 = vmatprep.subr.mxu0 0.0
        %1343 = vmatpush1.msra.mxu0 0.0
        %1344 = vmatprep.subr.mxu0 0.0
        %1345 = vmatpush1.msra.mxu0 0.0
        %1346 = vmatprep.subr.mxu0 0.0
        %1347 = vmatpush1.msra.mxu0 0.0
        %1348 = vmatprep.subr.mxu0 0.0
        %1349 = vmatpush1.msra.mxu0 0.0
        %1350 = vmatprep.subr.mxu0 0.0
        %1351 = vmatpush1.msra.mxu0 0.0
        %1352 = vmatprep.subr.mxu0 0.0
        %1353 = vmatpush1.msra.mxu0 0.0
        %1354 = vmatprep.subr.mxu0 0.0
        %1355 = vmatpush1.msra.mxu0 0.0
        %1356 = vmatprep.subr.mxu0 0.0
        %1357 = vmatpush1.msra.mxu0 0.0
        %1358 = vmatprep.subr.mxu0 0.0
        %1359 = vmatpush1.msra.mxu0 0.0
        %1360 = vmatprep.subr.mxu0 0.0
        %1361 = vmatpush1.msra.mxu0 0.0
        %1362 = vmatprep.subr.mxu0 0.0
        %1363 = vmatpush1.msra.mxu0 0.0
        %1364 = vmatprep.subr.mxu0 0.0
        %1365 = vmatpush1.msra.mxu0 0.0
        %1366 = vmatprep.subr.mxu0 0.0
        %1367 = vmatpush1.msra.mxu0 0.0
        %1368 = vmatprep.subr.mxu0 0.0
        %1369 = vmatpush1.msra.mxu0 0.0
        %1370 = vmatprep.subr.mxu0 0.0
        %1371 = vmatpush1.msra.mxu0 0.0
        %1372 = vmatprep.subr.mxu0 0.0
        %1373 = vmatpush1.msra.mxu0 0.0
        %1374 = vmatprep.subr.mxu0 0.0
        %1375 = vmatpush1.msra.mxu0 0.0
        %1376 = vmatprep.subr.mxu0 0.0
        %1377 = vmatpush1.msra.mxu0 0.0
        %1378 = vmatprep.subr.mxu0 0.0
        %1379 = vmatpush1.msra.mxu0 0.0
        %1380 = vmatprep.subr.mxu0 0.0
        %1381 = vmatpush1.msra.mxu0 0.0
        %1382 = vmatprep.subr.mxu0 0.0
        %1383 = vmatpush1.msra.mxu0 0.0
        %1384 = vmatprep.subr.mxu0 0.0
        %1385 = vmatpush1.msra.mxu0 0.0
        %1386 = vmatprep.subr.mxu0 0.0
        %1387 = vmatpush1.msra.mxu0 0.0
        %1388 = vmatprep.subr.mxu0 0.0
        %1389 = vmatpush1.msra.mxu0 0.0
        %1390 = vmatprep.subr.mxu0 0.0
        %1391 = vmatpush1.msra.mxu0 0.0
        %1392 = vmatprep.mubr.f32.mxu0 0.0
        %1393 = vmatmul.mubr.f32.gmra.mrb[0].mxu0 %v1326
        %v1394 = vpop.f32.mrb[0].mxu0
        %v1395 = vadd.f32 %v1324, %v1394
        %v1396 = vpop.f32.mrb[0].mxu0
        %1397 = vdwg.mxu0
        %v1398 = vadd.f32 %v1242, %v1395
        %v1399 = vsel %vm390, %v1398, 0.0
        %1400 = vadd.xlane.f32.xlu0 %v1399
        %v1401 = vpop.xlane.xlu0 %1400
        %v1402 = vmul.f32 %v1401, %v1222
        %v1403 = vsub.f32 %v1398, %v1402
        %v1404 = vmul.f32 %v1403, %v1403
        %v1405 = vsel %vm390, %v1404, 0.0
        %1406 = vadd.xlane.f32.xlu0 %v1405
        %v1407 = vpop.xlane.xlu0 %1406
        %v1408 = vmul.f32 %v1407, %v1222
        %v1409 = vadd.f32 %v1408, 1e-05
        %v1410 = vrsqrt.pop %v1409
        %v1411 = vmul.f32 %v1403, %v1410
        %v1412 = vlaneseq
        %v1413 = vshrl.u32 %v1412, 7
        %v1414 = vsub.s32 6, %v1413
        %v1415 = vrot.slane %v385, %v1414
        %v1416 = vmul.f32 %v1411, %v1415
        %v1417 = vlaneseq
        %v1418 = vshrl.u32 %v1417, 7
        %v1419 = vsub.s32 7, %v1418
        %v1420 = vrot.slane %v385, %v1419
        %v1421 = vadd.f32 %v1416, %v1420
        %s1422 = scalar_lea.vmem [#allocation7], 32
        %v1423 = vld [vmem:[%s1422] sm:$0xff]
        %v1424 = vld [vmem:[%s1422 + $0x8] sm:$0xff]
        %v1425 = vld [vmem:[%s1422 + $0x10] sm:$0xff]
        %v1426 = vld [vmem:[%s1422 + $0x18] sm:$0xff]
        %s1427 = scalar_lea.vmem [#allocation8], 32
        %v1428 = vld [vmem:[%s1427] sm:$0xff]
        %v1429 = vld [vmem:[%s1427 + $0x8] sm:$0xff]
        %v1430 = vld [vmem:[%s1427 + $0x10] sm:$0xff]
        %v1431 = vld [vmem:[%s1427 + $0x18] sm:$0xff]
        %s1432 = scalar_lea.vmem [#allocation10], 32
        %v1433 = vld [vmem:[%s1432] sm:$0xff]
        %v1434 = vld [vmem:[%s1432 + $0x8] sm:$0xff]
        %v1435 = vld [vmem:[%s1432 + $0x10] sm:$0xff]
        %v1436 = vld [vmem:[%s1432 + $0x18] sm:$0xff]
        %s1437 = scalar_lea.vmem [#allocation11], 32
        %v1438 = vld [vmem:[%s1437] sm:$0xff]
        %v1439 = vld [vmem:[%s1437 + $0x8] sm:$0xff]
        %v1440 = vld [vmem:[%s1437 + $0x10] sm:$0xff]
        %v1441 = vld [vmem:[%s1437 + $0x18] sm:$0xff]
        %s1442 = scalar_lea.vmem %s6, 8
        %v1443 = vld [vmem:[%s1442] sm:$0xff]
        %v1444 = vlaneseq
        %v1445 = vshrl.u32 %v1444, 7
        %v1446 = vsub.s32 0, %v1445
        %v1447 = vrot.slane %v1443, %v1446
        %v1449 = vsel %vm390, %v1421, 0
        %1451 = vmatprep.subr.mxu0 0.0
        %1452 = vmatpush1.msra.mxu0 %v1423
        %1453 = vmatprep.subr.mxu0 0.0
        %1454 = vmatpush1.msra.mxu0 %v1424
        %1455 = vmatprep.subr.mxu0 0.0
        %1456 = vmatpush1.msra.mxu0 %v1425
        %1457 = vmatprep.subr.mxu0 0.0
        %1458 = vmatpush1.msra.mxu0 %v1426
        %1459 = vmatprep.subr.mxu0 0.0
        %1460 = vmatpush1.msra.mxu0 0.0
        %1461 = vmatprep.subr.mxu0 0.0
        %1462 = vmatpush1.msra.mxu0 0.0
        %1463 = vmatprep.subr.mxu0 0.0
        %1464 = vmatpush1.msra.mxu0 0.0
        %1465 = vmatprep.subr.mxu0 0.0
        %1466 = vmatpush1.msra.mxu0 0.0
        %1467 = vmatprep.subr.mxu0 0.0
        %1468 = vmatpush1.msra.mxu0 0.0
        %1469 = vmatprep.subr.mxu0 0.0
        %1470 = vmatpush1.msra.mxu0 0.0
        %1471 = vmatprep.subr.mxu0 0.0
        %1472 = vmatpush1.msra.mxu0 0.0
        %1473 = vmatprep.subr.mxu0 0.0
        %1474 = vmatpush1.msra.mxu0 0.0
        %1475 = vmatprep.subr.mxu0 0.0
        %1476 = vmatpush1.msra.mxu0 0.0
        %1477 = vmatprep.subr.mxu0 0.0
        %1478 = vmatpush1.msra.mxu0 0.0
        %1479 = vmatprep.subr.mxu0 0.0
        %1480 = vmatpush1.msra.mxu0 0.0
        %1481 = vmatprep.subr.mxu0 0.0
        %1482 = vmatpush1.msra.mxu0 0.0
        %1483 = vmatprep.subr.mxu0 0.0
        %1484 = vmatpush1.msra.mxu0 0.0
        %1485 = vmatprep.subr.mxu0 0.0
        %1486 = vmatpush1.msra.mxu0 0.0
        %1487 = vmatprep.subr.mxu0 0.0
        %1488 = vmatpush1.msra.mxu0 0.0
        %1489 = vmatprep.subr.mxu0 0.0
        %1490 = vmatpush1.msra.mxu0 0.0
        %1491 = vmatprep.subr.mxu0 0.0
        %1492 = vmatpush1.msra.mxu0 0.0
        %1493 = vmatprep.subr.mxu0 0.0
        %1494 = vmatpush1.msra.mxu0 0.0
        %1495 = vmatprep.subr.mxu0 0.0
        %1496 = vmatpush1.msra.mxu0 0.0
        %1497 = vmatprep.subr.mxu0 0.0
        %1498 = vmatpush1.msra.mxu0 0.0
        %1499 = vmatprep.subr.mxu0 0.0
        %1500 = vmatpush1.msra.mxu0 0.0
        %1501 = vmatprep.subr.mxu0 0.0
        %1502 = vmatpush1.msra.mxu0 0.0
        %1503 = vmatprep.subr.mxu0 0.0
        %1504 = vmatpush1.msra.mxu0 0.0
        %1505 = vmatprep.subr.mxu0 0.0
        %1506 = vmatpush1.msra.mxu0 0.0
        %1507 = vmatprep.subr.mxu0 0.0
        %1508 = vmatpush1.msra.mxu0 0.0
        %1509 = vmatprep.subr.mxu0 0.0
        %1510 = vmatpush1.msra.mxu0 0.0
        %1511 = vmatprep.subr.mxu0 0.0
        %1512 = vmatpush1.msra.mxu0 0.0
        %1513 = vmatprep.subr.mxu0 0.0
        %1514 = vmatpush1.msra.mxu0 0.0
        %1515 = vmatprep.mubr.f32.mxu0 0.0
        %1516 = vmatmul.mubr.f32.gmra.mrb[0].mxu0 %v1449
        %v1517 = vpop.f32.mrb[0].mxu0
        %v1518 = vadd.f32 %v1447, %v1517
        %v1519 = vpop.f32.mrb[0].mxu0
        %1520 = vdwg.mxu0
        %1522 = vrot.lane.b32.xlu0 %v1518, 120
        %v1523 = vpop.permute.xlu0 %1522
        %1524 = vrot.lane.b32.xlu0 %v1518, 112
        %v1525 = vpop.permute.xlu0 %1524
        %1526 = vrot.lane.b32.xlu0 %v1518, 104
        %v1527 = vpop.permute.xlu0 %1526
        %1528 = vrot.lane.b32.xlu0 %v1518, 96
        %v1529 = vpop.permute.xlu0 %1528
        %v1530 = vsel %vm473, %v1518, 0
        %v1532 = vsel %vm473, %v1529, 0
        %1534 = vmatprep.subr.mxu0 0.0
        %1535 = vmatpush1.xpose.msra.mxu0 %v1532
        %1536 = vmatprep.subr.mxu0 0.0
        %1537 = vmatpush1.xpose.msra.mxu0 0.0
        %1538 = vmatprep.subr.mxu0 0.0
        %1539 = vmatpush1.xpose.msra.mxu0 0.0
        %1540 = vmatprep.subr.mxu0 0.0
        %1541 = vmatpush1.xpose.msra.mxu0 0.0
        %1542 = vmatprep.subr.mxu0 0.0
        %1543 = vmatpush1.xpose.msra.mxu0 0.0
        %1544 = vmatprep.subr.mxu0 0.0
        %1545 = vmatpush1.xpose.msra.mxu0 0.0
        %1546 = vmatprep.subr.mxu0 0.0
        %1547 = vmatpush1.xpose.msra.mxu0 0.0
        %1548 = vmatprep.subr.mxu0 0.0
        %1549 = vmatpush1.xpose.msra.mxu0 0.0
        %1550 = vmatprep.subr.mxu0 0.0
        %1551 = vmatpush1.xpose.msra.mxu0 0.0
        %1552 = vmatprep.subr.mxu0 0.0
        %1553 = vmatpush1.xpose.msra.mxu0 0.0
        %1554 = vmatprep.subr.mxu0 0.0
        %1555 = vmatpush1.xpose.msra.mxu0 0.0
        %1556 = vmatprep.subr.mxu0 0.0
        %1557 = vmatpush1.xpose.msra.mxu0 0.0
        %1558 = vmatprep.subr.mxu0 0.0
        %1559 = vmatpush1.xpose.msra.mxu0 0.0
        %1560 = vmatprep.subr.mxu0 0.0
        %1561 = vmatpush1.xpose.msra.mxu0 0.0
        %1562 = vmatprep.subr.mxu0 0.0
        %1563 = vmatpush1.xpose.msra.mxu0 0.0
        %1564 = vmatprep.subr.mxu0 0.0
        %1565 = vmatpush1.xpose.msra.mxu0 0.0
        %1566 = vmatprep.subr.mxu0 0.0
        %1567 = vmatpush1.xpose.msra.mxu0 0.0
        %1568 = vmatprep.subr.mxu0 0.0
        %1569 = vmatpush1.xpose.msra.mxu0 0.0
        %1570 = vmatprep.subr.mxu0 0.0
        %1571 = vmatpush1.xpose.msra.mxu0 0.0
        %1572 = vmatprep.subr.mxu0 0.0
        %1573 = vmatpush1.xpose.msra.mxu0 0.0
        %1574 = vmatprep.subr.mxu0 0.0
        %1575 = vmatpush1.xpose.msra.mxu0 0.0
        %1576 = vmatprep.subr.mxu0 0.0
        %1577 = vmatpush1.xpose.msra.mxu0 0.0
        %1578 = vmatprep.subr.mxu0 0.0
        %1579 = vmatpush1.xpose.msra.mxu0 0.0
        %1580 = vmatprep.subr.mxu0 0.0
        %1581 = vmatpush1.xpose.msra.mxu0 0.0
        %1582 = vmatprep.subr.mxu0 0.0
        %1583 = vmatpush1.xpose.msra.mxu0 0.0
        %1584 = vmatprep.subr.mxu0 0.0
        %1585 = vmatpush1.xpose.msra.mxu0 0.0
        %1586 = vmatprep.subr.mxu0 0.0
        %1587 = vmatpush1.xpose.msra.mxu0 0.0
        %1588 = vmatprep.subr.mxu0 0.0
        %1589 = vmatpush1.xpose.msra.mxu0 0.0
        %1590 = vmatprep.subr.mxu0 0.0
        %1591 = vmatpush1.xpose.msra.mxu0 0.0
        %1592 = vmatprep.subr.mxu0 0.0
        %1593 = vmatpush1.xpose.msra.mxu0 0.0
        %1594 = vmatprep.subr.mxu0 0.0
        %1595 = vmatpush1.xpose.msra.mxu0 0.0
        %1596 = vmatprep.subr.mxu0 0.0
        %1597 = vmatpush1.xpose.msra.mxu0 0.0
        %1598 = vmatprep.mubr.f32.mxu0 0.0
        %1599 = vmatmul.mubr.f32.gmra.mrb[0].mxu0 %v1530
        %v1600 = vpop.f32.mrb[0].mxu0
        %v1601 = vadd.f32 0.0, %v1600
        %v1602 = vpop.f32.mrb[0].mxu0
        %1603 = vdwg.mxu0
        %1604 = vrot.lane.b32.xlu0 %v1523, 96
        %v1605 = vpop.permute.xlu0 %1604
        %v1606 = vsel %vm473, %v1523, 0
        %v1608 = vsel %vm473, %v1605, 0
        %1610 = vmatprep.subr.mxu0 0.0
        %1611 = vmatpush1.xpose.msra.mxu0 %v1608
        %1612 = vmatprep.subr.mxu0 0.0
        %1613 = vmatpush1.xpose.msra.mxu0 0.0
        %1614 = vmatprep.subr.mxu0 0.0
        %1615 = vmatpush1.xpose.msra.mxu0 0.0
        %1616 = vmatprep.subr.mxu0 0.0
        %1617 = vmatpush1.xpose.msra.mxu0 0.0
        %1618 = vmatprep.subr.mxu0 0.0
        %1619 = vmatpush1.xpose.msra.mxu0 0.0
        %1620 = vmatprep.subr.mxu0 0.0
        %1621 = vmatpush1.xpose.msra.mxu0 0.0
        %1622 = vmatprep.subr.mxu0 0.0
        %1623 = vmatpush1.xpose.msra.mxu0 0.0
        %1624 = vmatprep.subr.mxu0 0.0
        %1625 = vmatpush1.xpose.msra.mxu0 0.0
        %1626 = vmatprep.subr.mxu0 0.0
        %1627 = vmatpush1.xpose.msra.mxu0 0.0
        %1628 = vmatprep.subr.mxu0 0.0
        %1629 = vmatpush1.xpose.msra.mxu0 0.0
        %1630 = vmatprep.subr.mxu0 0.0
        %1631 = vmatpush1.xpose.msra.mxu0 0.0
        %1632 = vmatprep.subr.mxu0 0.0
        %1633 = vmatpush1.xpose.msra.mxu0 0.0
        %1634 = vmatprep.subr.mxu0 0.0
        %1635 = vmatpush1.xpose.msra.mxu0 0.0
        %1636 = vmatprep.subr.mxu0 0.0
        %1637 = vmatpush1.xpose.msra.mxu0 0.0
        %1638 = vmatprep.subr.mxu0 0.0
        %1639 = vmatpush1.xpose.msra.mxu0 0.0
        %1640 = vmatprep.subr.mxu0 0.0
        %1641 = vmatpush1.xpose.msra.mxu0 0.0
        %1642 = vmatprep.subr.mxu0 0.0
        %1643 = vmatpush1.xpose.msra.mxu0 0.0
        %1644 = vmatprep.subr.mxu0 0.0
        %1645 = vmatpush1.xpose.msra.mxu0 0.0
        %1646 = vmatprep.subr.mxu0 0.0
        %1647 = vmatpush1.xpose.msra.mxu0 0.0
        %1648 = vmatprep.subr.mxu0 0.0
        %1649 = vmatpush1.xpose.msra.mxu0 0.0
        %1650 = vmatprep.subr.mxu0 0.0
        %1651 = vmatpush1.xpose.msra.mxu0 0.0
        %1652 = vmatprep.subr.mxu0 0.0
        %1653 = vmatpush1.xpose.msra.mxu0 0.0
        %1654 = vmatprep.subr.mxu0 0.0
        %1655 = vmatpush1.xpose.msra.mxu0 0.0
        %1656 = vmatprep.subr.mxu0 0.0
        %1657 = vmatpush1.xpose.msra.mxu0 0.0
        %1658 = vmatprep.subr.mxu0 0.0
        %1659 = vmatpush1.xpose.msra.mxu0 0.0
        %1660 = vmatprep.subr.mxu0 0.0
        %1661 = vmatpush1.xpose.msra.mxu0 0.0
        %1662 = vmatprep.subr.mxu0 0.0
        %1663 = vmatpush1.xpose.msra.mxu0 0.0
        %1664 = vmatprep.subr.mxu0 0.0
        %1665 = vmatpush1.xpose.msra.mxu0 0.0
        %1666 = vmatprep.subr.mxu0 0.0
        %1667 = vmatpush1.xpose.msra.mxu0 0.0
        %1668 = vmatprep.subr.mxu0 0.0
        %1669 = vmatpush1.xpose.msra.mxu0 0.0
        %1670 = vmatprep.subr.mxu0 0.0
        %1671 = vmatpush1.xpose.msra.mxu0 0.0
        %1672 = vmatprep.subr.mxu0 0.0
        %1673 = vmatpush1.xpose.msra.mxu0 0.0
        %1674 = vmatprep.mubr.f32.mxu0 0.0
        %1675 = vmatmul.mubr.f32.gmra.mrb[0].mxu0 %v1606
        %v1676 = vpop.f32.mrb[0].mxu0
        %v1677 = vadd.f32 0.0, %v1676
        %v1678 = vpop.f32.mrb[0].mxu0
        %1679 = vdwg.mxu0
        %1680 = vrot.lane.b32.xlu0 %v1525, 96
        %v1681 = vpop.permute.xlu0 %1680
        %v1682 = vsel %vm473, %v1525, 0
        %v1684 = vsel %vm473, %v1681, 0
        %1686 = vmatprep.subr.mxu0 0.0
        %1687 = vmatpush1.xpose.msra.mxu0 %v1684
        %1688 = vmatprep.subr.mxu0 0.0
        %1689 = vmatpush1.xpose.msra.mxu0 0.0
        %1690 = vmatprep.subr.mxu0 0.0
        %1691 = vmatpush1.xpose.msra.mxu0 0.0
        %1692 = vmatprep.subr.mxu0 0.0
        %1693 = vmatpush1.xpose.msra.mxu0 0.0
        %1694 = vmatprep.subr.mxu0 0.0
        %1695 = vmatpush1.xpose.msra.mxu0 0.0
        %1696 = vmatprep.subr.mxu0 0.0
        %1697 = vmatpush1.xpose.msra.mxu0 0.0
        %1698 = vmatprep.subr.mxu0 0.0
        %1699 = vmatpush1.xpose.msra.mxu0 0.0
        %1700 = vmatprep.subr.mxu0 0.0
        %1701 = vmatpush1.xpose.msra.mxu0 0.0
        %1702 = vmatprep.subr.mxu0 0.0
        %1703 = vmatpush1.xpose.msra.mxu0 0.0
        %1704 = vmatprep.subr.mxu0 0.0
        %1705 = vmatpush1.xpose.msra.mxu0 0.0
        %1706 = vmatprep.subr.mxu0 0.0
        %1707 = vmatpush1.xpose.msra.mxu0 0.0
        %1708 = vmatprep.subr.mxu0 0.0
        %1709 = vmatpush1.xpose.msra.mxu0 0.0
        %1710 = vmatprep.subr.mxu0 0.0
        %1711 = vmatpush1.xpose.msra.mxu0 0.0
        %1712 = vmatprep.subr.mxu0 0.0
        %1713 = vmatpush1.xpose.msra.mxu0 0.0
        %1714 = vmatprep.subr.mxu0 0.0
        %1715 = vmatpush1.xpose.msra.mxu0 0.0
        %1716 = vmatprep.subr.mxu0 0.0
        %1717 = vmatpush1.xpose.msra.mxu0 0.0
        %1718 = vmatprep.subr.mxu0 0.0
        %1719 = vmatpush1.xpose.msra.mxu0 0.0
        %1720 = vmatprep.subr.mxu0 0.0
        %1721 = vmatpush1.xpose.msra.mxu0 0.0
        %1722 = vmatprep.subr.mxu0 0.0
        %1723 = vmatpush1.xpose.msra.mxu0 0.0
        %1724 = vmatprep.subr.mxu0 0.0
        %1725 = vmatpush1.xpose.msra.mxu0 0.0
        %1726 = vmatprep.subr.mxu0 0.0
        %1727 = vmatpush1.xpose.msra.mxu0 0.0
        %1728 = vmatprep.subr.mxu0 0.0
        %1729 = vmatpush1.xpose.msra.mxu0 0.0
        %1730 = vmatprep.subr.mxu0 0.0
        %1731 = vmatpush1.xpose.msra.mxu0 0.0
        %1732 = vmatprep.subr.mxu0 0.0
        %1733 = vmatpush1.xpose.msra.mxu0 0.0
        %1734 = vmatprep.subr.mxu0 0.0
        %1735 = vmatpush1.xpose.msra.mxu0 0.0
        %1736 = vmatprep.subr.mxu0 0.0
        %1737 = vmatpush1.xpose.msra.mxu0 0.0
        %1738 = vmatprep.subr.mxu0 0.0
        %1739 = vmatpush1.xpose.msra.mxu0 0.0
        %1740 = vmatprep.subr.mxu0 0.0
        %1741 = vmatpush1.xpose.msra.mxu0 0.0
        %1742 = vmatprep.subr.mxu0 0.0
        %1743 = vmatpush1.xpose.msra.mxu0 0.0
        %1744 = vmatprep.subr.mxu0 0.0
        %1745 = vmatpush1.xpose.msra.mxu0 0.0
        %1746 = vmatprep.subr.mxu0 0.0
        %1747 = vmatpush1.xpose.msra.mxu0 0.0
        %1748 = vmatprep.subr.mxu0 0.0
        %1749 = vmatpush1.xpose.msra.mxu0 0.0
        %1750 = vmatprep.mubr.f32.mxu0 0.0
        %1751 = vmatmul.mubr.f32.gmra.mrb[0].mxu0 %v1682
        %v1752 = vpop.f32.mrb[0].mxu0
        %v1753 = vadd.f32 0.0, %v1752
        %v1754 = vpop.f32.mrb[0].mxu0
        %1755 = vdwg.mxu0
        %1756 = vrot.lane.b32.xlu0 %v1527, 96
        %v1757 = vpop.permute.xlu0 %1756
        %v1758 = vsel %vm473, %v1527, 0
        %v1760 = vsel %vm473, %v1757, 0
        %1762 = vmatprep.subr.mxu0 0.0
        %1763 = vmatpush1.xpose.msra.mxu0 %v1760
        %1764 = vmatprep.subr.mxu0 0.0
        %1765 = vmatpush1.xpose.msra.mxu0 0.0
        %1766 = vmatprep.subr.mxu0 0.0
        %1767 = vmatpush1.xpose.msra.mxu0 0.0
        %1768 = vmatprep.subr.mxu0 0.0
        %1769 = vmatpush1.xpose.msra.mxu0 0.0
        %1770 = vmatprep.subr.mxu0 0.0
        %1771 = vmatpush1.xpose.msra.mxu0 0.0
        %1772 = vmatprep.subr.mxu0 0.0
        %1773 = vmatpush1.xpose.msra.mxu0 0.0
        %1774 = vmatprep.subr.mxu0 0.0
        %1775 = vmatpush1.xpose.msra.mxu0 0.0
        %1776 = vmatprep.subr.mxu0 0.0
        %1777 = vmatpush1.xpose.msra.mxu0 0.0
        %1778 = vmatprep.subr.mxu0 0.0
        %1779 = vmatpush1.xpose.msra.mxu0 0.0
        %1780 = vmatprep.subr.mxu0 0.0
        %1781 = vmatpush1.xpose.msra.mxu0 0.0
        %1782 = vmatprep.subr.mxu0 0.0
        %1783 = vmatpush1.xpose.msra.mxu0 0.0
        %1784 = vmatprep.subr.mxu0 0.0
        %1785 = vmatpush1.xpose.msra.mxu0 0.0
        %1786 = vmatprep.subr.mxu0 0.0
        %1787 = vmatpush1.xpose.msra.mxu0 0.0
        %1788 = vmatprep.subr.mxu0 0.0
        %1789 = vmatpush1.xpose.msra.mxu0 0.0
        %1790 = vmatprep.subr.mxu0 0.0
        %1791 = vmatpush1.xpose.msra.mxu0 0.0
        %1792 = vmatprep.subr.mxu0 0.0
        %1793 = vmatpush1.xpose.msra.mxu0 0.0
        %1794 = vmatprep.subr.mxu0 0.0
        %1795 = vmatpush1.xpose.msra.mxu0 0.0
        %1796 = vmatprep.subr.mxu0 0.0
        %1797 = vmatpush1.xpose.msra.mxu0 0.0
        %1798 = vmatprep.subr.mxu0 0.0
        %1799 = vmatpush1.xpose.msra.mxu0 0.0
        %1800 = vmatprep.subr.mxu0 0.0
        %1801 = vmatpush1.xpose.msra.mxu0 0.0
        %1802 = vmatprep.subr.mxu0 0.0
        %1803 = vmatpush1.xpose.msra.mxu0 0.0
        %1804 = vmatprep.subr.mxu0 0.0
        %1805 = vmatpush1.xpose.msra.mxu0 0.0
        %1806 = vmatprep.subr.mxu0 0.0
        %1807 = vmatpush1.xpose.msra.mxu0 0.0
        %1808 = vmatprep.subr.mxu0 0.0
        %1809 = vmatpush1.xpose.msra.mxu0 0.0
        %1810 = vmatprep.subr.mxu0 0.0
        %1811 = vmatpush1.xpose.msra.mxu0 0.0
        %1812 = vmatprep.subr.mxu0 0.0
        %1813 = vmatpush1.xpose.msra.mxu0 0.0
        %1814 = vmatprep.subr.mxu0 0.0
        %1815 = vmatpush1.xpose.msra.mxu0 0.0
        %1816 = vmatprep.subr.mxu0 0.0
        %1817 = vmatpush1.xpose.msra.mxu0 0.0
        %1818 = vmatprep.subr.mxu0 0.0
        %1819 = vmatpush1.xpose.msra.mxu0 0.0
        %1820 = vmatprep.subr.mxu0 0.0
        %1821 = vmatpush1.xpose.msra.mxu0 0.0
        %1822 = vmatprep.subr.mxu0 0.0
        %1823 = vmatpush1.xpose.msra.mxu0 0.0
        %1824 = vmatprep.subr.mxu0 0.0
        %1825 = vmatpush1.xpose.msra.mxu0 0.0
        %1826 = vmatprep.mubr.f32.mxu0 0.0
        %1827 = vmatmul.mubr.f32.gmra.mrb[0].mxu0 %v1758
        %v1828 = vpop.f32.mrb[0].mxu0
        %v1829 = vadd.f32 0.0, %v1828
        %v1830 = vpop.f32.mrb[0].mxu0
        %1831 = vdwg.mxu0
        %v1832 = vsel %vm473, %v1601, -inf
        %1833 = vmax.xlane.f32.xlu0 %v1832
        %v1834 = vpop.xlane.xlu0 %1833
        %v1835 = vsel %vm473, %v1677, -inf
        %1836 = vmax.xlane.f32.xlu0 %v1835
        %v1837 = vpop.xlane.xlu0 %1836
        %v1838 = vsel %vm473, %v1753, -inf
        %1839 = vmax.xlane.f32.xlu0 %v1838
        %v1840 = vpop.xlane.xlu0 %1839
        %v1841 = vsel %vm473, %v1829, -inf
        %1842 = vmax.xlane.f32.xlu0 %v1841
        %v1843 = vpop.xlane.xlu0 %1842
        %v1844 = vsub.f32 %v1601, %v1834
        %v1845 = vsub.f32 %v1677, %v1837
        %v1846 = vsub.f32 %v1753, %v1840
        %v1847 = vsub.f32 %v1829, %v1843
        %v1848 = vmul.f32 %v1844, 1.442695
        %v1849 = vpow.pop %v1848
        %v1850 = vmul.f32 %v1845, 1.442695
        %v1851 = vpow.pop %v1850
        %v1852 = vmul.f32 %v1846, 1.442695
        %v1853 = vpow.pop %v1852
        %v1854 = vmul.f32 %v1847, 1.442695
        %v1855 = vpow.pop %v1854
        %v1856 = vsel %vm473, %v1849, 0.0
        %1857 = vadd.xlane.f32.xlu0 %v1856
        %v1858 = vpop.xlane.xlu0 %1857
        %v1859 = vsel %vm473, %v1851, 0.0
        %1860 = vadd.xlane.f32.xlu0 %v1859
        %v1861 = vpop.xlane.xlu0 %1860
        %v1862 = vsel %vm473, %v1853, 0.0
        %1863 = vadd.xlane.f32.xlu0 %v1862
        %v1864 = vpop.xlane.xlu0 %1863
        %v1865 = vsel %vm473, %v1855, 0.0
        %1866 = vadd.xlane.f32.xlu0 %v1865
        %v1867 = vpop.xlane.xlu0 %1866
        %v1868 = vrcp.pop %v1858
        %v1869 = vmul.f32 %v1849, %v1868
        %v1870 = vrcp.pop %v1861
        %v1871 = vmul.f32 %v1851, %v1870
        %v1872 = vrcp.pop %v1864
        %v1873 = vmul.f32 %v1853, %v1872
        %v1874 = vrcp.pop %v1867
        %v1875 = vmul.f32 %v1855, %v1874
        %1876 = vrot.lane.b32.xlu0 %v1518, 64
        %v1877 = vpop.permute.xlu0 %1876
        %v1880 = vsel %vm473, %v1869, 0
        %1882 = vmatprep.subr.mxu0 0.0
        %1883 = vmatpush1.msra.mxu0 %v1877
        %1884 = vmatprep.subr.mxu0 0.0
        %1885 = vmatpush1.msra.mxu0 0.0
        %1886 = vmatprep.subr.mxu0 0.0
        %1887 = vmatpush1.msra.mxu0 0.0
        %1888 = vmatprep.subr.mxu0 0.0
        %1889 = vmatpush1.msra.mxu0 0.0
        %1890 = vmatprep.subr.mxu0 0.0
        %1891 = vmatpush1.msra.mxu0 0.0
        %1892 = vmatprep.subr.mxu0 0.0
        %1893 = vmatpush1.msra.mxu0 0.0
        %1894 = vmatprep.subr.mxu0 0.0
        %1895 = vmatpush1.msra.mxu0 0.0
        %1896 = vmatprep.subr.mxu0 0.0
        %1897 = vmatpush1.msra.mxu0 0.0
        %1898 = vmatprep.subr.mxu0 0.0
        %1899 = vmatpush1.msra.mxu0 0.0
        %1900 = vmatprep.subr.mxu0 0.0
        %1901 = vmatpush1.msra.mxu0 0.0
        %1902 = vmatprep.subr.mxu0 0.0
        %1903 = vmatpush1.msra.mxu0 0.0
        %1904 = vmatprep.subr.mxu0 0.0
        %1905 = vmatpush1.msra.mxu0 0.0
        %1906 = vmatprep.subr.mxu0 0.0
        %1907 = vmatpush1.msra.mxu0 0.0
        %1908 = vmatprep.subr.mxu0 0.0
        %1909 = vmatpush1.msra.mxu0 0.0
        %1910 = vmatprep.subr.mxu0 0.0
        %1911 = vmatpush1.msra.mxu0 0.0
        %1912 = vmatprep.subr.mxu0 0.0
        %1913 = vmatpush1.msra.mxu0 0.0
        %1914 = vmatprep.subr.mxu0 0.0
        %1915 = vmatpush1.msra.mxu0 0.0
        %1916 = vmatprep.subr.mxu0 0.0
        %1917 = vmatpush1.msra.mxu0 0.0
        %1918 = vmatprep.subr.mxu0 0.0
        %1919 = vmatpush1.msra.mxu0 0.0
        %1920 = vmatprep.subr.mxu0 0.0
        %1921 = vmatpush1.msra.mxu0 0.0
        %1922 = vmatprep.subr.mxu0 0.0
        %1923 = vmatpush1.msra.mxu0 0.0
        %1924 = vmatprep.subr.mxu0 0.0
        %1925 = vmatpush1.msra.mxu0 0.0
        %1926 = vmatprep.subr.mxu0 0.0
        %1927 = vmatpush1.msra.mxu0 0.0
        %1928 = vmatprep.subr.mxu0 0.0
        %1929 = vmatpush1.msra.mxu0 0.0
        %1930 = vmatprep.subr.mxu0 0.0
        %1931 = vmatpush1.msra.mxu0 0.0
        %1932 = vmatprep.subr.mxu0 0.0
        %1933 = vmatpush1.msra.mxu0 0.0
        %1934 = vmatprep.subr.mxu0 0.0
        %1935 = vmatpush1.msra.mxu0 0.0
        %1936 = vmatprep.subr.mxu0 0.0
        %1937 = vmatpush1.msra.mxu0 0.0
        %1938 = vmatprep.subr.mxu0 0.0
        %1939 = vmatpush1.msra.mxu0 0.0
        %1940 = vmatprep.subr.mxu0 0.0
        %1941 = vmatpush1.msra.mxu0 0.0
        %1942 = vmatprep.subr.mxu0 0.0
        %1943 = vmatpush1.msra.mxu0 0.0
        %1944 = vmatprep.subr.mxu0 0.0
        %1945 = vmatpush1.msra.mxu0 0.0
        %1946 = vmatprep.mubr.f32.mxu0 0.0
        %1947 = vmatmul.mubr.f32.gmra.mrb[0].mxu0 %v1880
        %v1948 = vpop.f32.mrb[0].mxu0
        %v1949 = vadd.f32 0.0, %v1948
        %v1950 = vpop.f32.mrb[0].mxu0
        %1951 = vdwg.mxu0
        %1952 = vrot.lane.b32.xlu0 %v1523, 64
        %v1953 = vpop.permute.xlu0 %1952
        %v1956 = vsel %vm473, %v1871, 0
        %1958 = vmatprep.subr.mxu0 0.0
        %1959 = vmatpush1.msra.mxu0 %v1953
        %1960 = vmatprep.subr.mxu0 0.0
        %1961 = vmatpush1.msra.mxu0 0.0
        %1962 = vmatprep.subr.mxu0 0.0
        %1963 = vmatpush1.msra.mxu0 0.0
        %1964 = vmatprep.subr.mxu0 0.0
        %1965 = vmatpush1.msra.mxu0 0.0
        %1966 = vmatprep.subr.mxu0 0.0
        %1967 = vmatpush1.msra.mxu0 0.0
        %1968 = vmatprep.subr.mxu0 0.0
        %1969 = vmatpush1.msra.mxu0 0.0
        %1970 = vmatprep.subr.mxu0 0.0
        %1971 = vmatpush1.msra.mxu0 0.0
        %1972 = vmatprep.subr.mxu0 0.0
        %1973 = vmatpush1.msra.mxu0 0.0
        %1974 = vmatprep.subr.mxu0 0.0
        %1975 = vmatpush1.msra.mxu0 0.0
        %1976 = vmatprep.subr.mxu0 0.0
        %1977 = vmatpush1.msra.mxu0 0.0
        %1978 = vmatprep.subr.mxu0 0.0
        %1979 = vmatpush1.msra.mxu0 0.0
        %1980 = vmatprep.subr.mxu0 0.0
        %1981 = vmatpush1.msra.mxu0 0.0
        %1982 = vmatprep.subr.mxu0 0.0
        %1983 = vmatpush1.msra.mxu0 0.0
        %1984 = vmatprep.subr.mxu0 0.0
        %1985 = vmatpush1.msra.mxu0 0.0
        %1986 = vmatprep.subr.mxu0 0.0
        %1987 = vmatpush1.msra.mxu0 0.0
        %1988 = vmatprep.subr.mxu0 0.0
        %1989 = vmatpush1.msra.mxu0 0.0
        %1990 = vmatprep.subr.mxu0 0.0
        %1991 = vmatpush1.msra.mxu0 0.0
        %1992 = vmatprep.subr.mxu0 0.0
        %1993 = vmatpush1.msra.mxu0 0.0
        %1994 = vmatprep.subr.mxu0 0.0
        %1995 = vmatpush1.msra.mxu0 0.0
        %1996 = vmatprep.subr.mxu0 0.0
        %1997 = vmatpush1.msra.mxu0 0.0
        %1998 = vmatprep.subr.mxu0 0.0
        %1999 = vmatpush1.msra.mxu0 0.0
        %2000 = vmatprep.subr.mxu0 0.0
        %2001 = vmatpush1.msra.mxu0 0.0
        %2002 = vmatprep.subr.mxu0 0.0
        %2003 = vmatpush1.msra.mxu0 0.0
        %2004 = vmatprep.subr.mxu0 0.0
        %2005 = vmatpush1.msra.mxu0 0.0
        %2006 = vmatprep.subr.mxu0 0.0
        %2007 = vmatpush1.msra.mxu0 0.0
        %2008 = vmatprep.subr.mxu0 0.0
        %2009 = vmatpush1.msra.mxu0 0.0
        %2010 = vmatprep.subr.mxu0 0.0
        %2011 = vmatpush1.msra.mxu0 0.0
        %2012 = vmatprep.subr.mxu0 0.0
        %2013 = vmatpush1.msra.mxu0 0.0
        %2014 = vmatprep.subr.mxu0 0.0
        %2015 = vmatpush1.msra.mxu0 0.0
        %2016 = vmatprep.subr.mxu0 0.0
        %2017 = vmatpush1.msra.mxu0 0.0
        %2018 = vmatprep.subr.mxu0 0.0
        %2019 = vmatpush1.msra.mxu0 0.0
        %2020 = vmatprep.subr.mxu0 0.0
        %2021 = vmatpush1.msra.mxu0 0.0
        %2022 = vmatprep.mubr.f32.mxu0 0.0
        %2023 = vmatmul.mubr.f32.gmra.mrb[0].mxu0 %v1956
        %v2024 = vpop.f32.mrb[0].mxu0
        %v2025 = vadd.f32 0.0, %v2024
        %v2026 = vpop.f32.mrb[0].mxu0
        %2027 = vdwg.mxu0
        %2028 = vrot.lane.b32.xlu0 %v1525, 64
        %v2029 = vpop.permute.xlu0 %2028
        %v2032 = vsel %vm473, %v1873, 0
        %2034 = vmatprep.subr.mxu0 0.0
        %2035 = vmatpush1.msra.mxu0 %v2029
        %2036 = vmatprep.subr.mxu0 0.0
        %2037 = vmatpush1.msra.mxu0 0.0
        %2038 = vmatprep.subr.mxu0 0.0
        %2039 = vmatpush1.msra.mxu0 0.0
        %2040 = vmatprep.subr.mxu0 0.0
        %2041 = vmatpush1.msra.mxu0 0.0
        %2042 = vmatprep.subr.mxu0 0.0
        %2043 = vmatpush1.msra.mxu0 0.0
        %2044 = vmatprep.subr.mxu0 0.0
        %2045 = vmatpush1.msra.mxu0 0.0
        %2046 = vmatprep.subr.mxu0 0.0
        %2047 = vmatpush1.msra.mxu0 0.0
        %2048 = vmatprep.subr.mxu0 0.0
        %2049 = vmatpush1.msra.mxu0 0.0
        %2050 = vmatprep.subr.mxu0 0.0
        %2051 = vmatpush1.msra.mxu0 0.0
        %2052 = vmatprep.subr.mxu0 0.0
        %2053 = vmatpush1.msra.mxu0 0.0
        %2054 = vmatprep.subr.mxu0 0.0
        %2055 = vmatpush1.msra.mxu0 0.0
        %2056 = vmatprep.subr.mxu0 0.0
        %2057 = vmatpush1.msra.mxu0 0.0
        %2058 = vmatprep.subr.mxu0 0.0
        %2059 = vmatpush1.msra.mxu0 0.0
        %2060 = vmatprep.subr.mxu0 0.0
        %2061 = vmatpush1.msra.mxu0 0.0
        %2062 = vmatprep.subr.mxu0 0.0
        %2063 = vmatpush1.msra.mxu0 0.0
        %2064 = vmatprep.subr.mxu0 0.0
        %2065 = vmatpush1.msra.mxu0 0.0
        %2066 = vmatprep.subr.mxu0 0.0
        %2067 = vmatpush1.msra.mxu0 0.0
        %2068 = vmatprep.subr.mxu0 0.0
        %2069 = vmatpush1.msra.mxu0 0.0
        %2070 = vmatprep.subr.mxu0 0.0
        %2071 = vmatpush1.msra.mxu0 0.0
        %2072 = vmatprep.subr.mxu0 0.0
        %2073 = vmatpush1.msra.mxu0 0.0
        %2074 = vmatprep.subr.mxu0 0.0
        %2075 = vmatpush1.msra.mxu0 0.0
        %2076 = vmatprep.subr.mxu0 0.0
        %2077 = vmatpush1.msra.mxu0 0.0
        %2078 = vmatprep.subr.mxu0 0.0
        %2079 = vmatpush1.msra.mxu0 0.0
        %2080 = vmatprep.subr.mxu0 0.0
        %2081 = vmatpush1.msra.mxu0 0.0
        %2082 = vmatprep.subr.mxu0 0.0
        %2083 = vmatpush1.msra.mxu0 0.0
        %2084 = vmatprep.subr.mxu0 0.0
        %2085 = vmatpush1.msra.mxu0 0.0
        %2086 = vmatprep.subr.mxu0 0.0
        %2087 = vmatpush1.msra.mxu0 0.0
        %2088 = vmatprep.subr.mxu0 0.0
        %2089 = vmatpush1.msra.mxu0 0.0
        %2090 = vmatprep.subr.mxu0 0.0
        %2091 = vmatpush1.msra.mxu0 0.0
        %2092 = vmatprep.subr.mxu0 0.0
        %2093 = vmatpush1.msra.mxu0 0.0
        %2094 = vmatprep.subr.mxu0 0.0
        %2095 = vmatpush1.msra.mxu0 0.0
        %2096 = vmatprep.subr.mxu0 0.0
        %2097 = vmatpush1.msra.mxu0 0.0
        %2098 = vmatprep.mubr.f32.mxu0 0.0
        %2099 = vmatmul.mubr.f32.gmra.mrb[0].mxu0 %v2032
        %v2100 = vpop.f32.mrb[0].mxu0
        %v2101 = vadd.f32 0.0, %v2100
        %v2102 = vpop.f32.mrb[0].mxu0
        %2103 = vdwg.mxu0
        %2104 = vrot.lane.b32.xlu0 %v1527, 64
        %v2105 = vpop.permute.xlu0 %2104
        %v2108 = vsel %vm473, %v1875, 0
        %2110 = vmatprep.subr.mxu0 0.0
        %2111 = vmatpush1.msra.mxu0 %v2105
        %2112 = vmatprep.subr.mxu0 0.0
        %2113 = vmatpush1.msra.mxu0 0.0
        %2114 = vmatprep.subr.mxu0 0.0
        %2115 = vmatpush1.msra.mxu0 0.0
        %2116 = vmatprep.subr.mxu0 0.0
        %2117 = vmatpush1.msra.mxu0 0.0
        %2118 = vmatprep.subr.mxu0 0.0
        %2119 = vmatpush1.msra.mxu0 0.0
        %2120 = vmatprep.subr.mxu0 0.0
        %2121 = vmatpush1.msra.mxu0 0.0
        %2122 = vmatprep.subr.mxu0 0.0
        %2123 = vmatpush1.msra.mxu0 0.0
        %2124 = vmatprep.subr.mxu0 0.0
        %2125 = vmatpush1.msra.mxu0 0.0
        %2126 = vmatprep.subr.mxu0 0.0
        %2127 = vmatpush1.msra.mxu0 0.0
        %2128 = vmatprep.subr.mxu0 0.0
        %2129 = vmatpush1.msra.mxu0 0.0
        %2130 = vmatprep.subr.mxu0 0.0
        %2131 = vmatpush1.msra.mxu0 0.0
        %2132 = vmatprep.subr.mxu0 0.0
        %2133 = vmatpush1.msra.mxu0 0.0
        %2134 = vmatprep.subr.mxu0 0.0
        %2135 = vmatpush1.msra.mxu0 0.0
        %2136 = vmatprep.subr.mxu0 0.0
        %2137 = vmatpush1.msra.mxu0 0.0
        %2138 = vmatprep.subr.mxu0 0.0
        %2139 = vmatpush1.msra.mxu0 0.0
        %2140 = vmatprep.subr.mxu0 0.0
        %2141 = vmatpush1.msra.mxu0 0.0
        %2142 = vmatprep.subr.mxu0 0.0
        %2143 = vmatpush1.msra.mxu0 0.0
        %2144 = vmatprep.subr.mxu0 0.0
        %2145 = vmatpush1.msra.mxu0 0.0
        %2146 = vmatprep.subr.mxu0 0.0
        %2147 = vmatpush1.msra.mxu0 0.0
        %2148 = vmatprep.subr.mxu0 0.0
        %2149 = vmatpush1.msra.mxu0 0.0
        %2150 = vmatprep.subr.mxu0 0.0
        %2151 = vmatpush1.msra.mxu0 0.0
        %2152 = vmatprep.subr.mxu0 0.0
        %2153 = vmatpush1.msra.mxu0 0.0
        %2154 = vmatprep.subr.mxu0 0.0
        %2155 = vmatpush1.msra.mxu0 0.0
        %2156 = vmatprep.subr.mxu0 0.0
        %2157 = vmatpush1.msra.mxu0 0.0
        %2158 = vmatprep.subr.mxu0 0.0
        %2159 = vmatpush1.msra.mxu0 0.0
        %2160 = vmatprep.subr.mxu0 0.0
        %2161 = vmatpush1.msra.mxu0 0.0
        %2162 = vmatprep.subr.mxu0 0.0
        %2163 = vmatpush1.msra.mxu0 0.0
        %2164 = vmatprep.subr.mxu0 0.0
        %2165 = vmatpush1.msra.mxu0 0.0
        %2166 = vmatprep.subr.mxu0 0.0
        %2167 = vmatpush1.msra.mxu0 0.0
        %2168 = vmatprep.subr.mxu0 0.0
        %2169 = vmatpush1.msra.mxu0 0.0
        %2170 = vmatprep.subr.mxu0 0.0
        %2171 = vmatpush1.msra.mxu0 0.0
        %2172 = vmatprep.subr.mxu0 0.0
        %2173 = vmatpush1.msra.mxu0 0.0
        %2174 = vmatprep.mubr.f32.mxu0 0.0
        %2175 = vmatmul.mubr.f32.gmra.mrb[0].mxu0 %v2108
        %v2176 = vpop.f32.mrb[0].mxu0
        %v2177 = vadd.f32 0.0, %v2176
        %v2178 = vpop.f32.mrb[0].mxu0
        %2179 = vdwg.mxu0
        %2181 = vrot.lane.b32.xlu0 %v2025, 8
        %v2182 = vpop.permute.xlu0 %2181
        %2185 = vrot.lane.b32.xlu0 %v2101, 16
        %v2186 = vpop.permute.xlu0 %2185
        %2189 = vrot.lane.b32.xlu0 %v2177, 24
        %v2190 = vpop.permute.xlu0 %2189
        %v2192 = vsel %vm473, %v1949, %v2182
        %v2193 = vsel %vm1137, %v2192, %v2186
        %v2194 = vsel %vm1139, %v2193, %v2190
        %v2195 = vlaneseq
        %v2196 = vshrl.u32 %v2195, 7
        %v2197 = vsub.s32 1, %v2196
        %v2198 = vrot.slane %v1443, %v2197
        %v2200 = vsel %vm390, %v2194, 0
        %2202 = vmatprep.subr.mxu0 0.0
        %2203 = vmatpush1.msra.mxu0 %v1428
        %2204 = vmatprep.subr.mxu0 0.0
        %2205 = vmatpush1.msra.mxu0 %v1429
        %2206 = vmatprep.subr.mxu0 0.0
        %2207 = vmatpush1.msra.mxu0 %v1430
        %2208 = vmatprep.subr.mxu0 0.0
        %2209 = vmatpush1.msra.mxu0 %v1431
        %2210 = vmatprep.subr.mxu0 0.0
        %2211 = vmatpush1.msra.mxu0 0.0
        %2212 = vmatprep.subr.mxu0 0.0
        %2213 = vmatpush1.msra.mxu0 0.0
        %2214 = vmatprep.subr.mxu0 0.0
        %2215 = vmatpush1.msra.mxu0 0.0
        %2216 = vmatprep.subr.mxu0 0.0
        %2217 = vmatpush1.msra.mxu0 0.0
        %2218 = vmatprep.subr.mxu0 0.0
        %2219 = vmatpush1.msra.mxu0 0.0
        %2220 = vmatprep.subr.mxu0 0.0
        %2221 = vmatpush1.msra.mxu0 0.0
        %2222 = vmatprep.subr.mxu0 0.0
        %2223 = vmatpush1.msra.mxu0 0.0
        %2224 = vmatprep.subr.mxu0 0.0
        %2225 = vmatpush1.msra.mxu0 0.0
        %2226 = vmatprep.subr.mxu0 0.0
        %2227 = vmatpush1.msra.mxu0 0.0
        %2228 = vmatprep.subr.mxu0 0.0
        %2229 = vmatpush1.msra.mxu0 0.0
        %2230 = vmatprep.subr.mxu0 0.0
        %2231 = vmatpush1.msra.mxu0 0.0
        %2232 = vmatprep.subr.mxu0 0.0
        %2233 = vmatpush1.msra.mxu0 0.0
        %2234 = vmatprep.subr.mxu0 0.0
        %2235 = vmatpush1.msra.mxu0 0.0
        %2236 = vmatprep.subr.mxu0 0.0
        %2237 = vmatpush1.msra.mxu0 0.0
        %2238 = vmatprep.subr.mxu0 0.0
        %2239 = vmatpush1.msra.mxu0 0.0
        %2240 = vmatprep.subr.mxu0 0.0
        %2241 = vmatpush1.msra.mxu0 0.0
        %2242 = vmatprep.subr.mxu0 0.0
        %2243 = vmatpush1.msra.mxu0 0.0
        %2244 = vmatprep.subr.mxu0 0.0
        %2245 = vmatpush1.msra.mxu0 0.0
        %2246 = vmatprep.subr.mxu0 0.0
        %2247 = vmatpush1.msra.mxu0 0.0
        %2248 = vmatprep.subr.mxu0 0.0
        %2249 = vmatpush1.msra.mxu0 0.0
        %2250 = vmatprep.subr.mxu0 0.0
        %2251 = vmatpush1.msra.mxu0 0.0
        %2252 = vmatprep.subr.mxu0 0.0
        %2253 = vmatpush1.msra.mxu0 0.0
        %2254 = vmatprep.subr.mxu0 0.0
        %2255 = vmatpush1.msra.mxu0 0.0
        %2256 = vmatprep.subr.mxu0 0.0
        %2257 = vmatpush1.msra.mxu0 0.0
        %2258 = vmatprep.subr.mxu0 0.0
        %2259 = vmatpush1.msra.mxu0 0.0
        %2260 = vmatprep.subr.mxu0 0.0
        %2261 = vmatpush1.msra.mxu0 0.0
        %2262 = vmatprep.subr.mxu0 0.0
        %2263 = vmatpush1.msra.mxu0 0.0
        %2264 = vmatprep.subr.mxu0 0.0
        %2265 = vmatpush1.msra.mxu0 0.0
        %2266 = vmatprep.mubr.f32.mxu0 0.0
        %2267 = vmatmul.mubr.f32.gmra.mrb[0].mxu0 %v2200
        %v2268 = vpop.f32.mrb[0].mxu0
        %v2269 = vadd.f32 %v2198, %v2268
        %v2270 = vpop.f32.mrb[0].mxu0
        %2271 = vdwg.mxu0
        %v2272 = vadd.f32 %v1421, %v2269
        %v2273 = vsel %vm390, %v2272, 0.0
        %2274 = vadd.xlane.f32.xlu0 %v2273
        %v2275 = vpop.xlane.xlu0 %2274
        %v2276 = vmul.f32 %v2275, %v1222
        %v2277 = vsub.f32 %v2272, %v2276
        %v2278 = vmul.f32 %v2277, %v2277
        %v2279 = vsel %vm390, %v2278, 0.0
        %2280 = vadd.xlane.f32.xlu0 %v2279
        %v2281 = vpop.xlane.xlu0 %2280
        %v2282 = vmul.f32 %v2281, %v1222
        %v2283 = vadd.f32 %v2282, 1e-05
        %v2284 = vrsqrt.pop %v2283
        %v2285 = vmul.f32 %v2277, %v2284
        %v2286 = vlaneseq
        %v2287 = vshrl.u32 %v2286, 7
        %v2288 = vsub.s32 2, %v2287
        %v2289 = vrot.slane %v1443, %v2288
        %v2290 = vmul.f32 %v2285, %v2289
        %v2291 = vlaneseq
        %v2292 = vshrl.u32 %v2291, 7
        %v2293 = vsub.s32 3, %v2292
        %v2294 = vrot.slane %v1443, %v2293
        %v2295 = vadd.f32 %v2290, %v2294
        %v2296 = vlaneseq
        %v2297 = vshrl.u32 %v2296, 7
        %v2298 = vsub.s32 4, %v2297
        %v2299 = vrot.slane %v1443, %v2298
        %v2301 = vsel %vm390, %v2295, 0
        %2303 = vmatprep.subr.mxu0 0.0
        %2304 = vmatpush1.msra.mxu0 %v1433
        %2305 = vmatprep.subr.mxu0 0.0
        %2306 = vmatpush1.msra.mxu0 %v1434
        %2307 = vmatprep.subr.mxu0 0.0
        %2308 = vmatpush1.msra.mxu0 %v1435
        %2309 = vmatprep.subr.mxu0 0.0
        %2310 = vmatpush1.msra.mxu0 %v1436
        %2311 = vmatprep.subr.mxu0 0.0
        %2312 = vmatpush1.msra.mxu0 0.0
        %2313 = vmatprep.subr.mxu0 0.0
        %2314 = vmatpush1.msra.mxu0 0.0
        %2315 = vmatprep.subr.mxu0 0.0
        %2316 = vmatpush1.msra.mxu0 0.0
        %2317 = vmatprep.subr.mxu0 0.0
        %2318 = vmatpush1.msra.mxu0 0.0
        %2319 = vmatprep.subr.mxu0 0.0
        %2320 = vmatpush1.msra.mxu0 0.0
        %2321 = vmatprep.subr.mxu0 0.0
        %2322 = vmatpush1.msra.mxu0 0.0
        %2323 = vmatprep.subr.mxu0 0.0
        %2324 = vmatpush1.msra.mxu0 0.0
        %2325 = vmatprep.subr.mxu0 0.0
        %2326 = vmatpush1.msra.mxu0 0.0
        %2327 = vmatprep.subr.mxu0 0.0
        %2328 = vmatpush1.msra.mxu0 0.0
        %2329 = vmatprep.subr.mxu0 0.0
        %2330 = vmatpush1.msra.mxu0 0.0
        %2331 = vmatprep.subr.mxu0 0.0
        %2332 = vmatpush1.msra.mxu0 0.0
        %2333 = vmatprep.subr.mxu0 0.0
        %2334 = vmatpush1.msra.mxu0 0.0
        %2335 = vmatprep.subr.mxu0 0.0
        %2336 = vmatpush1.msra.mxu0 0.0
        %2337 = vmatprep.subr.mxu0 0.0
        %2338 = vmatpush1.msra.mxu0 0.0
        %2339 = vmatprep.subr.mxu0 0.0
        %2340 = vmatpush1.msra.mxu0 0.0
        %2341 = vmatprep.subr.mxu0 0.0
        %2342 = vmatpush1.msra.mxu0 0.0
        %2343 = vmatprep.subr.mxu0 0.0
        %2344 = vmatpush1.msra.mxu0 0.0
        %2345 = vmatprep.subr.mxu0 0.0
        %2346 = vmatpush1.msra.mxu0 0.0
        %2347 = vmatprep.subr.mxu0 0.0
        %2348 = vmatpush1.msra.mxu0 0.0
        %2349 = vmatprep.subr.mxu0 0.0
        %2350 = vmatpush1.msra.mxu0 0.0
        %2351 = vmatprep.subr.mxu0 0.0
        %2352 = vmatpush1.msra.mxu0 0.0
        %2353 = vmatprep.subr.mxu0 0.0
        %2354 = vmatpush1.msra.mxu0 0.0
        %2355 = vmatprep.subr.mxu0 0.0
        %2356 = vmatpush1.msra.mxu0 0.0
        %2357 = vmatprep.subr.mxu0 0.0
        %2358 = vmatpush1.msra.mxu0 0.0
        %2359 = vmatprep.subr.mxu0 0.0
        %2360 = vmatpush1.msra.mxu0 0.0
        %2361 = vmatprep.subr.mxu0 0.0
        %2362 = vmatpush1.msra.mxu0 0.0
        %2363 = vmatprep.subr.mxu0 0.0
        %2364 = vmatpush1.msra.mxu0 0.0
        %2365 = vmatprep.subr.mxu0 0.0
        %2366 = vmatpush1.msra.mxu0 0.0
        %2367 = vmatprep.mubr.f32.mxu0 0.0
        %2368 = vmatmul.mubr.f32.gmra.mrb[0].mxu0 %v2301
        %v2369 = vpop.f32.mrb[0].mxu0
        %v2370 = vadd.f32 %v2299, %v2369
        %v2371 = vpop.f32.mrb[0].mxu0
        %2372 = vdwg.mxu0
        %v2373 = vmax.f32 %v2370, 0.0
        %v2374 = vlaneseq
        %v2375 = vshrl.u32 %v2374, 7
        %v2376 = vsub.s32 5, %v2375
        %v2377 = vrot.slane %v1443, %v2376
        %v2379 = vsel %vm390, %v2373, 0
        %2381 = vmatprep.subr.mxu0 0.0
        %2382 = vmatpush1.msra.mxu0 %v1438
        %2383 = vmatprep.subr.mxu0 0.0
        %2384 = vmatpush1.msra.mxu0 %v1439
        %2385 = vmatprep.subr.mxu0 0.0
        %2386 = vmatpush1.msra.mxu0 %v1440
        %2387 = vmatprep.subr.mxu0 0.0
        %2388 = vmatpush1.msra.mxu0 %v1441
        %2389 = vmatprep.subr.mxu0 0.0
        %2390 = vmatpush1.msra.mxu0 0.0
        %2391 = vmatprep.subr.mxu0 0.0
        %2392 = vmatpush1.msra.mxu0 0.0
        %2393 = vmatprep.subr.mxu0 0.0
        %2394 = vmatpush1.msra.mxu0 0.0
        %2395 = vmatprep.subr.mxu0 0.0
        %2396 = vmatpush1.msra.mxu0 0.0
        %2397 = vmatprep.subr.mxu0 0.0
        %2398 = vmatpush1.msra.mxu0 0.0
        %2399 = vmatprep.subr.mxu0 0.0
        %2400 = vmatpush1.msra.mxu0 0.0
        %2401 = vmatprep.subr.mxu0 0.0
        %2402 = vmatpush1.msra.mxu0 0.0
        %2403 = vmatprep.subr.mxu0 0.0
        %2404 = vmatpush1.msra.mxu0 0.0
        %2405 = vmatprep.subr.mxu0 0.0
        %2406 = vmatpush1.msra.mxu0 0.0
        %2407 = vmatprep.subr.mxu0 0.0
        %2408 = vmatpush1.msra.mxu0 0.0
        %2409 = vmatprep.subr.mxu0 0.0
        %2410 = vmatpush1.msra.mxu0 0.0
        %2411 = vmatprep.subr.mxu0 0.0
        %2412 = vmatpush1.msra.mxu0 0.0
        %2413 = vmatprep.subr.mxu0 0.0
        %2414 = vmatpush1.msra.mxu0 0.0
        %2415 = vmatprep.subr.mxu0 0.0
        %2416 = vmatpush1.msra.mxu0 0.0
        %2417 = vmatprep.subr.mxu0 0.0
        %2418 = vmatpush1.msra.mxu0 0.0
        %2419 = vmatprep.subr.mxu0 0.0
        %2420 = vmatpush1.msra.mxu0 0.0
        %2421 = vmatprep.subr.mxu0 0.0
        %2422 = vmatpush1.msra.mxu0 0.0
        %2423 = vmatprep.subr.mxu0 0.0
        %2424 = vmatpush1.msra.mxu0 0.0
        %2425 = vmatprep.subr.mxu0 0.0
        %2426 = vmatpush1.msra.mxu0 0.0
        %2427 = vmatprep.subr.mxu0 0.0
        %2428 = vmatpush1.msra.mxu0 0.0
        %2429 = vmatprep.subr.mxu0 0.0
        %2430 = vmatpush1.msra.mxu0 0.0
        %2431 = vmatprep.subr.mxu0 0.0
        %2432 = vmatpush1.msra.mxu0 0.0
        %2433 = vmatprep.subr.mxu0 0.0
        %2434 = vmatpush1.msra.mxu0 0.0
        %2435 = vmatprep.subr.mxu0 0.0
        %2436 = vmatpush1.msra.mxu0 0.0
        %2437 = vmatprep.subr.mxu0 0.0
        %2438 = vmatpush1.msra.mxu0 0.0
        %2439 = vmatprep.subr.mxu0 0.0
        %2440 = vmatpush1.msra.mxu0 0.0
        %2441 = vmatprep.subr.mxu0 0.0
        %2442 = vmatpush1.msra.mxu0 0.0
        %2443 = vmatprep.subr.mxu0 0.0
        %2444 = vmatpush1.msra.mxu0 0.0
        %2445 = vmatprep.mubr.f32.mxu0 0.0
        %2446 = vmatmul.mubr.f32.gmra.mrb[0].mxu0 %v2379
        %v2447 = vpop.f32.mrb[0].mxu0
        %v2448 = vadd.f32 %v2377, %v2447
        %v2449 = vpop.f32.mrb[0].mxu0
        %2450 = vdwg.mxu0
        %v2451 = vadd.f32 %v2295, %v2448
        %v2452 = vsel %vm390, %v2451, 0.0
        %2453 = vadd.xlane.f32.xlu0 %v2452
        %v2454 = vpop.xlane.xlu0 %2453
        %v2455 = vmul.f32 %v2454, %v1222
        %v2456 = vsub.f32 %v2451, %v2455
        %v2457 = vmul.f32 %v2456, %v2456
        %v2458 = vsel %vm390, %v2457, 0.0
        %2459 = vadd.xlane.f32.xlu0 %v2458
        %v2460 = vpop.xlane.xlu0 %2459
        %v2461 = vmul.f32 %v2460, %v1222
        %v2462 = vadd.f32 %v2461, 1e-05
        %v2463 = vrsqrt.pop %v2462
        %v2464 = vmul.f32 %v2456, %v2463
        %v2465 = vlaneseq
        %v2466 = vshrl.u32 %v2465, 7
        %v2467 = vsub.s32 6, %v2466
        %v2468 = vrot.slane %v1443, %v2467
        %v2469 = vmul.f32 %v2464, %v2468
        %v2470 = vlaneseq
        %v2471 = vshrl.u32 %v2470, 7
        %v2472 = vsub.s32 7, %v2471
        %v2473 = vrot.slane %v1443, %v2472
        %v2474 = vadd.f32 %v2469, %v2473
        %2475 = vst.msk [vmem:[%s364] sm:$0xff] %vm390, %v2474
        %s2476 = sand.u32 %s187, 1
        %s2477 = scalar_lea.sflag [#allocation4], %s2476
        %s2478 = sand.u32 %s187, 1
        %s2479 = smul.addr %s2478, 8
        %s2480 = scalar_lea.vmem [#allocation13], %s2479
        // Predicated region
        $region73: #{tpu_custom_call.1} parent=47 // pred_check
          %p2481 = pneg %p197
        $region74: #{tpu_custom_call.1} parent=47 // pred_check_branch
          %2483 = sbr.rel (%p2481) target = $region76
        $region75: #{tpu_custom_call.1} parent=47 // pred_region
          %s2485 = ssub.s32 128, 128
          %2486 = vsyncadd %s2477, %s2485
          %s2487 = smul.addr %s27, 128
          %s2488 = scalar_lea.hbm %s7, %s2487
          %s2490 = sshll.u32 %s2480, 4
          %s2491 = int_to_ptr.vmem [resolvable:$true] %s2490
          %2493 = dma.vmem_to_hbm [thread:$0]  %s2491, 128, %s2488, %s2477
        $region76: #{tpu_custom_call.1} parent=47 // pred_fallthru
          _
      $region48: #{tpu_custom_call.1} parent=5 // pred_fallthru
        _
      %p2494 = scmp.le.s32.totalorder 2, %s22
      // Predicated region
      $region77: #{tpu_custom_call.1} parent=5 // pred_check
        %p2495 = pneg %p2494
      $region78: #{tpu_custom_call.1} parent=5 // pred_check_branch
        %2497 = sbr.rel (%p2495) target = $region80
      $region79: #{tpu_custom_call.1} parent=5 // pred_region
        %s2498 = ssub.s32 %s22, 2
        // Predicated region
        $region81: #{tpu_custom_call.1} parent=79 // pred_check
          %p2499 = pneg %p203
        $region82: #{tpu_custom_call.1} parent=79 // pred_check_branch
          %2501 = sbr.rel (%p2499) target = $region84
        $region83: #{tpu_custom_call.1} parent=79 // pred_region
          %s2502 = sand.u32 %s188, 1
          %s2503 = scalar_lea.sflag [#allocation4], %s2502
          %s2504 = sand.u32 %s188, 1
          %s2505 = smul.addr %s2504, 8
          %s2506 = scalar_lea.vmem [#allocation13], %s2505
          %2507 = dma.done %s2503, 128
        $region84: #{tpu_custom_call.1} parent=79 // pred_fallthru
          _
      $region80: #{tpu_custom_call.1} parent=5 // pred_fallthru
        _
    $region6: #{tpu_custom_call.1} parent=1 // loop_footer
      %s26 = sadd.s32 1, %s22
    $region7: #{tpu_custom_call.1} parent=1 // loop_footer_branch
      %21 = sbr.rel target = $region3
    $region8: #{tpu_custom_call.1} parent=1 // loop_exit
      _
    %2508 = vsyncpa [#allocation3], 1
    %s2509 = scalar_lea.sflag [#allocation3], 1
    %2510 = vsyncpa %s2509, 1
    %2511 = vsyncpa [#allocation6], 1
    %2512 = vsyncpa [#allocation9], 1
    %2513 = vsyncpa [#allocation12], 1
    %2514 = vsyncpa [#allocation4], 1
    %s2515 = scalar_lea.sflag [#allocation4], 1
    %2516 = vsyncpa %s2515, 1

</llo_original>
